<compile_context>
chip_gen: v7x
topology: tpu7x:2x2x1
jax: 0.10.0
libtpu: 0.0.40
codegen_flags: <defaults>
</compile_context>

<pallas_src>
import numpy as np
import jax
import jax.numpy as jnp
from jax.experimental import pallas as pl
from jax.experimental.pallas import tpu as pltpu

# ---------------- model hyperparameters (module defaults) -------------------
IN_DIMS = 784
HID1 = 100
HID2 = 64
NUM_CLASSES = 10
NEG_SLOPE = 0.1

LANE = 128
MAX_TILE = 512        # safe for v7x (64 MiB VMEM/TC); plenty for v5e/v6e too


def _round_up(n, m):
    return ((n + m - 1) // m) * m


def _pad_to(a, shape):
    return jnp.pad(a, [(0, t - s) for s, t in zip(a.shape, shape)])


# ------------------------------- kernel -------------------------------------
def vaegt_kernel(
    # inputs
    x_ref, y_ref, esp_ref,
    # encoder
    w1, b1, w2, b2, w3, b3,
    # fused mu|logvar head
    wmv, bmv,
    # fused decoder layer1 (hx rows | folded class-table rows)
    wd1, bd1, wd2, bd2, wd3, bd3, wd4, bd4,
    # outputs
    out_ref, mu_ref, logvar_ref,
):
    bf16 = jnp.bfloat16

    def lrelu(v):
        # single VALU op; identical to where(v>0, v, slope*v) for 0<slope<1
        return jnp.maximum(v, NEG_SLOPE * v)

    def mm(v, w):
        # bf16 operands, f32 accumulation on the MXU.
        return jnp.dot(v.astype(bf16), w[...], preferred_element_type=jnp.float32)

    def dense(v, w, b):
        return mm(v, w) + b[...]

    # --- encoder (x already bf16) ---
    h = lrelu(dense(x_ref[...], w1, b1))
    h = lrelu(dense(h, w2, b2))
    h = lrelu(dense(h, w3, b3))

    # --- fused mu / logvar head (one [128,256] matmul, split lane-aligned) ---
    mv = dense(h, wmv, bmv)
    mu = mv[:, :LANE]          # lanes 100..127 are exactly 0 (zero-padded head)
    logvar = mv[:, LANE:]

    # --- reparameterization (f32; padded lanes of esp are zero) ---
    hx = mu + jnp.exp(0.5 * logvar) * esp_ref[...]

    # --- one-hot labels built in-kernel (lanes 10..127 are zero) ---
    tile = x_ref.shape[0]
    classes = jax.lax.broadcasted_iota(jnp.int32, (tile, LANE), 1)
    yoh = (classes == y_ref[...]).astype(bf16)

    # --- decoder; layer1 is one fused K=256 matmul over concat(hx, yoh) ---
    hxy = jnp.concatenate([hx.astype(bf16), yoh], axis=1)
    d = lrelu(mm(hxy, wd1) + bd1[...])
    d = lrelu(dense(d, wd2, bd2))
    d = lrelu(dense(d, wd3, bd3))
    out_ref[...] = jax.nn.sigmoid(dense(d, wd4, bd4))
    mu_ref[...] = mu[:, :HID1]
    logvar_ref[...] = logvar[:, :HID1]


# --------------------------- parameter handling ------------------------------
def make_params(key):
    """Deterministic params: weight ~ N(0, 0.01), bias = 0 (matches _init_weights).
    Weights are stored pre-transposed as [in_features, out_features]."""
    shapes = [
        ("w1", (IN_DIMS, 512)), ("w2", (512, 256)), ("w3", (256, 128)),
        ("wmu", (128, HID1)), ("wvar", (128, HID1)),
        ("wc1", (NUM_CLASSES, 16)), ("wc2", (16, 32)), ("wc3", (32, HID2)),
        ("wd1", (HID1 + HID2, 128)), ("wd2", (128, 256)),
        ("wd3", (256, 512)), ("wd4", (512, IN_DIMS)),
    ]
    params = {}
    keys = jax.random.split(key, len(shapes))
    for k, (name, shape) in zip(keys, shapes):
        params[name] = (0.01 * jax.random.normal(k, shape)).astype(jnp.float32)
        params["b" + name[1:]] = jnp.zeros((1, shape[1]), jnp.float32)
    return params


def _prep_weights(params):
    """Fold the conditioner into a class table, fuse heads, cast weights to bf16."""
    bf16 = jnp.bfloat16
    f32 = jnp.float32
    lrelu = lambda v: jnp.maximum(v, NEG_SLOPE * v)

    # fused mu|logvar head: [128, 256] (each half zero-padded 100 -> 128)
    wmv = jnp.concatenate(
        [_pad_to(params["wmu"], (128, LANE)), _pad_to(params["wvar"], (128, LANE))],
        axis=1).astype(bf16)
    bmv = jnp.concatenate(
        [_pad_to(params["bmu"], (1, LANE)), _pad_to(params["bvar"], (1, LANE))],
        axis=1).astype(f32)

    # Conditioner folded to a [10, 64] table (one-hot input => pure param preproc),
    # then folded further through decoder layer1's hy rows -> [10, 128].
    eye = jnp.eye(NUM_CLASSES, dtype=f32)
    t = lrelu(eye @ params["wc1"] + params["bc1"])
    t = lrelu(t @ params["wc2"] + params["bc2"])
    t = lrelu(t @ params["wc3"] + params["bc3"])            # [10, HID2]
    table_dec = t @ params["wd1"][HID1:]                     # [10, 128]

    # Fused decoder layer1 weight: rows 0..99 = wd1[:HID1] (hx), rows 128..137 =
    # folded class table (one-hot lanes), remaining rows zero.
    wd1x = _pad_to(params["wd1"][:HID1], (LANE, 128))
    wd1y = _pad_to(table_dec, (LANE, 128))
    wd1f = jnp.concatenate([wd1x, wd1y], axis=0).astype(bf16)   # [256, 128]

    return [
        params["w1"].astype(bf16), params["b1"].astype(f32),
        params["w2"].astype(bf16), params["b2"].astype(f32),
        params["w3"].astype(bf16), params["b3"].astype(f32),
        wmv, bmv,
        wd1f, params["bd1"].astype(f32),
        params["wd2"].astype(bf16), params["bd2"].astype(f32),
        params["wd3"].astype(bf16), params["bd3"].astype(f32),
        params["wd4"].astype(bf16), params["bd4"].astype(f32),
    ]


def _choose_tile(B):
    """Pick (batch_tile, n_steps) so padding waste is at most a few rows and
    moderate/large batches get >= 2 grid steps (both v7x TensorCores)."""
    n_steps = max(1, -(-B // MAX_TILE))
    if B >= 256 and n_steps < 2:
        n_steps = 2
    tile = _round_up(-(-B // n_steps), 8)
    return tile, n_steps


# ------------------------------- wrapper -------------------------------------
def vaegt_forward(x, y, esp, params):
    B = x.shape[0]
    batch_tile, n_steps = _choose_tile(B)
    B_pad = batch_tile * n_steps

    # x is consumed in bf16 (halves its HBM read inside the kernel).
    x_p = x.astype(jnp.bfloat16)
    y_p = y.astype(jnp.int32)
    esp_p = jnp.pad(esp.astype(jnp.float32),
                    ((0, B_pad - B), (0, LANE - HID1)))
    if B_pad != B:
        x_p = jnp.pad(x_p, ((0, B_pad - B), (0, 0)))
        y_p = jnp.pad(y_p, ((0, B_pad - B), (0, 0)))

    weight_args = _prep_weights(params)

    def batch_spec(feat):
        return pl.BlockSpec((batch_tile, feat), lambda i: (i, 0))

    def weight_spec(a):
        # Constant index_map across the grid -> fetched once, never re-DMAd.
        return pl.BlockSpec(a.shape, lambda i: (0, 0))

    in_specs = ([batch_spec(IN_DIMS), batch_spec(1), batch_spec(LANE)]
                + [weight_spec(a) for a in weight_args])
    out_specs = [batch_spec(IN_DIMS), batch_spec(HID1), batch_spec(HID1)]
    out_shape = (
        jax.ShapeDtypeStruct((B_pad, IN_DIMS), jnp.float32),
        jax.ShapeDtypeStruct((B_pad, HID1), jnp.float32),
        jax.ShapeDtypeStruct((B_pad, HID1), jnp.float32),
    )

    recon_p, mu_p, logvar_p = pl.pallas_call(
        vaegt_kernel,
        out_shape=out_shape,
        grid_spec=pltpu.PrefetchScalarGridSpec(
            num_scalar_prefetch=0,
            grid=(n_steps,),
            in_specs=in_specs,
            out_specs=out_specs,
        ),
        compiler_params=pltpu.CompilerParams(
            dimension_semantics=("parallel",),
            vmem_limit_bytes=48 << 20,   # below v7x's 64 MiB per-TC VMEM
        ),
    )(x_p, y_p, esp_p, *weight_args)

    if B_pad != B:
        recon_p, mu_p, logvar_p = recon_p[:B], mu_p[:B], logvar_p[:B]
    return recon_p, mu_p, logvar_p


# --------------------------- pure-JAX reference -------------------------------
def vaegt_reference(x, y, esp, params):
    lrelu = lambda v: jnp.where(v > 0, v, NEG_SLOPE * v)
    h = lrelu(x @ params["w1"] + params["b1"])
    h = lrelu(h @ params["w2"] + params["b2"])
    h = lrelu(h @ params["w3"] + params["b3"])
    mu = h @ params["wmu"] + params["bmu"]
    logvar = h @ params["wvar"] + params["bvar"]
    hx = mu + jnp.exp(0.5 * logvar) * esp
    yoh = jax.nn.one_hot(y[:, 0], NUM_CLASSES, dtype=jnp.float32)
    hy = lrelu(yoh @ params["wc1"] + params["bc1"])
    hy = lrelu(hy @ params["wc2"] + params["bc2"])
    hy = lrelu(hy @ params["wc3"] + params["bc3"])
    h = jnp.concatenate([hx, hy], axis=1)
    d = lrelu(h @ params["wd1"] + params["bd1"])
    d = lrelu(d @ params["wd2"] + params["bd2"])
    d = lrelu(d @ params["wd3"] + params["bd3"])
    d = jax.nn.sigmoid(d @ params["wd4"] + params["bd4"])
    return d, mu, logvar


if __name__ == "__main__":
    key = jax.random.PRNGKey(0)
    kp, kx, ky, ke = jax.random.split(key, 4)

    B = 8
    params = make_params(kp)
    x = jax.random.uniform(kx, (B, IN_DIMS), dtype=jnp.float32)          # flattened images
    y = jax.random.randint(ky, (B, 1), 0, NUM_CLASSES, dtype=jnp.int32)  # class labels (scatter format)
    esp = jax.random.normal(ke, (B, HID1), dtype=jnp.float32)            # reparam noise

    recon, mu, logvar = vaegt_forward(x, y, esp, params)
    jax.block_until_ready((recon, mu, logvar))

    r_recon, r_mu, r_logvar = vaegt_reference(x, y, esp, params)
    # bf16 matmul operands (f32 accumulation) -> loosened tolerance vs f32 reference
    assert np.allclose(np.asarray(recon), np.asarray(r_recon), atol=1e-2), "recon mismatch"
    assert np.allclose(np.asarray(mu), np.asarray(r_mu), atol=1e-2), "mu mismatch"
    assert np.allclose(np.asarray(logvar), np.asarray(r_logvar), atol=1e-2), "logvar mismatch"

    print("KERNEL_OK")
</pallas_src>

<mosaic_0001>
module attributes {stable_mosaic.version = 11 : i64} {
  func.func @vaegt_kernel(%arg0: i32, %arg1: memref<8x784xbf16, #tpu.memory_space<vmem>>, %arg2: memref<8x1xi32, #tpu.memory_space<vmem>>, %arg3: memref<8x128xf32, #tpu.memory_space<vmem>>, %arg4: memref<784x512xbf16, #tpu.memory_space<vmem>>, %arg5: memref<1x512xf32, #tpu.memory_space<vmem>>, %arg6: memref<512x256xbf16, #tpu.memory_space<vmem>>, %arg7: memref<1x256xf32, #tpu.memory_space<vmem>>, %arg8: memref<256x128xbf16, #tpu.memory_space<vmem>>, %arg9: memref<1x128xf32, #tpu.memory_space<vmem>>, %arg10: memref<128x256xbf16, #tpu.memory_space<vmem>>, %arg11: memref<1x256xf32, #tpu.memory_space<vmem>>, %arg12: memref<256x128xbf16, #tpu.memory_space<vmem>>, %arg13: memref<1x128xf32, #tpu.memory_space<vmem>>, %arg14: memref<128x256xbf16, #tpu.memory_space<vmem>>, %arg15: memref<1x256xf32, #tpu.memory_space<vmem>>, %arg16: memref<256x512xbf16, #tpu.memory_space<vmem>>, %arg17: memref<1x512xf32, #tpu.memory_space<vmem>>, %arg18: memref<512x784xbf16, #tpu.memory_space<vmem>>, %arg19: memref<1x784xf32, #tpu.memory_space<vmem>>, %arg20: memref<8x784xf32, #tpu.memory_space<vmem>>, %arg21: memref<8x100xf32, #tpu.memory_space<vmem>>, %arg22: memref<8x100xf32, #tpu.memory_space<vmem>>) attributes {dimension_semantics = [#tpu.dimension_semantics<parallel>], iteration_bounds = array<i64: 1>, scalar_prefetch = 0 : i64, scratch_operands = 0 : i64, tpu.core_type = #tpu.core_type<tc>, window_params = [{transform_indices = @transform_0, window_bounds = array<i64: 8, 784>}, {transform_indices = @transform_1, window_bounds = array<i64: 8, 1>}, {transform_indices = @transform_2, window_bounds = array<i64: 8, 128>}, {pipeline_mode = #tpu.pipeline_mode<synchronous>, transform_indices = @transform_3, window_bounds = array<i64: 784, 512>}, {pipeline_mode = #tpu.pipeline_mode<synchronous>, transform_indices = @transform_4, window_bounds = array<i64: 1, 512>}, {pipeline_mode = #tpu.pipeline_mode<synchronous>, transform_indices = @transform_5, window_bounds = array<i64: 512, 256>}, {pipeline_mode = #tpu.pipeline_mode<synchronous>, transform_indices = @transform_6, window_bounds = array<i64: 1, 256>}, {pipeline_mode = #tpu.pipeline_mode<synchronous>, transform_indices = @transform_7, window_bounds = array<i64: 256, 128>}, {pipeline_mode = #tpu.pipeline_mode<synchronous>, transform_indices = @transform_8, window_bounds = array<i64: 1, 128>}, {pipeline_mode = #tpu.pipeline_mode<synchronous>, transform_indices = @transform_9, window_bounds = array<i64: 128, 256>}, {pipeline_mode = #tpu.pipeline_mode<synchronous>, transform_indices = @transform_10, window_bounds = array<i64: 1, 256>}, {pipeline_mode = #tpu.pipeline_mode<synchronous>, transform_indices = @transform_11, window_bounds = array<i64: 256, 128>}, {pipeline_mode = #tpu.pipeline_mode<synchronous>, transform_indices = @transform_12, window_bounds = array<i64: 1, 128>}, {pipeline_mode = #tpu.pipeline_mode<synchronous>, transform_indices = @transform_13, window_bounds = array<i64: 128, 256>}, {pipeline_mode = #tpu.pipeline_mode<synchronous>, transform_indices = @transform_14, window_bounds = array<i64: 1, 256>}, {pipeline_mode = #tpu.pipeline_mode<synchronous>, transform_indices = @transform_15, window_bounds = array<i64: 256, 512>}, {pipeline_mode = #tpu.pipeline_mode<synchronous>, transform_indices = @transform_16, window_bounds = array<i64: 1, 512>}, {pipeline_mode = #tpu.pipeline_mode<synchronous>, transform_indices = @transform_17, window_bounds = array<i64: 512, 784>}, {pipeline_mode = #tpu.pipeline_mode<synchronous>, transform_indices = @transform_18, window_bounds = array<i64: 1, 784>}, {transform_indices = @transform_19, window_bounds = array<i64: 8, 784>}, {transform_indices = @transform_20, window_bounds = array<i64: 8, 100>}, {transform_indices = @transform_21, window_bounds = array<i64: 8, 100>}]} {
    %c0 = arith.constant 0 : index
    %c0_0 = arith.constant 0 : index
    %0 = vector.load %arg1[%c0, %c0_0] : memref<8x784xbf16, #tpu.memory_space<vmem>>, vector<8x784xbf16>
    %c0_1 = arith.constant 0 : index
    %c0_2 = arith.constant 0 : index
    %1 = vector.load %arg4[%c0_1, %c0_2] : memref<784x512xbf16, #tpu.memory_space<vmem>>, vector<784x512xbf16>
    %cst = arith.constant dense<0.000000e+00> : vector<8x512xf32>
    %2 = tpu.matmul %0, %1, %cst {dimension_numbers = #tpu.dot_dimension_numbers<[1], [0], [0], [1], [0, 0, 1, 1], [], []>} : vector<8x784xbf16>, vector<784x512xbf16>, vector<8x512xf32> -> vector<8x512xf32>
    %c0_3 = arith.constant 0 : index
    %c0_4 = arith.constant 0 : index
    %3 = vector.load %arg5[%c0_3, %c0_4] : memref<1x512xf32, #tpu.memory_space<vmem>>, vector<1x512xf32>
    %4 = vector.broadcast %3 : vector<1x512xf32> to vector<8x512xf32>
    %5 = arith.addf %2, %4 : vector<8x512xf32>
    %cst_5 = arith.constant 1.000000e-01 : f32
    %6 = vector.broadcast %cst_5 : f32 to vector<8x512xf32>
    %7 = arith.mulf %6, %5 : vector<8x512xf32>
    %8 = arith.maximumf %5, %7 : vector<8x512xf32>
    %9 = arith.truncf %8 : vector<8x512xf32> to vector<8x512xbf16>
    %c0_6 = arith.constant 0 : index
    %c0_7 = arith.constant 0 : index
    %10 = vector.load %arg6[%c0_6, %c0_7] : memref<512x256xbf16, #tpu.memory_space<vmem>>, vector<512x256xbf16>
    %cst_8 = arith.constant dense<0.000000e+00> : vector<8x256xf32>
    %11 = tpu.matmul %9, %10, %cst_8 {dimension_numbers = #tpu.dot_dimension_numbers<[1], [0], [0], [1], [0, 0, 1, 1], [], []>} : vector<8x512xbf16>, vector<512x256xbf16>, vector<8x256xf32> -> vector<8x256xf32>
    %c0_9 = arith.constant 0 : index
    %c0_10 = arith.constant 0 : index
    %12 = vector.load %arg7[%c0_9, %c0_10] : memref<1x256xf32, #tpu.memory_space<vmem>>, vector<1x256xf32>
    %13 = vector.broadcast %12 : vector<1x256xf32> to vector<8x256xf32>
    %14 = arith.addf %11, %13 : vector<8x256xf32>
    %cst_11 = arith.constant 1.000000e-01 : f32
    %15 = vector.broadcast %cst_11 : f32 to vector<8x256xf32>
    %16 = arith.mulf %15, %14 : vector<8x256xf32>
    %17 = arith.maximumf %14, %16 : vector<8x256xf32>
    %18 = arith.truncf %17 : vector<8x256xf32> to vector<8x256xbf16>
    %c0_12 = arith.constant 0 : index
    %c0_13 = arith.constant 0 : index
    %19 = vector.load %arg8[%c0_12, %c0_13] : memref<256x128xbf16, #tpu.memory_space<vmem>>, vector<256x128xbf16>
    %cst_14 = arith.constant dense<0.000000e+00> : vector<8x128xf32>
    %20 = tpu.matmul %18, %19, %cst_14 {dimension_numbers = #tpu.dot_dimension_numbers<[1], [0], [0], [1], [0, 0, 1, 1], [], []>} : vector<8x256xbf16>, vector<256x128xbf16>, vector<8x128xf32> -> vector<8x128xf32>
    %c0_15 = arith.constant 0 : index
    %c0_16 = arith.constant 0 : index
    %21 = vector.load %arg9[%c0_15, %c0_16] : memref<1x128xf32, #tpu.memory_space<vmem>>, vector<1x128xf32>
    %22 = vector.broadcast %21 : vector<1x128xf32> to vector<8x128xf32>
    %23 = arith.addf %20, %22 : vector<8x128xf32>
    %cst_17 = arith.constant 1.000000e-01 : f32
    %24 = vector.broadcast %cst_17 : f32 to vector<8x128xf32>
    %25 = arith.mulf %24, %23 : vector<8x128xf32>
    %26 = arith.maximumf %23, %25 : vector<8x128xf32>
    %27 = arith.truncf %26 : vector<8x128xf32> to vector<8x128xbf16>
    %c0_18 = arith.constant 0 : index
    %c0_19 = arith.constant 0 : index
    %28 = vector.load %arg10[%c0_18, %c0_19] : memref<128x256xbf16, #tpu.memory_space<vmem>>, vector<128x256xbf16>
    %cst_20 = arith.constant dense<0.000000e+00> : vector<8x256xf32>
    %29 = tpu.matmul %27, %28, %cst_20 {dimension_numbers = #tpu.dot_dimension_numbers<[1], [0], [0], [1], [0, 0, 1, 1], [], []>} : vector<8x128xbf16>, vector<128x256xbf16>, vector<8x256xf32> -> vector<8x256xf32>
    %c0_21 = arith.constant 0 : index
    %c0_22 = arith.constant 0 : index
    %30 = vector.load %arg11[%c0_21, %c0_22] : memref<1x256xf32, #tpu.memory_space<vmem>>, vector<1x256xf32>
    %31 = vector.broadcast %30 : vector<1x256xf32> to vector<8x256xf32>
    %32 = arith.addf %29, %31 : vector<8x256xf32>
    %33 = vector.extract_strided_slice %32 {offsets = [0, 0], sizes = [8, 128], strides = [1, 1]} : vector<8x256xf32> to vector<8x128xf32>
    %34 = vector.extract_strided_slice %32 {offsets = [0, 128], sizes = [8, 128], strides = [1, 1]} : vector<8x256xf32> to vector<8x128xf32>
    %cst_23 = arith.constant 5.000000e-01 : f32
    %35 = vector.broadcast %cst_23 : f32 to vector<8x128xf32>
    %36 = arith.mulf %35, %34 : vector<8x128xf32>
    %37 = math.exp %36 : vector<8x128xf32>
    %c0_24 = arith.constant 0 : index
    %c0_25 = arith.constant 0 : index
    %38 = vector.load %arg3[%c0_24, %c0_25] : memref<8x128xf32, #tpu.memory_space<vmem>>, vector<8x128xf32>
    %39 = arith.mulf %37, %38 : vector<8x128xf32>
    %40 = arith.addf %33, %39 : vector<8x128xf32>
    %41 = tpu.iota {dimensions = array<i32: 1>} : vector<8x128xi32>
    %c0_26 = arith.constant 0 : index
    %c0_27 = arith.constant 0 : index
    %42 = vector.load %arg2[%c0_26, %c0_27] : memref<8x1xi32, #tpu.memory_space<vmem>>, vector<8x1xi32>
    %43 = vector.broadcast %42 : vector<8x1xi32> to vector<8x128xi32>
    %44 = arith.cmpi eq, %41, %43 : vector<8x128xi32>
    %45 = arith.extui %44 : vector<8x128xi1> to vector<8x128xi32>
    %46 = arith.sitofp %45 : vector<8x128xi32> to vector<8x128xf32>
    %47 = arith.truncf %46 : vector<8x128xf32> to vector<8x128xbf16>
    %48 = arith.truncf %40 : vector<8x128xf32> to vector<8x128xbf16>
    %49 = tpu.concatenate %48, %47 in 1 : vector<8x128xbf16>, vector<8x128xbf16> -> vector<8x256xbf16>
    %c0_28 = arith.constant 0 : index
    %c0_29 = arith.constant 0 : index
    %50 = vector.load %arg12[%c0_28, %c0_29] : memref<256x128xbf16, #tpu.memory_space<vmem>>, vector<256x128xbf16>
    %cst_30 = arith.constant dense<0.000000e+00> : vector<8x128xf32>
    %51 = tpu.matmul %49, %50, %cst_30 {dimension_numbers = #tpu.dot_dimension_numbers<[1], [0], [0], [1], [0, 0, 1, 1], [], []>} : vector<8x256xbf16>, vector<256x128xbf16>, vector<8x128xf32> -> vector<8x128xf32>
    %c0_31 = arith.constant 0 : index
    %c0_32 = arith.constant 0 : index
    %52 = vector.load %arg13[%c0_31, %c0_32] : memref<1x128xf32, #tpu.memory_space<vmem>>, vector<1x128xf32>
    %53 = vector.broadcast %52 : vector<1x128xf32> to vector<8x128xf32>
    %54 = arith.addf %51, %53 : vector<8x128xf32>
    %cst_33 = arith.constant 1.000000e-01 : f32
    %55 = vector.broadcast %cst_33 : f32 to vector<8x128xf32>
    %56 = arith.mulf %55, %54 : vector<8x128xf32>
    %57 = arith.maximumf %54, %56 : vector<8x128xf32>
    %58 = arith.truncf %57 : vector<8x128xf32> to vector<8x128xbf16>
    %c0_34 = arith.constant 0 : index
    %c0_35 = arith.constant 0 : index
    %59 = vector.load %arg14[%c0_34, %c0_35] : memref<128x256xbf16, #tpu.memory_space<vmem>>, vector<128x256xbf16>
    %cst_36 = arith.constant dense<0.000000e+00> : vector<8x256xf32>
    %60 = tpu.matmul %58, %59, %cst_36 {dimension_numbers = #tpu.dot_dimension_numbers<[1], [0], [0], [1], [0, 0, 1, 1], [], []>} : vector<8x128xbf16>, vector<128x256xbf16>, vector<8x256xf32> -> vector<8x256xf32>
    %c0_37 = arith.constant 0 : index
    %c0_38 = arith.constant 0 : index
    %61 = vector.load %arg15[%c0_37, %c0_38] : memref<1x256xf32, #tpu.memory_space<vmem>>, vector<1x256xf32>
    %62 = vector.broadcast %61 : vector<1x256xf32> to vector<8x256xf32>
    %63 = arith.addf %60, %62 : vector<8x256xf32>
    %cst_39 = arith.constant 1.000000e-01 : f32
    %64 = vector.broadcast %cst_39 : f32 to vector<8x256xf32>
    %65 = arith.mulf %64, %63 : vector<8x256xf32>
    %66 = arith.maximumf %63, %65 : vector<8x256xf32>
    %67 = arith.truncf %66 : vector<8x256xf32> to vector<8x256xbf16>
    %c0_40 = arith.constant 0 : index
    %c0_41 = arith.constant 0 : index
    %68 = vector.load %arg16[%c0_40, %c0_41] : memref<256x512xbf16, #tpu.memory_space<vmem>>, vector<256x512xbf16>
    %cst_42 = arith.constant dense<0.000000e+00> : vector<8x512xf32>
    %69 = tpu.matmul %67, %68, %cst_42 {dimension_numbers = #tpu.dot_dimension_numbers<[1], [0], [0], [1], [0, 0, 1, 1], [], []>} : vector<8x256xbf16>, vector<256x512xbf16>, vector<8x512xf32> -> vector<8x512xf32>
    %c0_43 = arith.constant 0 : index
    %c0_44 = arith.constant 0 : index
    %70 = vector.load %arg17[%c0_43, %c0_44] : memref<1x512xf32, #tpu.memory_space<vmem>>, vector<1x512xf32>
    %71 = vector.broadcast %70 : vector<1x512xf32> to vector<8x512xf32>
    %72 = arith.addf %69, %71 : vector<8x512xf32>
    %cst_45 = arith.constant 1.000000e-01 : f32
    %73 = vector.broadcast %cst_45 : f32 to vector<8x512xf32>
    %74 = arith.mulf %73, %72 : vector<8x512xf32>
    %75 = arith.maximumf %72, %74 : vector<8x512xf32>
    %76 = arith.truncf %75 : vector<8x512xf32> to vector<8x512xbf16>
    %c0_46 = arith.constant 0 : index
    %c0_47 = arith.constant 0 : index
    %77 = vector.load %arg18[%c0_46, %c0_47] : memref<512x784xbf16, #tpu.memory_space<vmem>>, vector<512x784xbf16>
    %cst_48 = arith.constant dense<0.000000e+00> : vector<8x784xf32>
    %78 = tpu.matmul %76, %77, %cst_48 {dimension_numbers = #tpu.dot_dimension_numbers<[1], [0], [0], [1], [0, 0, 1, 1], [], []>} : vector<8x512xbf16>, vector<512x784xbf16>, vector<8x784xf32> -> vector<8x784xf32>
    %c0_49 = arith.constant 0 : index
    %c0_50 = arith.constant 0 : index
    %79 = vector.load %arg19[%c0_49, %c0_50] : memref<1x784xf32, #tpu.memory_space<vmem>>, vector<1x784xf32>
    %80 = vector.broadcast %79 : vector<1x784xf32> to vector<8x784xf32>
    %81 = arith.addf %78, %80 : vector<8x784xf32>
    %82 = arith.negf %81 : vector<8x784xf32>
    %83 = math.exp %82 : vector<8x784xf32>
    %cst_51 = arith.constant 1.000000e+00 : f32
    %84 = vector.broadcast %cst_51 : f32 to vector<8x784xf32>
    %85 = arith.addf %84, %83 : vector<8x784xf32>
    %86 = arith.divf %84, %85 : vector<8x784xf32>
    %c0_52 = arith.constant 0 : index
    %c0_53 = arith.constant 0 : index
    %87 = vector.load %arg20[%c0_52, %c0_53] : memref<8x784xf32, #tpu.memory_space<vmem>>, vector<8x784xf32>
    tpu.vector_store %arg20[%c0_52, %c0_53], %86 {strides = array<i32>} : memref<8x784xf32, #tpu.memory_space<vmem>>, vector<8x784xf32>,
    %88 = vector.extract_strided_slice %33 {offsets = [0, 0], sizes = [8, 100], strides = [1, 1]} : vector<8x128xf32> to vector<8x100xf32>
    %c0_54 = arith.constant 0 : index
    %c0_55 = arith.constant 0 : index
    %89 = vector.load %arg21[%c0_54, %c0_55] : memref<8x100xf32, #tpu.memory_space<vmem>>, vector<8x100xf32>
    tpu.vector_store %arg21[%c0_54, %c0_55], %88 {strides = array<i32>} : memref<8x100xf32, #tpu.memory_space<vmem>>, vector<8x100xf32>,
    %90 = vector.extract_strided_slice %34 {offsets = [0, 0], sizes = [8, 100], strides = [1, 1]} : vector<8x128xf32> to vector<8x100xf32>
    %c0_56 = arith.constant 0 : index
    %c0_57 = arith.constant 0 : index
    %91 = vector.load %arg22[%c0_56, %c0_57] : memref<8x100xf32, #tpu.memory_space<vmem>>, vector<8x100xf32>
    tpu.vector_store %arg22[%c0_56, %c0_57], %90 {strides = array<i32>} : memref<8x100xf32, #tpu.memory_space<vmem>>, vector<8x100xf32>,
    return
  }
  func.func @transform_0(%arg0: i32) -> (i32, i32) {
    %c0_i32 = arith.constant 0 : i32
    %c0_i32_0 = arith.constant 0 : i32
    return %arg0, %c0_i32 : i32, i32
  }
  func.func @transform_1(%arg0: i32) -> (i32, i32) {
    %c0_i32 = arith.constant 0 : i32
    %c0_i32_0 = arith.constant 0 : i32
    return %arg0, %c0_i32 : i32, i32
  }
  func.func @transform_2(%arg0: i32) -> (i32, i32) {
    %c0_i32 = arith.constant 0 : i32
    %c0_i32_0 = arith.constant 0 : i32
    return %arg0, %c0_i32 : i32, i32
  }
  func.func @transform_3(%arg0: i32) -> (i32, i32) {
    %c0_i32 = arith.constant 0 : i32
    %c0_i32_0 = arith.constant 0 : i32
    %c0_i32_1 = arith.constant 0 : i32
    return %c0_i32, %c0_i32_0 : i32, i32
  }
  func.func @transform_4(%arg0: i32) -> (i32, i32) {
    %c0_i32 = arith.constant 0 : i32
    %c0_i32_0 = arith.constant 0 : i32
    %c0_i32_1 = arith.constant 0 : i32
    return %c0_i32, %c0_i32_0 : i32, i32
  }
  func.func @transform_5(%arg0: i32) -> (i32, i32) {
    %c0_i32 = arith.constant 0 : i32
    %c0_i32_0 = arith.constant 0 : i32
    %c0_i32_1 = arith.constant 0 : i32
    return %c0_i32, %c0_i32_0 : i32, i32
  }
  func.func @transform_6(%arg0: i32) -> (i32, i32) {
    %c0_i32 = arith.constant 0 : i32
    %c0_i32_0 = arith.constant 0 : i32
    %c0_i32_1 = arith.constant 0 : i32
    return %c0_i32, %c0_i32_0 : i32, i32
  }
  func.func @transform_7(%arg0: i32) -> (i32, i32) {
    %c0_i32 = arith.constant 0 : i32
    %c0_i32_0 = arith.constant 0 : i32
    %c0_i32_1 = arith.constant 0 : i32
    return %c0_i32, %c0_i32_0 : i32, i32
  }
  func.func @transform_8(%arg0: i32) -> (i32, i32) {
    %c0_i32 = arith.constant 0 : i32
    %c0_i32_0 = arith.constant 0 : i32
    %c0_i32_1 = arith.constant 0 : i32
    return %c0_i32, %c0_i32_0 : i32, i32
  }
  func.func @transform_9(%arg0: i32) -> (i32, i32) {
    %c0_i32 = arith.constant 0 : i32
    %c0_i32_0 = arith.constant 0 : i32
    %c0_i32_1 = arith.constant 0 : i32
    return %c0_i32, %c0_i32_0 : i32, i32
  }
  func.func @transform_10(%arg0: i32) -> (i32, i32) {
    %c0_i32 = arith.constant 0 : i32
    %c0_i32_0 = arith.constant 0 : i32
    %c0_i32_1 = arith.constant 0 : i32
    return %c0_i32, %c0_i32_0 : i32, i32
  }
  func.func @transform_11(%arg0: i32) -> (i32, i32) {
    %c0_i32 = arith.constant 0 : i32
    %c0_i32_0 = arith.constant 0 : i32
    %c0_i32_1 = arith.constant 0 : i32
    return %c0_i32, %c0_i32_0 : i32, i32
  }
  func.func @transform_12(%arg0: i32) -> (i32, i32) {
    %c0_i32 = arith.constant 0 : i32
    %c0_i32_0 = arith.constant 0 : i32
    %c0_i32_1 = arith.constant 0 : i32
    return %c0_i32, %c0_i32_0 : i32, i32
  }
  func.func @transform_13(%arg0: i32) -> (i32, i32) {
    %c0_i32 = arith.constant 0 : i32
    %c0_i32_0 = arith.constant 0 : i32
    %c0_i32_1 = arith.constant 0 : i32
    return %c0_i32, %c0_i32_0 : i32, i32
  }
  func.func @transform_14(%arg0: i32) -> (i32, i32) {
    %c0_i32 = arith.constant 0 : i32
    %c0_i32_0 = arith.constant 0 : i32
    %c0_i32_1 = arith.constant 0 : i32
    return %c0_i32, %c0_i32_0 : i32, i32
  }
  func.func @transform_15(%arg0: i32) -> (i32, i32) {
    %c0_i32 = arith.constant 0 : i32
    %c0_i32_0 = arith.constant 0 : i32
    %c0_i32_1 = arith.constant 0 : i32
    return %c0_i32, %c0_i32_0 : i32, i32
  }
  func.func @transform_16(%arg0: i32) -> (i32, i32) {
    %c0_i32 = arith.constant 0 : i32
    %c0_i32_0 = arith.constant 0 : i32
    %c0_i32_1 = arith.constant 0 : i32
    return %c0_i32, %c0_i32_0 : i32, i32
  }
  func.func @transform_17(%arg0: i32) -> (i32, i32) {
    %c0_i32 = arith.constant 0 : i32
    %c0_i32_0 = arith.constant 0 : i32
    %c0_i32_1 = arith.constant 0 : i32
    return %c0_i32, %c0_i32_0 : i32, i32
  }
  func.func @transform_18(%arg0: i32) -> (i32, i32) {
    %c0_i32 = arith.constant 0 : i32
    %c0_i32_0 = arith.constant 0 : i32
    %c0_i32_1 = arith.constant 0 : i32
    return %c0_i32, %c0_i32_0 : i32, i32
  }
  func.func @transform_19(%arg0: i32) -> (i32, i32) {
    %c0_i32 = arith.constant 0 : i32
    %c0_i32_0 = arith.constant 0 : i32
    return %arg0, %c0_i32 : i32, i32
  }
  func.func @transform_20(%arg0: i32) -> (i32, i32) {
    %c0_i32 = arith.constant 0 : i32
    %c0_i32_0 = arith.constant 0 : i32
    return %arg0, %c0_i32 : i32, i32
  }
  func.func @transform_21(%arg0: i32) -> (i32, i32) {
    %c0_i32 = arith.constant 0 : i32
    %c0_i32_0 = arith.constant 0 : i32
    return %arg0, %c0_i32 : i32, i32
  }
}

</mosaic_0001>

<llo_original>
// kernel: tpu_custom_call.1
$region0: #{tpu_custom_call.1}
  #allocation0 [shape = 'u32[]', space=smem, size = 0x4, offset = 0x4, fixed_abs, tag = 'smem constant byte address 0x4 - core index']
  #allocation1 [shape = 'u32[144,128]{1,0:T(1,128)}', space=vmem, size = 0x12000, scoped, tag = 'internal scratch']
  %s0 = inlined_call_operand.vmem [shape: bf16[8,784], index: 0, kind: input, shape index: {}]
  %s1 = inlined_call_operand.vmem [shape: s32[8,1], index: 1, kind: input, shape index: {}]
  %s2 = inlined_call_operand.vmem [shape: f32[8,128], index: 2, kind: input, shape index: {}]
  %s3 = inlined_call_operand.vmem [shape: bf16[784,512], index: 3, kind: input, shape index: {}]
  %s4 = inlined_call_operand.vmem [shape: f32[1,512], index: 4, kind: input, shape index: {}]
  %s5 = inlined_call_operand.vmem [shape: bf16[512,256], index: 5, kind: input, shape index: {}]
  %s6 = inlined_call_operand.vmem [shape: f32[1,256], index: 6, kind: input, shape index: {}]
  %s7 = inlined_call_operand.vmem [shape: bf16[256,128], index: 7, kind: input, shape index: {}]
  %s8 = inlined_call_operand.vmem [shape: f32[1,128], index: 8, kind: input, shape index: {}]
  %s9 = inlined_call_operand.vmem [shape: bf16[128,256], index: 9, kind: input, shape index: {}]
  %s10 = inlined_call_operand.vmem [shape: f32[1,256], index: 10, kind: input, shape index: {}]
  %s11 = inlined_call_operand.vmem [shape: bf16[256,128], index: 11, kind: input, shape index: {}]
  %s12 = inlined_call_operand.vmem [shape: f32[1,128], index: 12, kind: input, shape index: {}]
  %s13 = inlined_call_operand.vmem [shape: bf16[128,256], index: 13, kind: input, shape index: {}]
  %s14 = inlined_call_operand.vmem [shape: f32[1,256], index: 14, kind: input, shape index: {}]
  %s15 = inlined_call_operand.vmem [shape: bf16[256,512], index: 15, kind: input, shape index: {}]
  %s16 = inlined_call_operand.vmem [shape: f32[1,512], index: 16, kind: input, shape index: {}]
  %s17 = inlined_call_operand.vmem [shape: bf16[512,784], index: 17, kind: input, shape index: {}]
  %s18 = inlined_call_operand.vmem [shape: f32[1,784], index: 18, kind: input, shape index: {}]
  %s19 = inlined_call_operand.hbm [shape: f32[8,784], index: 19, kind: output, shape index: {0}]
  %s20 = inlined_call_operand.hbm [shape: f32[8,100], index: 20, kind: output, shape index: {1}]
  %s21 = inlined_call_operand.hbm [shape: f32[8,100], index: 21, kind: output, shape index: {2}]
  %22 = xla_tuple %s19, %s20, %s21
  %s23 = sld [smem:[#allocation0]]
  $region102: #{tpu_custom_call.1} parent=0
    _
  %s25 = ssub.s32 1, %s23
  %s26 = scalar_select 0, %s25, %s23
  $region1: #{tpu_custom_call.1} parent=0
    #allocation2 [shape = 'u8[28672]{0}', space=vmem, size = 0x7000, scoped, tag = 'output window, operand 0, single buffered']
    #allocation3 [shape = 's32[1]{0}', space=sflag, size = 0x4, scoped, tag = 'scoped memory for tpu_custom_call.1']
    #allocation4 [shape = 'u8[4096]{0}', space=vmem, size = 0x1000, scoped, tag = 'output window, operand 1, single buffered']
    #allocation5 [shape = 's32[1]{0}', space=sflag, size = 0x4, scoped, tag = 'scoped memory for tpu_custom_call.1']
    #allocation6 [shape = 'u8[4096]{0}', space=vmem, size = 0x1000, scoped, tag = 'output window, operand 2, single buffered']
    %27 = vsyncpa [#allocation3], 0
    %28 = vsyncpa [#allocation5], 0
    // Predicated region
    $region2: #{tpu_custom_call.1} parent=1 // pred_check
      _
    $region3: #{tpu_custom_call.1} parent=1 // pred_check_branch
      %30 = sbr.rel (0) target = $region5
    $region4: #{tpu_custom_call.1} parent=1 // pred_region
      _
    $region5: #{tpu_custom_call.1} parent=1 // pred_fallthru
      _
    // Predicated region
    $region6: #{tpu_custom_call.1} parent=1 // pred_check
      _
    $region7: #{tpu_custom_call.1} parent=1 // pred_check_branch
      %32 = sbr.rel (0) target = $region9
    $region8: #{tpu_custom_call.1} parent=1 // pred_region
      _
    $region9: #{tpu_custom_call.1} parent=1 // pred_fallthru
      _
    // Predicated region
    $region10: #{tpu_custom_call.1} parent=1 // pred_check
      _
    $region11: #{tpu_custom_call.1} parent=1 // pred_check_branch
      %34 = sbr.rel (0) target = $region13
    $region12: #{tpu_custom_call.1} parent=1 // pred_region
      _
    $region13: #{tpu_custom_call.1} parent=1 // pred_fallthru
      _
    // Predicated region
    $region14: #{tpu_custom_call.1} parent=1 // pred_check
      _
    $region15: #{tpu_custom_call.1} parent=1 // pred_check_branch
      %36 = sbr.rel (0) target = $region17
    $region16: #{tpu_custom_call.1} parent=1 // pred_region
      _
    $region17: #{tpu_custom_call.1} parent=1 // pred_fallthru
      _
    // Predicated region
    $region18: #{tpu_custom_call.1} parent=1 // pred_check
      _
    $region19: #{tpu_custom_call.1} parent=1 // pred_check_branch
      %38 = sbr.rel (0) target = $region21
    $region20: #{tpu_custom_call.1} parent=1 // pred_region
      _
    $region21: #{tpu_custom_call.1} parent=1 // pred_fallthru
      _
    // Predicated region
    $region22: #{tpu_custom_call.1} parent=1 // pred_check
      _
    $region23: #{tpu_custom_call.1} parent=1 // pred_check_branch
      %40 = sbr.rel (0) target = $region25
    $region24: #{tpu_custom_call.1} parent=1 // pred_region
      _
    $region25: #{tpu_custom_call.1} parent=1 // pred_fallthru
      _
    // Predicated region
    $region26: #{tpu_custom_call.1} parent=1 // pred_check
      _
    $region27: #{tpu_custom_call.1} parent=1 // pred_check_branch
      %42 = sbr.rel (0) target = $region29
    $region28: #{tpu_custom_call.1} parent=1 // pred_region
      _
    $region29: #{tpu_custom_call.1} parent=1 // pred_fallthru
      _
    // Predicated region
    $region30: #{tpu_custom_call.1} parent=1 // pred_check
      _
    $region31: #{tpu_custom_call.1} parent=1 // pred_check_branch
      %44 = sbr.rel (0) target = $region33
    $region32: #{tpu_custom_call.1} parent=1 // pred_region
      _
    $region33: #{tpu_custom_call.1} parent=1 // pred_fallthru
      _
    // Predicated region
    $region34: #{tpu_custom_call.1} parent=1 // pred_check
      _
    $region35: #{tpu_custom_call.1} parent=1 // pred_check_branch
      %46 = sbr.rel (0) target = $region37
    $region36: #{tpu_custom_call.1} parent=1 // pred_region
      _
    $region37: #{tpu_custom_call.1} parent=1 // pred_fallthru
      _
    // Predicated region
    $region38: #{tpu_custom_call.1} parent=1 // pred_check
      _
    $region39: #{tpu_custom_call.1} parent=1 // pred_check_branch
      %48 = sbr.rel (0) target = $region41
    $region40: #{tpu_custom_call.1} parent=1 // pred_region
      _
    $region41: #{tpu_custom_call.1} parent=1 // pred_fallthru
      _
    // Predicated region
    $region42: #{tpu_custom_call.1} parent=1 // pred_check
      _
    $region43: #{tpu_custom_call.1} parent=1 // pred_check_branch
      %50 = sbr.rel (0) target = $region45
    $region44: #{tpu_custom_call.1} parent=1 // pred_region
      _
    $region45: #{tpu_custom_call.1} parent=1 // pred_fallthru
      _
    // Predicated region
    $region46: #{tpu_custom_call.1} parent=1 // pred_check
      _
    $region47: #{tpu_custom_call.1} parent=1 // pred_check_branch
      %52 = sbr.rel (0) target = $region49
    $region48: #{tpu_custom_call.1} parent=1 // pred_region
      _
    $region49: #{tpu_custom_call.1} parent=1 // pred_fallthru
      _
    // Predicated region
    $region50: #{tpu_custom_call.1} parent=1 // pred_check
      _
    $region51: #{tpu_custom_call.1} parent=1 // pred_check_branch
      %54 = sbr.rel (0) target = $region53
    $region52: #{tpu_custom_call.1} parent=1 // pred_region
      _
    $region53: #{tpu_custom_call.1} parent=1 // pred_fallthru
      _
    // Predicated region
    $region54: #{tpu_custom_call.1} parent=1 // pred_check
      _
    $region55: #{tpu_custom_call.1} parent=1 // pred_check_branch
      %56 = sbr.rel (0) target = $region57
    $region56: #{tpu_custom_call.1} parent=1 // pred_region
      _
    $region57: #{tpu_custom_call.1} parent=1 // pred_fallthru
      _
    // Predicated region
    $region58: #{tpu_custom_call.1} parent=1 // pred_check
      _
    $region59: #{tpu_custom_call.1} parent=1 // pred_check_branch
      %58 = sbr.rel (0) target = $region61
    $region60: #{tpu_custom_call.1} parent=1 // pred_region
      _
    $region61: #{tpu_custom_call.1} parent=1 // pred_fallthru
      _
    // Predicated region
    $region62: #{tpu_custom_call.1} parent=1 // pred_check
      _
    $region63: #{tpu_custom_call.1} parent=1 // pred_check_branch
      %60 = sbr.rel (0) target = $region65
    $region64: #{tpu_custom_call.1} parent=1 // pred_region
      _
    $region65: #{tpu_custom_call.1} parent=1 // pred_fallthru
      _
    // Predicated region
    $region66: #{tpu_custom_call.1} parent=1 // pred_check
      _
    $region67: #{tpu_custom_call.1} parent=1 // pred_check_branch
      %62 = sbr.rel (0) target = $region69
    $region68: #{tpu_custom_call.1} parent=1 // pred_region
      _
    $region69: #{tpu_custom_call.1} parent=1 // pred_fallthru
      _
    // Predicated region
    $region70: #{tpu_custom_call.1} parent=1 // pred_check
      _
    $region71: #{tpu_custom_call.1} parent=1 // pred_check_branch
      %64 = sbr.rel (0) target = $region73
    $region72: #{tpu_custom_call.1} parent=1 // pred_region
      _
    $region73: #{tpu_custom_call.1} parent=1 // pred_fallthru
      _
    // Predicated region
    $region74: #{tpu_custom_call.1} parent=1 // pred_check
      _
    $region75: #{tpu_custom_call.1} parent=1 // pred_check_branch
      %66 = sbr.rel (0) target = $region77
    $region76: #{tpu_custom_call.1} parent=1 // pred_region
      _
    $region77: #{tpu_custom_call.1} parent=1 // pred_fallthru
      _
    %v68 = vld [vmem:[%s0] sm:$0xff]
    %v69 = vld [vmem:[%s0 + $0x8] sm:$0xff]
    %v70 = vld [vmem:[%s0 + $0x10] sm:$0xff]
    %v71 = vld [vmem:[%s0 + $0x18] sm:$0xf]
    %v72 = vld [vmem:[%s3] sm:$0xff]
    %v73 = vld [vmem:[%s3 + $0x8] sm:$0xff]
    %v74 = vld [vmem:[%s3 + $0x10] sm:$0xff]
    %v75 = vld [vmem:[%s3 + $0x18] sm:$0xff]
    %v76 = vld [vmem:[%s3 + $0x20] sm:$0xff]
    %v77 = vld [vmem:[%s3 + $0x28] sm:$0xff]
    %v78 = vld [vmem:[%s3 + $0x30] sm:$0xff]
    %v79 = vld [vmem:[%s3 + $0x38] sm:$0xff]
    %v80 = vld [vmem:[%s3 + $0x40] sm:$0xff]
    %v81 = vld [vmem:[%s3 + $0x48] sm:$0xff]
    %v82 = vld [vmem:[%s3 + $0x50] sm:$0xff]
    %v83 = vld [vmem:[%s3 + $0x58] sm:$0xff]
    %v84 = vld [vmem:[%s3 + $0x60] sm:$0xff]
    %v85 = vld [vmem:[%s3 + $0x68] sm:$0xff]
    %v86 = vld [vmem:[%s3 + $0x70] sm:$0xff]
    %v87 = vld [vmem:[%s3 + $0x78] sm:$0xff]
    %v88 = vld [vmem:[%s3 + $0x80] sm:$0xff]
    %v89 = vld [vmem:[%s3 + $0x88] sm:$0xff]
    %v90 = vld [vmem:[%s3 + $0x90] sm:$0xff]
    %v91 = vld [vmem:[%s3 + $0x98] sm:$0xff]
    %v92 = vld [vmem:[%s3 + $0xa0] sm:$0xff]
    %v93 = vld [vmem:[%s3 + $0xa8] sm:$0xff]
    %v94 = vld [vmem:[%s3 + $0xb0] sm:$0xff]
    %v95 = vld [vmem:[%s3 + $0xb8] sm:$0xff]
    %v96 = vld [vmem:[%s3 + $0xc0] sm:$0xff]
    %v97 = vld [vmem:[%s3 + $0xc8] sm:$0xff]
    %v98 = vld [vmem:[%s3 + $0xd0] sm:$0xff]
    %v99 = vld [vmem:[%s3 + $0xd8] sm:$0xff]
    %v100 = vld [vmem:[%s3 + $0xe0] sm:$0xff]
    %v101 = vld [vmem:[%s3 + $0xe8] sm:$0xff]
    %v102 = vld [vmem:[%s3 + $0xf0] sm:$0xff]
    %v103 = vld [vmem:[%s3 + $0xf8] sm:$0xff]
    %v104 = vld [vmem:[%s3 + $0x100] sm:$0xff]
    %v105 = vld [vmem:[%s3 + $0x108] sm:$0xff]
    %v106 = vld [vmem:[%s3 + $0x110] sm:$0xff]
    %v107 = vld [vmem:[%s3 + $0x118] sm:$0xff]
    %v108 = vld [vmem:[%s3 + $0x120] sm:$0xff]
    %v109 = vld [vmem:[%s3 + $0x128] sm:$0xff]
    %v110 = vld [vmem:[%s3 + $0x130] sm:$0xff]
    %v111 = vld [vmem:[%s3 + $0x138] sm:$0xff]
    %v112 = vld [vmem:[%s3 + $0x140] sm:$0xff]
    %v113 = vld [vmem:[%s3 + $0x148] sm:$0xff]
    %v114 = vld [vmem:[%s3 + $0x150] sm:$0xff]
    %v115 = vld [vmem:[%s3 + $0x158] sm:$0xff]
    %v116 = vld [vmem:[%s3 + $0x160] sm:$0xff]
    %v117 = vld [vmem:[%s3 + $0x168] sm:$0xff]
    %v118 = vld [vmem:[%s3 + $0x170] sm:$0xff]
    %v119 = vld [vmem:[%s3 + $0x178] sm:$0xff]
    %v120 = vld [vmem:[%s3 + $0x180] sm:$0xff]
    %v121 = vld [vmem:[%s3 + $0x188] sm:$0xff]
    %v122 = vld [vmem:[%s3 + $0x190] sm:$0xff]
    %v123 = vld [vmem:[%s3 + $0x198] sm:$0xff]
    %v124 = vld [vmem:[%s3 + $0x1a0] sm:$0xff]
    %v125 = vld [vmem:[%s3 + $0x1a8] sm:$0xff]
    %v126 = vld [vmem:[%s3 + $0x1b0] sm:$0xff]
    %v127 = vld [vmem:[%s3 + $0x1b8] sm:$0xff]
    %v128 = vld [vmem:[%s3 + $0x1c0] sm:$0xff]
    %v129 = vld [vmem:[%s3 + $0x1c8] sm:$0xff]
    %v130 = vld [vmem:[%s3 + $0x1d0] sm:$0xff]
    %v131 = vld [vmem:[%s3 + $0x1d8] sm:$0xff]
    %v132 = vld [vmem:[%s3 + $0x1e0] sm:$0xff]
    %v133 = vld [vmem:[%s3 + $0x1e8] sm:$0xff]
    %v134 = vld [vmem:[%s3 + $0x1f0] sm:$0xff]
    %v135 = vld [vmem:[%s3 + $0x1f8] sm:$0xff]
    %v136 = vld [vmem:[%s3 + $0x200] sm:$0xff]
    %v137 = vld [vmem:[%s3 + $0x208] sm:$0xff]
    %v138 = vld [vmem:[%s3 + $0x210] sm:$0xff]
    %v139 = vld [vmem:[%s3 + $0x218] sm:$0xff]
    %v140 = vld [vmem:[%s3 + $0x220] sm:$0xff]
    %v141 = vld [vmem:[%s3 + $0x228] sm:$0xff]
    %v142 = vld [vmem:[%s3 + $0x230] sm:$0xff]
    %v143 = vld [vmem:[%s3 + $0x238] sm:$0xff]
    %v144 = vld [vmem:[%s3 + $0x240] sm:$0xff]
    %v145 = vld [vmem:[%s3 + $0x248] sm:$0xff]
    %v146 = vld [vmem:[%s3 + $0x250] sm:$0xff]
    %v147 = vld [vmem:[%s3 + $0x258] sm:$0xff]
    %v148 = vld [vmem:[%s3 + $0x260] sm:$0xff]
    %v149 = vld [vmem:[%s3 + $0x268] sm:$0xff]
    %v150 = vld [vmem:[%s3 + $0x270] sm:$0xff]
    %v151 = vld [vmem:[%s3 + $0x278] sm:$0xff]
    %v152 = vld [vmem:[%s3 + $0x280] sm:$0xff]
    %v153 = vld [vmem:[%s3 + $0x288] sm:$0xff]
    %v154 = vld [vmem:[%s3 + $0x290] sm:$0xff]
    %v155 = vld [vmem:[%s3 + $0x298] sm:$0xff]
    %v156 = vld [vmem:[%s3 + $0x2a0] sm:$0xff]
    %v157 = vld [vmem:[%s3 + $0x2a8] sm:$0xff]
    %v158 = vld [vmem:[%s3 + $0x2b0] sm:$0xff]
    %v159 = vld [vmem:[%s3 + $0x2b8] sm:$0xff]
    %v160 = vld [vmem:[%s3 + $0x2c0] sm:$0xff]
    %v161 = vld [vmem:[%s3 + $0x2c8] sm:$0xff]
    %v162 = vld [vmem:[%s3 + $0x2d0] sm:$0xff]
    %v163 = vld [vmem:[%s3 + $0x2d8] sm:$0xff]
    %v164 = vld [vmem:[%s3 + $0x2e0] sm:$0xff]
    %v165 = vld [vmem:[%s3 + $0x2e8] sm:$0xff]
    %v166 = vld [vmem:[%s3 + $0x2f0] sm:$0xff]
    %v167 = vld [vmem:[%s3 + $0x2f8] sm:$0xff]
    %v168 = vld [vmem:[%s3 + $0x300] sm:$0xff]
    %v169 = vld [vmem:[%s3 + $0x308] sm:$0xff]
    %v170 = vld [vmem:[%s3 + $0x310] sm:$0xff]
    %v171 = vld [vmem:[%s3 + $0x318] sm:$0xff]
    %v172 = vld [vmem:[%s3 + $0x320] sm:$0xff]
    %v173 = vld [vmem:[%s3 + $0x328] sm:$0xff]
    %v174 = vld [vmem:[%s3 + $0x330] sm:$0xff]
    %v175 = vld [vmem:[%s3 + $0x338] sm:$0xff]
    %v176 = vld [vmem:[%s3 + $0x340] sm:$0xff]
    %v177 = vld [vmem:[%s3 + $0x348] sm:$0xff]
    %v178 = vld [vmem:[%s3 + $0x350] sm:$0xff]
    %v179 = vld [vmem:[%s3 + $0x358] sm:$0xff]
    %v180 = vld [vmem:[%s3 + $0x360] sm:$0xff]
    %v181 = vld [vmem:[%s3 + $0x368] sm:$0xff]
    %v182 = vld [vmem:[%s3 + $0x370] sm:$0xff]
    %v183 = vld [vmem:[%s3 + $0x378] sm:$0xff]
    %v184 = vld [vmem:[%s3 + $0x380] sm:$0xff]
    %v185 = vld [vmem:[%s3 + $0x388] sm:$0xff]
    %v186 = vld [vmem:[%s3 + $0x390] sm:$0xff]
    %v187 = vld [vmem:[%s3 + $0x398] sm:$0xff]
    %v188 = vld [vmem:[%s3 + $0x3a0] sm:$0xff]
    %v189 = vld [vmem:[%s3 + $0x3a8] sm:$0xff]
    %v190 = vld [vmem:[%s3 + $0x3b0] sm:$0xff]
    %v191 = vld [vmem:[%s3 + $0x3b8] sm:$0xff]
    %v192 = vld [vmem:[%s3 + $0x3c0] sm:$0xff]
    %v193 = vld [vmem:[%s3 + $0x3c8] sm:$0xff]
    %v194 = vld [vmem:[%s3 + $0x3d0] sm:$0xff]
    %v195 = vld [vmem:[%s3 + $0x3d8] sm:$0xff]
    %v196 = vld [vmem:[%s3 + $0x3e0] sm:$0xff]
    %v197 = vld [vmem:[%s3 + $0x3e8] sm:$0xff]
    %v198 = vld [vmem:[%s3 + $0x3f0] sm:$0xff]
    %v199 = vld [vmem:[%s3 + $0x3f8] sm:$0xff]
    %v200 = vld [vmem:[%s3 + $0x400] sm:$0xff]
    %v201 = vld [vmem:[%s3 + $0x408] sm:$0xff]
    %v202 = vld [vmem:[%s3 + $0x410] sm:$0xff]
    %v203 = vld [vmem:[%s3 + $0x418] sm:$0xff]
    %v204 = vld [vmem:[%s3 + $0x420] sm:$0xff]
    %v205 = vld [vmem:[%s3 + $0x428] sm:$0xff]
    %v206 = vld [vmem:[%s3 + $0x430] sm:$0xff]
    %v207 = vld [vmem:[%s3 + $0x438] sm:$0xff]
    %v208 = vld [vmem:[%s3 + $0x440] sm:$0xff]
    %v209 = vld [vmem:[%s3 + $0x448] sm:$0xff]
    %v210 = vld [vmem:[%s3 + $0x450] sm:$0xff]
    %v211 = vld [vmem:[%s3 + $0x458] sm:$0xff]
    %v212 = vld [vmem:[%s3 + $0x460] sm:$0xff]
    %v213 = vld [vmem:[%s3 + $0x468] sm:$0xff]
    %v214 = vld [vmem:[%s3 + $0x470] sm:$0xff]
    %v215 = vld [vmem:[%s3 + $0x478] sm:$0xff]
    %v216 = vld [vmem:[%s3 + $0x480] sm:$0xff]
    %v217 = vld [vmem:[%s3 + $0x488] sm:$0xff]
    %v218 = vld [vmem:[%s3 + $0x490] sm:$0xff]
    %v219 = vld [vmem:[%s3 + $0x498] sm:$0xff]
    %v220 = vld [vmem:[%s3 + $0x4a0] sm:$0xff]
    %v221 = vld [vmem:[%s3 + $0x4a8] sm:$0xff]
    %v222 = vld [vmem:[%s3 + $0x4b0] sm:$0xff]
    %v223 = vld [vmem:[%s3 + $0x4b8] sm:$0xff]
    %v224 = vld [vmem:[%s3 + $0x4c0] sm:$0xff]
    %v225 = vld [vmem:[%s3 + $0x4c8] sm:$0xff]
    %v226 = vld [vmem:[%s3 + $0x4d0] sm:$0xff]
    %v227 = vld [vmem:[%s3 + $0x4d8] sm:$0xff]
    %v228 = vld [vmem:[%s3 + $0x4e0] sm:$0xff]
    %v229 = vld [vmem:[%s3 + $0x4e8] sm:$0xff]
    %v230 = vld [vmem:[%s3 + $0x4f0] sm:$0xff]
    %v231 = vld [vmem:[%s3 + $0x4f8] sm:$0xff]
    %v232 = vld [vmem:[%s3 + $0x500] sm:$0xff]
    %v233 = vld [vmem:[%s3 + $0x508] sm:$0xff]
    %v234 = vld [vmem:[%s3 + $0x510] sm:$0xff]
    %v235 = vld [vmem:[%s3 + $0x518] sm:$0xff]
    %v236 = vld [vmem:[%s3 + $0x520] sm:$0xff]
    %v237 = vld [vmem:[%s3 + $0x528] sm:$0xff]
    %v238 = vld [vmem:[%s3 + $0x530] sm:$0xff]
    %v239 = vld [vmem:[%s3 + $0x538] sm:$0xff]
    %v240 = vld [vmem:[%s3 + $0x540] sm:$0xff]
    %v241 = vld [vmem:[%s3 + $0x548] sm:$0xff]
    %v242 = vld [vmem:[%s3 + $0x550] sm:$0xff]
    %v243 = vld [vmem:[%s3 + $0x558] sm:$0xff]
    %v244 = vld [vmem:[%s3 + $0x560] sm:$0xff]
    %v245 = vld [vmem:[%s3 + $0x568] sm:$0xff]
    %v246 = vld [vmem:[%s3 + $0x570] sm:$0xff]
    %v247 = vld [vmem:[%s3 + $0x578] sm:$0xff]
    %v248 = vld [vmem:[%s3 + $0x580] sm:$0xff]
    %v249 = vld [vmem:[%s3 + $0x588] sm:$0xff]
    %v250 = vld [vmem:[%s3 + $0x590] sm:$0xff]
    %v251 = vld [vmem:[%s3 + $0x598] sm:$0xff]
    %v252 = vld [vmem:[%s3 + $0x5a0] sm:$0xff]
    %v253 = vld [vmem:[%s3 + $0x5a8] sm:$0xff]
    %v254 = vld [vmem:[%s3 + $0x5b0] sm:$0xff]
    %v255 = vld [vmem:[%s3 + $0x5b8] sm:$0xff]
    %v256 = vld [vmem:[%s3 + $0x5c0] sm:$0xff]
    %v257 = vld [vmem:[%s3 + $0x5c8] sm:$0xff]
    %v258 = vld [vmem:[%s3 + $0x5d0] sm:$0xff]
    %v259 = vld [vmem:[%s3 + $0x5d8] sm:$0xff]
    %v260 = vld [vmem:[%s3 + $0x5e0] sm:$0xff]
    %v261 = vld [vmem:[%s3 + $0x5e8] sm:$0xff]
    %v262 = vld [vmem:[%s3 + $0x5f0] sm:$0xff]
    %v263 = vld [vmem:[%s3 + $0x5f8] sm:$0xff]
    %v264 = vld [vmem:[%s3 + $0x600] sm:$0xff]
    %v265 = vld [vmem:[%s3 + $0x608] sm:$0xff]
    %v266 = vld [vmem:[%s3 + $0x610] sm:$0xff]
    %v267 = vld [vmem:[%s3 + $0x618] sm:$0xff]
    %v268 = vld [vmem:[%s4] sm:$0xf]
    %v270 = vlaneseq
    %v271 = vshrl.u32 %v270, 7
    %v272 = vsub.s32 0, %v271
    %v273 = vrot.slane %v268, %v272
    %v274 = vlaneseq
    %v275 = vshrl.u32 %v274, 7
    %v276 = vsub.s32 1, %v275
    %v277 = vrot.slane %v268, %v276
    %v278 = vlaneseq
    %v279 = vshrl.u32 %v278, 7
    %v280 = vsub.s32 2, %v279
    %v281 = vrot.slane %v268, %v280
    %v282 = vlaneseq
    %v283 = vshrl.u32 %v282, 7
    %v284 = vsub.s32 3, %v283
    %v285 = vrot.slane %v268, %v284
    %v294 = vunpack.c.l.b16 %v68
    %v295 = vunpack.c.h.b16 %v68
    %v296 = vunpack.c.l.b16 %v69
    %v297 = vunpack.c.h.b16 %v69
    %v298 = vunpack.c.l.b16 %v70
    %v299 = vunpack.c.h.b16 %v70
    %v300 = vunpack.c.l.b16 %v71
    %v301 = vpack.c.b16 %v294, %v294
    %v302 = vpack.c.b16 %v295, %v295
    %v303 = vpack.c.b16 %v296, %v296
    %v304 = vpack.c.b16 %v297, %v297
    %v305 = vpack.c.b16 %v298, %v298
    %v306 = vpack.c.b16 %v299, %v299
    %v307 = vpack.c.b16 %v300, %v300
    %v510 = vunpack.c.l.b16 %v72
    %v511 = vunpack.c.h.b16 %v72
    %v512 = vunpack.c.l.b16 %v73
    %v513 = vunpack.c.h.b16 %v73
    %v514 = vunpack.c.l.b16 %v74
    %v515 = vunpack.c.h.b16 %v74
    %v516 = vunpack.c.l.b16 %v75
    %v517 = vunpack.c.h.b16 %v75
    %v518 = vunpack.c.l.b16 %v76
    %v519 = vunpack.c.h.b16 %v76
    %v520 = vunpack.c.l.b16 %v77
    %v521 = vunpack.c.h.b16 %v77
    %v522 = vunpack.c.l.b16 %v78
    %v523 = vunpack.c.h.b16 %v78
    %v524 = vunpack.c.l.b16 %v79
    %v525 = vunpack.c.h.b16 %v79
    %v526 = vunpack.c.l.b16 %v80
    %v527 = vunpack.c.h.b16 %v80
    %v528 = vunpack.c.l.b16 %v81
    %v529 = vunpack.c.h.b16 %v81
    %v530 = vunpack.c.l.b16 %v82
    %v531 = vunpack.c.h.b16 %v82
    %v532 = vunpack.c.l.b16 %v83
    %v533 = vunpack.c.h.b16 %v83
    %v534 = vunpack.c.l.b16 %v84
    %v535 = vunpack.c.h.b16 %v84
    %v536 = vunpack.c.l.b16 %v85
    %v537 = vunpack.c.h.b16 %v85
    %v538 = vunpack.c.l.b16 %v86
    %v539 = vunpack.c.h.b16 %v86
    %v540 = vunpack.c.l.b16 %v87
    %v541 = vunpack.c.h.b16 %v87
    %v542 = vunpack.c.l.b16 %v88
    %v543 = vunpack.c.h.b16 %v88
    %v544 = vunpack.c.l.b16 %v89
    %v545 = vunpack.c.h.b16 %v89
    %v546 = vunpack.c.l.b16 %v90
    %v547 = vunpack.c.h.b16 %v90
    %v548 = vunpack.c.l.b16 %v91
    %v549 = vunpack.c.h.b16 %v91
    %v550 = vunpack.c.l.b16 %v92
    %v551 = vunpack.c.h.b16 %v92
    %v552 = vunpack.c.l.b16 %v93
    %v553 = vunpack.c.h.b16 %v93
    %v554 = vunpack.c.l.b16 %v94
    %v555 = vunpack.c.h.b16 %v94
    %v556 = vunpack.c.l.b16 %v95
    %v557 = vunpack.c.h.b16 %v95
    %v558 = vunpack.c.l.b16 %v96
    %v559 = vunpack.c.h.b16 %v96
    %v560 = vunpack.c.l.b16 %v97
    %v561 = vunpack.c.h.b16 %v97
    %v562 = vunpack.c.l.b16 %v98
    %v563 = vunpack.c.h.b16 %v98
    %v564 = vunpack.c.l.b16 %v99
    %v565 = vunpack.c.h.b16 %v99
    %v566 = vunpack.c.l.b16 %v100
    %v567 = vunpack.c.h.b16 %v100
    %v568 = vunpack.c.l.b16 %v101
    %v569 = vunpack.c.h.b16 %v101
    %v570 = vunpack.c.l.b16 %v102
    %v571 = vunpack.c.h.b16 %v102
    %v572 = vunpack.c.l.b16 %v103
    %v573 = vunpack.c.h.b16 %v103
    %v574 = vunpack.c.l.b16 %v104
    %v575 = vunpack.c.h.b16 %v104
    %v576 = vunpack.c.l.b16 %v105
    %v577 = vunpack.c.h.b16 %v105
    %v578 = vunpack.c.l.b16 %v106
    %v579 = vunpack.c.h.b16 %v106
    %v580 = vunpack.c.l.b16 %v107
    %v581 = vunpack.c.h.b16 %v107
    %v582 = vunpack.c.l.b16 %v108
    %v583 = vunpack.c.h.b16 %v108
    %v584 = vunpack.c.l.b16 %v109
    %v585 = vunpack.c.h.b16 %v109
    %v586 = vunpack.c.l.b16 %v110
    %v587 = vunpack.c.h.b16 %v110
    %v588 = vunpack.c.l.b16 %v111
    %v589 = vunpack.c.h.b16 %v111
    %v590 = vunpack.c.l.b16 %v112
    %v591 = vunpack.c.h.b16 %v112
    %v592 = vunpack.c.l.b16 %v113
    %v593 = vunpack.c.h.b16 %v113
    %v594 = vunpack.c.l.b16 %v114
    %v595 = vunpack.c.h.b16 %v114
    %v596 = vunpack.c.l.b16 %v115
    %v597 = vunpack.c.h.b16 %v115
    %v598 = vunpack.c.l.b16 %v116
    %v599 = vunpack.c.h.b16 %v116
    %v600 = vunpack.c.l.b16 %v117
    %v601 = vunpack.c.h.b16 %v117
    %v602 = vunpack.c.l.b16 %v118
    %v603 = vunpack.c.h.b16 %v118
    %v604 = vunpack.c.l.b16 %v119
    %v605 = vunpack.c.h.b16 %v119
    %v606 = vunpack.c.l.b16 %v120
    %v607 = vunpack.c.h.b16 %v120
    %v608 = vunpack.c.l.b16 %v121
    %v609 = vunpack.c.h.b16 %v121
    %v610 = vunpack.c.l.b16 %v122
    %v611 = vunpack.c.h.b16 %v122
    %v612 = vunpack.c.l.b16 %v123
    %v613 = vunpack.c.h.b16 %v123
    %v614 = vunpack.c.l.b16 %v124
    %v615 = vunpack.c.h.b16 %v124
    %v616 = vunpack.c.l.b16 %v125
    %v617 = vunpack.c.h.b16 %v125
    %v618 = vunpack.c.l.b16 %v126
    %v619 = vunpack.c.h.b16 %v126
    %v620 = vunpack.c.l.b16 %v127
    %v621 = vunpack.c.h.b16 %v127
    %v622 = vunpack.c.l.b16 %v128
    %v623 = vunpack.c.h.b16 %v128
    %v624 = vunpack.c.l.b16 %v129
    %v625 = vunpack.c.h.b16 %v129
    %v626 = vunpack.c.l.b16 %v130
    %v627 = vunpack.c.h.b16 %v130
    %v628 = vunpack.c.l.b16 %v131
    %v629 = vunpack.c.h.b16 %v131
    %v630 = vunpack.c.l.b16 %v132
    %v631 = vunpack.c.h.b16 %v132
    %v632 = vunpack.c.l.b16 %v133
    %v633 = vunpack.c.h.b16 %v133
    %v634 = vunpack.c.l.b16 %v134
    %v635 = vunpack.c.h.b16 %v134
    %v636 = vunpack.c.l.b16 %v135
    %v637 = vunpack.c.h.b16 %v135
    %v638 = vunpack.c.l.b16 %v136
    %v639 = vunpack.c.h.b16 %v136
    %v640 = vunpack.c.l.b16 %v137
    %v641 = vunpack.c.h.b16 %v137
    %v642 = vunpack.c.l.b16 %v138
    %v643 = vunpack.c.h.b16 %v138
    %v644 = vunpack.c.l.b16 %v139
    %v645 = vunpack.c.h.b16 %v139
    %v646 = vunpack.c.l.b16 %v140
    %v647 = vunpack.c.h.b16 %v140
    %v648 = vunpack.c.l.b16 %v141
    %v649 = vunpack.c.h.b16 %v141
    %v650 = vunpack.c.l.b16 %v142
    %v651 = vunpack.c.h.b16 %v142
    %v652 = vunpack.c.l.b16 %v143
    %v653 = vunpack.c.h.b16 %v143
    %v654 = vunpack.c.l.b16 %v144
    %v655 = vunpack.c.h.b16 %v144
    %v656 = vunpack.c.l.b16 %v145
    %v657 = vunpack.c.h.b16 %v145
    %v658 = vunpack.c.l.b16 %v146
    %v659 = vunpack.c.h.b16 %v146
    %v660 = vunpack.c.l.b16 %v147
    %v661 = vunpack.c.h.b16 %v147
    %v662 = vunpack.c.l.b16 %v148
    %v663 = vunpack.c.h.b16 %v148
    %v664 = vunpack.c.l.b16 %v149
    %v665 = vunpack.c.h.b16 %v149
    %v666 = vunpack.c.l.b16 %v150
    %v667 = vunpack.c.h.b16 %v150
    %v668 = vunpack.c.l.b16 %v151
    %v669 = vunpack.c.h.b16 %v151
    %v670 = vunpack.c.l.b16 %v152
    %v671 = vunpack.c.h.b16 %v152
    %v672 = vunpack.c.l.b16 %v153
    %v673 = vunpack.c.h.b16 %v153
    %v674 = vunpack.c.l.b16 %v154
    %v675 = vunpack.c.h.b16 %v154
    %v676 = vunpack.c.l.b16 %v155
    %v677 = vunpack.c.h.b16 %v155
    %v678 = vunpack.c.l.b16 %v156
    %v679 = vunpack.c.h.b16 %v156
    %v680 = vunpack.c.l.b16 %v157
    %v681 = vunpack.c.h.b16 %v157
    %v682 = vunpack.c.l.b16 %v158
    %v683 = vunpack.c.h.b16 %v158
    %v684 = vunpack.c.l.b16 %v159
    %v685 = vunpack.c.h.b16 %v159
    %v686 = vunpack.c.l.b16 %v160
    %v687 = vunpack.c.h.b16 %v160
    %v688 = vunpack.c.l.b16 %v161
    %v689 = vunpack.c.h.b16 %v161
    %v690 = vunpack.c.l.b16 %v162
    %v691 = vunpack.c.h.b16 %v162
    %v692 = vunpack.c.l.b16 %v163
    %v693 = vunpack.c.h.b16 %v163
    %v694 = vunpack.c.l.b16 %v164
    %v695 = vunpack.c.h.b16 %v164
    %v696 = vunpack.c.l.b16 %v165
    %v697 = vunpack.c.h.b16 %v165
    %v698 = vunpack.c.l.b16 %v166
    %v699 = vunpack.c.h.b16 %v166
    %v700 = vunpack.c.l.b16 %v167
    %v701 = vunpack.c.h.b16 %v167
    %v702 = vunpack.c.l.b16 %v168
    %v703 = vunpack.c.h.b16 %v168
    %v704 = vunpack.c.l.b16 %v169
    %v705 = vunpack.c.h.b16 %v169
    %v706 = vunpack.c.l.b16 %v170
    %v707 = vunpack.c.h.b16 %v170
    %v708 = vunpack.c.l.b16 %v171
    %v709 = vunpack.c.h.b16 %v171
    %v710 = vunpack.c.l.b16 %v172
    %v711 = vunpack.c.h.b16 %v172
    %v712 = vunpack.c.l.b16 %v173
    %v713 = vunpack.c.h.b16 %v173
    %v714 = vunpack.c.l.b16 %v174
    %v715 = vunpack.c.h.b16 %v174
    %v716 = vunpack.c.l.b16 %v175
    %v717 = vunpack.c.h.b16 %v175
    %v718 = vunpack.c.l.b16 %v176
    %v719 = vunpack.c.h.b16 %v176
    %v720 = vunpack.c.l.b16 %v177
    %v721 = vunpack.c.h.b16 %v177
    %v722 = vunpack.c.l.b16 %v178
    %v723 = vunpack.c.h.b16 %v178
    %v724 = vunpack.c.l.b16 %v179
    %v725 = vunpack.c.h.b16 %v179
    %v726 = vunpack.c.l.b16 %v180
    %v727 = vunpack.c.h.b16 %v180
    %v728 = vunpack.c.l.b16 %v181
    %v729 = vunpack.c.h.b16 %v181
    %v730 = vunpack.c.l.b16 %v182
    %v731 = vunpack.c.h.b16 %v182
    %v732 = vunpack.c.l.b16 %v183
    %v733 = vunpack.c.h.b16 %v183
    %v734 = vunpack.c.l.b16 %v184
    %v735 = vunpack.c.h.b16 %v184
    %v736 = vunpack.c.l.b16 %v185
    %v737 = vunpack.c.h.b16 %v185
    %v738 = vunpack.c.l.b16 %v186
    %v739 = vunpack.c.h.b16 %v186
    %v740 = vunpack.c.l.b16 %v187
    %v741 = vunpack.c.h.b16 %v187
    %v742 = vunpack.c.l.b16 %v188
    %v743 = vunpack.c.h.b16 %v188
    %v744 = vunpack.c.l.b16 %v189
    %v745 = vunpack.c.h.b16 %v189
    %v746 = vunpack.c.l.b16 %v190
    %v747 = vunpack.c.h.b16 %v190
    %v748 = vunpack.c.l.b16 %v191
    %v749 = vunpack.c.h.b16 %v191
    %v750 = vunpack.c.l.b16 %v192
    %v751 = vunpack.c.h.b16 %v192
    %v752 = vunpack.c.l.b16 %v193
    %v753 = vunpack.c.h.b16 %v193
    %v754 = vunpack.c.l.b16 %v194
    %v755 = vunpack.c.h.b16 %v194
    %v756 = vunpack.c.l.b16 %v195
    %v757 = vunpack.c.h.b16 %v195
    %v758 = vunpack.c.l.b16 %v196
    %v759 = vunpack.c.h.b16 %v196
    %v760 = vunpack.c.l.b16 %v197
    %v761 = vunpack.c.h.b16 %v197
    %v762 = vunpack.c.l.b16 %v198
    %v763 = vunpack.c.h.b16 %v198
    %v764 = vunpack.c.l.b16 %v199
    %v765 = vunpack.c.h.b16 %v199
    %v766 = vunpack.c.l.b16 %v200
    %v767 = vunpack.c.h.b16 %v200
    %v768 = vunpack.c.l.b16 %v201
    %v769 = vunpack.c.h.b16 %v201
    %v770 = vunpack.c.l.b16 %v202
    %v771 = vunpack.c.h.b16 %v202
    %v772 = vunpack.c.l.b16 %v203
    %v773 = vunpack.c.h.b16 %v203
    %v774 = vunpack.c.l.b16 %v204
    %v775 = vunpack.c.h.b16 %v204
    %v776 = vunpack.c.l.b16 %v205
    %v777 = vunpack.c.h.b16 %v205
    %v778 = vunpack.c.l.b16 %v206
    %v779 = vunpack.c.h.b16 %v206
    %v780 = vunpack.c.l.b16 %v207
    %v781 = vunpack.c.h.b16 %v207
    %v782 = vunpack.c.l.b16 %v208
    %v783 = vunpack.c.h.b16 %v208
    %v784 = vunpack.c.l.b16 %v209
    %v785 = vunpack.c.h.b16 %v209
    %v786 = vunpack.c.l.b16 %v210
    %v787 = vunpack.c.h.b16 %v210
    %v788 = vunpack.c.l.b16 %v211
    %v789 = vunpack.c.h.b16 %v211
    %v790 = vunpack.c.l.b16 %v212
    %v791 = vunpack.c.h.b16 %v212
    %v792 = vunpack.c.l.b16 %v213
    %v793 = vunpack.c.h.b16 %v213
    %v794 = vunpack.c.l.b16 %v214
    %v795 = vunpack.c.h.b16 %v214
    %v796 = vunpack.c.l.b16 %v215
    %v797 = vunpack.c.h.b16 %v215
    %v798 = vunpack.c.l.b16 %v216
    %v799 = vunpack.c.h.b16 %v216
    %v800 = vunpack.c.l.b16 %v217
    %v801 = vunpack.c.h.b16 %v217
    %v802 = vunpack.c.l.b16 %v218
    %v803 = vunpack.c.h.b16 %v218
    %v804 = vunpack.c.l.b16 %v219
    %v805 = vunpack.c.h.b16 %v219
    %v806 = vunpack.c.l.b16 %v220
    %v807 = vunpack.c.h.b16 %v220
    %v808 = vunpack.c.l.b16 %v221
    %v809 = vunpack.c.h.b16 %v221
    %v810 = vunpack.c.l.b16 %v222
    %v811 = vunpack.c.h.b16 %v222
    %v812 = vunpack.c.l.b16 %v223
    %v813 = vunpack.c.h.b16 %v223
    %v814 = vunpack.c.l.b16 %v224
    %v815 = vunpack.c.h.b16 %v224
    %v816 = vunpack.c.l.b16 %v225
    %v817 = vunpack.c.h.b16 %v225
    %v818 = vunpack.c.l.b16 %v226
    %v819 = vunpack.c.h.b16 %v226
    %v820 = vunpack.c.l.b16 %v227
    %v821 = vunpack.c.h.b16 %v227
    %v822 = vunpack.c.l.b16 %v228
    %v823 = vunpack.c.h.b16 %v228
    %v824 = vunpack.c.l.b16 %v229
    %v825 = vunpack.c.h.b16 %v229
    %v826 = vunpack.c.l.b16 %v230
    %v827 = vunpack.c.h.b16 %v230
    %v828 = vunpack.c.l.b16 %v231
    %v829 = vunpack.c.h.b16 %v231
    %v830 = vunpack.c.l.b16 %v232
    %v831 = vunpack.c.h.b16 %v232
    %v832 = vunpack.c.l.b16 %v233
    %v833 = vunpack.c.h.b16 %v233
    %v834 = vunpack.c.l.b16 %v234
    %v835 = vunpack.c.h.b16 %v234
    %v836 = vunpack.c.l.b16 %v235
    %v837 = vunpack.c.h.b16 %v235
    %v838 = vunpack.c.l.b16 %v236
    %v839 = vunpack.c.h.b16 %v236
    %v840 = vunpack.c.l.b16 %v237
    %v841 = vunpack.c.h.b16 %v237
    %v842 = vunpack.c.l.b16 %v238
    %v843 = vunpack.c.h.b16 %v238
    %v844 = vunpack.c.l.b16 %v239
    %v845 = vunpack.c.h.b16 %v239
    %v846 = vunpack.c.l.b16 %v240
    %v847 = vunpack.c.h.b16 %v240
    %v848 = vunpack.c.l.b16 %v241
    %v849 = vunpack.c.h.b16 %v241
    %v850 = vunpack.c.l.b16 %v242
    %v851 = vunpack.c.h.b16 %v242
    %v852 = vunpack.c.l.b16 %v243
    %v853 = vunpack.c.h.b16 %v243
    %v854 = vunpack.c.l.b16 %v244
    %v855 = vunpack.c.h.b16 %v244
    %v856 = vunpack.c.l.b16 %v245
    %v857 = vunpack.c.h.b16 %v245
    %v858 = vunpack.c.l.b16 %v246
    %v859 = vunpack.c.h.b16 %v246
    %v860 = vunpack.c.l.b16 %v247
    %v861 = vunpack.c.h.b16 %v247
    %v862 = vunpack.c.l.b16 %v248
    %v863 = vunpack.c.h.b16 %v248
    %v864 = vunpack.c.l.b16 %v249
    %v865 = vunpack.c.h.b16 %v249
    %v866 = vunpack.c.l.b16 %v250
    %v867 = vunpack.c.h.b16 %v250
    %v868 = vunpack.c.l.b16 %v251
    %v869 = vunpack.c.h.b16 %v251
    %v870 = vunpack.c.l.b16 %v252
    %v871 = vunpack.c.h.b16 %v252
    %v872 = vunpack.c.l.b16 %v253
    %v873 = vunpack.c.h.b16 %v253
    %v874 = vunpack.c.l.b16 %v254
    %v875 = vunpack.c.h.b16 %v254
    %v876 = vunpack.c.l.b16 %v255
    %v877 = vunpack.c.h.b16 %v255
    %v878 = vunpack.c.l.b16 %v256
    %v879 = vunpack.c.h.b16 %v256
    %v880 = vunpack.c.l.b16 %v257
    %v881 = vunpack.c.h.b16 %v257
    %v882 = vunpack.c.l.b16 %v258
    %v883 = vunpack.c.h.b16 %v258
    %v884 = vunpack.c.l.b16 %v259
    %v885 = vunpack.c.h.b16 %v259
    %v886 = vunpack.c.l.b16 %v260
    %v887 = vunpack.c.h.b16 %v260
    %v888 = vunpack.c.l.b16 %v261
    %v889 = vunpack.c.h.b16 %v261
    %v890 = vunpack.c.l.b16 %v262
    %v891 = vunpack.c.h.b16 %v262
    %v892 = vunpack.c.l.b16 %v263
    %v893 = vunpack.c.h.b16 %v263
    %v894 = vunpack.c.l.b16 %v264
    %v895 = vunpack.c.h.b16 %v264
    %v896 = vunpack.c.l.b16 %v265
    %v897 = vunpack.c.h.b16 %v265
    %v898 = vunpack.c.l.b16 %v266
    %v899 = vunpack.c.h.b16 %v266
    %v900 = vunpack.c.l.b16 %v267
    %v901 = vunpack.c.h.b16 %v267
    %v902 = vpack.c.b16 %v514, %v510
    %v903 = vpack.c.b16 %v515, %v511
    %v904 = vpack.c.b16 %v516, %v512
    %v905 = vpack.c.b16 %v517, %v513
    %v906 = vpack.c.b16 %v522, %v518
    %v907 = vpack.c.b16 %v523, %v519
    %v908 = vpack.c.b16 %v524, %v520
    %v909 = vpack.c.b16 %v525, %v521
    %v910 = vpack.c.b16 %v530, %v526
    %v911 = vpack.c.b16 %v531, %v527
    %v912 = vpack.c.b16 %v532, %v528
    %v913 = vpack.c.b16 %v533, %v529
    %v914 = vpack.c.b16 %v538, %v534
    %v915 = vpack.c.b16 %v539, %v535
    %v916 = vpack.c.b16 %v540, %v536
    %v917 = vpack.c.b16 %v541, %v537
    %v918 = vpack.c.b16 %v546, %v542
    %v919 = vpack.c.b16 %v547, %v543
    %v920 = vpack.c.b16 %v548, %v544
    %v921 = vpack.c.b16 %v549, %v545
    %v922 = vpack.c.b16 %v554, %v550
    %v923 = vpack.c.b16 %v555, %v551
    %v924 = vpack.c.b16 %v556, %v552
    %v925 = vpack.c.b16 %v557, %v553
    %v926 = vpack.c.b16 %v562, %v558
    %v927 = vpack.c.b16 %v563, %v559
    %v928 = vpack.c.b16 %v564, %v560
    %v929 = vpack.c.b16 %v565, %v561
    %v930 = vpack.c.b16 %v570, %v566
    %v931 = vpack.c.b16 %v571, %v567
    %v932 = vpack.c.b16 %v572, %v568
    %v933 = vpack.c.b16 %v573, %v569
    %v934 = vpack.c.b16 %v578, %v574
    %v935 = vpack.c.b16 %v579, %v575
    %v936 = vpack.c.b16 %v580, %v576
    %v937 = vpack.c.b16 %v581, %v577
    %v938 = vpack.c.b16 %v586, %v582
    %v939 = vpack.c.b16 %v587, %v583
    %v940 = vpack.c.b16 %v588, %v584
    %v941 = vpack.c.b16 %v589, %v585
    %v942 = vpack.c.b16 %v594, %v590
    %v943 = vpack.c.b16 %v595, %v591
    %v944 = vpack.c.b16 %v596, %v592
    %v945 = vpack.c.b16 %v597, %v593
    %v946 = vpack.c.b16 %v602, %v598
    %v947 = vpack.c.b16 %v603, %v599
    %v948 = vpack.c.b16 %v604, %v600
    %v949 = vpack.c.b16 %v605, %v601
    %v950 = vpack.c.b16 %v610, %v606
    %v951 = vpack.c.b16 %v611, %v607
    %v952 = vpack.c.b16 %v612, %v608
    %v953 = vpack.c.b16 %v613, %v609
    %v954 = vpack.c.b16 %v618, %v614
    %v955 = vpack.c.b16 %v619, %v615
    %v956 = vpack.c.b16 %v620, %v616
    %v957 = vpack.c.b16 %v621, %v617
    %v958 = vpack.c.b16 %v626, %v622
    %v959 = vpack.c.b16 %v627, %v623
    %v960 = vpack.c.b16 %v628, %v624
    %v961 = vpack.c.b16 %v629, %v625
    %v962 = vpack.c.b16 %v634, %v630
    %v963 = vpack.c.b16 %v635, %v631
    %v964 = vpack.c.b16 %v636, %v632
    %v965 = vpack.c.b16 %v637, %v633
    %v966 = vpack.c.b16 %v642, %v638
    %v967 = vpack.c.b16 %v643, %v639
    %v968 = vpack.c.b16 %v644, %v640
    %v969 = vpack.c.b16 %v645, %v641
    %v970 = vpack.c.b16 %v650, %v646
    %v971 = vpack.c.b16 %v651, %v647
    %v972 = vpack.c.b16 %v652, %v648
    %v973 = vpack.c.b16 %v653, %v649
    %v974 = vpack.c.b16 %v658, %v654
    %v975 = vpack.c.b16 %v659, %v655
    %v976 = vpack.c.b16 %v660, %v656
    %v977 = vpack.c.b16 %v661, %v657
    %v978 = vpack.c.b16 %v666, %v662
    %v979 = vpack.c.b16 %v667, %v663
    %v980 = vpack.c.b16 %v668, %v664
    %v981 = vpack.c.b16 %v669, %v665
    %v982 = vpack.c.b16 %v674, %v670
    %v983 = vpack.c.b16 %v675, %v671
    %v984 = vpack.c.b16 %v676, %v672
    %v985 = vpack.c.b16 %v677, %v673
    %v986 = vpack.c.b16 %v682, %v678
    %v987 = vpack.c.b16 %v683, %v679
    %v988 = vpack.c.b16 %v684, %v680
    %v989 = vpack.c.b16 %v685, %v681
    %v990 = vpack.c.b16 %v690, %v686
    %v991 = vpack.c.b16 %v691, %v687
    %v992 = vpack.c.b16 %v692, %v688
    %v993 = vpack.c.b16 %v693, %v689
    %v994 = vpack.c.b16 %v698, %v694
    %v995 = vpack.c.b16 %v699, %v695
    %v996 = vpack.c.b16 %v700, %v696
    %v997 = vpack.c.b16 %v701, %v697
    %v998 = vpack.c.b16 %v706, %v702
    %v999 = vpack.c.b16 %v707, %v703
    %v1000 = vpack.c.b16 %v708, %v704
    %v1001 = vpack.c.b16 %v709, %v705
    %v1002 = vpack.c.b16 %v714, %v710
    %v1003 = vpack.c.b16 %v715, %v711
    %v1004 = vpack.c.b16 %v716, %v712
    %v1005 = vpack.c.b16 %v717, %v713
    %v1006 = vpack.c.b16 %v722, %v718
    %v1007 = vpack.c.b16 %v723, %v719
    %v1008 = vpack.c.b16 %v724, %v720
    %v1009 = vpack.c.b16 %v725, %v721
    %v1010 = vpack.c.b16 %v730, %v726
    %v1011 = vpack.c.b16 %v731, %v727
    %v1012 = vpack.c.b16 %v732, %v728
    %v1013 = vpack.c.b16 %v733, %v729
    %v1014 = vpack.c.b16 %v738, %v734
    %v1015 = vpack.c.b16 %v739, %v735
    %v1016 = vpack.c.b16 %v740, %v736
    %v1017 = vpack.c.b16 %v741, %v737
    %v1018 = vpack.c.b16 %v746, %v742
    %v1019 = vpack.c.b16 %v747, %v743
    %v1020 = vpack.c.b16 %v748, %v744
    %v1021 = vpack.c.b16 %v749, %v745
    %v1022 = vpack.c.b16 %v754, %v750
    %v1023 = vpack.c.b16 %v755, %v751
    %v1024 = vpack.c.b16 %v756, %v752
    %v1025 = vpack.c.b16 %v757, %v753
    %v1026 = vpack.c.b16 %v762, %v758
    %v1027 = vpack.c.b16 %v763, %v759
    %v1028 = vpack.c.b16 %v764, %v760
    %v1029 = vpack.c.b16 %v765, %v761
    %v1030 = vpack.c.b16 %v770, %v766
    %v1031 = vpack.c.b16 %v771, %v767
    %v1032 = vpack.c.b16 %v772, %v768
    %v1033 = vpack.c.b16 %v773, %v769
    %v1034 = vpack.c.b16 %v778, %v774
    %v1035 = vpack.c.b16 %v779, %v775
    %v1036 = vpack.c.b16 %v780, %v776
    %v1037 = vpack.c.b16 %v781, %v777
    %v1038 = vpack.c.b16 %v786, %v782
    %v1039 = vpack.c.b16 %v787, %v783
    %v1040 = vpack.c.b16 %v788, %v784
    %v1041 = vpack.c.b16 %v789, %v785
    %v1042 = vpack.c.b16 %v794, %v790
    %v1043 = vpack.c.b16 %v795, %v791
    %v1044 = vpack.c.b16 %v796, %v792
    %v1045 = vpack.c.b16 %v797, %v793
    %v1046 = vpack.c.b16 %v802, %v798
    %v1047 = vpack.c.b16 %v803, %v799
    %v1048 = vpack.c.b16 %v804, %v800
    %v1049 = vpack.c.b16 %v805, %v801
    %v1050 = vpack.c.b16 %v810, %v806
    %v1051 = vpack.c.b16 %v811, %v807
    %v1052 = vpack.c.b16 %v812, %v808
    %v1053 = vpack.c.b16 %v813, %v809
    %v1054 = vpack.c.b16 %v818, %v814
    %v1055 = vpack.c.b16 %v819, %v815
    %v1056 = vpack.c.b16 %v820, %v816
    %v1057 = vpack.c.b16 %v821, %v817
    %v1058 = vpack.c.b16 %v826, %v822
    %v1059 = vpack.c.b16 %v827, %v823
    %v1060 = vpack.c.b16 %v828, %v824
    %v1061 = vpack.c.b16 %v829, %v825
    %v1062 = vpack.c.b16 %v834, %v830
    %v1063 = vpack.c.b16 %v835, %v831
    %v1064 = vpack.c.b16 %v836, %v832
    %v1065 = vpack.c.b16 %v837, %v833
    %v1066 = vpack.c.b16 %v842, %v838
    %v1067 = vpack.c.b16 %v843, %v839
    %v1068 = vpack.c.b16 %v844, %v840
    %v1069 = vpack.c.b16 %v845, %v841
    %v1070 = vpack.c.b16 %v850, %v846
    %v1071 = vpack.c.b16 %v851, %v847
    %v1072 = vpack.c.b16 %v852, %v848
    %v1073 = vpack.c.b16 %v853, %v849
    %v1074 = vpack.c.b16 %v858, %v854
    %v1075 = vpack.c.b16 %v859, %v855
    %v1076 = vpack.c.b16 %v860, %v856
    %v1077 = vpack.c.b16 %v861, %v857
    %v1078 = vpack.c.b16 %v866, %v862
    %v1079 = vpack.c.b16 %v867, %v863
    %v1080 = vpack.c.b16 %v868, %v864
    %v1081 = vpack.c.b16 %v869, %v865
    %v1082 = vpack.c.b16 %v874, %v870
    %v1083 = vpack.c.b16 %v875, %v871
    %v1084 = vpack.c.b16 %v876, %v872
    %v1085 = vpack.c.b16 %v877, %v873
    %v1086 = vpack.c.b16 %v882, %v878
    %v1087 = vpack.c.b16 %v883, %v879
    %v1088 = vpack.c.b16 %v884, %v880
    %v1089 = vpack.c.b16 %v885, %v881
    %v1090 = vpack.c.b16 %v890, %v886
    %v1091 = vpack.c.b16 %v891, %v887
    %v1092 = vpack.c.b16 %v892, %v888
    %v1093 = vpack.c.b16 %v893, %v889
    %v1094 = vpack.c.b16 %v898, %v894
    %v1095 = vpack.c.b16 %v899, %v895
    %v1096 = vpack.c.b16 %v900, %v896
    %v1097 = vpack.c.b16 %v901, %v897
    %vm1294 = vcmask 130048
    %v1296 = vsel %vm1294, %v307, 0
    %1298 = vmatprep.subr.bf16.mxu0 %v903
    %1299 = vmatpush1.bf16.msra.mxu0 %v902
    %1300 = vmatprep.subr.bf16.mxu0 %v907
    %1301 = vmatpush1.bf16.msra.mxu0 %v906
    %1302 = vmatprep.subr.bf16.mxu0 %v911
    %1303 = vmatpush1.bf16.msra.mxu0 %v910
    %1304 = vmatprep.subr.bf16.mxu0 %v915
    %1305 = vmatpush1.bf16.msra.mxu0 %v914
    %1306 = vmatprep.subr.bf16.mxu0 %v919
    %1307 = vmatpush1.bf16.msra.mxu0 %v918
    %1308 = vmatprep.subr.bf16.mxu0 %v923
    %1309 = vmatpush1.bf16.msra.mxu0 %v922
    %1310 = vmatprep.subr.bf16.mxu0 %v927
    %1311 = vmatpush1.bf16.msra.mxu0 %v926
    %1312 = vmatprep.subr.bf16.mxu0 %v931
    %1313 = vmatpush1.bf16.msra.mxu0 %v930
    %1314 = vmatprep.subr.bf16.mxu0 %v935
    %1315 = vmatpush1.bf16.msra.mxu0 %v934
    %1316 = vmatprep.subr.bf16.mxu0 %v939
    %1317 = vmatpush1.bf16.msra.mxu0 %v938
    %1318 = vmatprep.subr.bf16.mxu0 %v943
    %1319 = vmatpush1.bf16.msra.mxu0 %v942
    %1320 = vmatprep.subr.bf16.mxu0 %v947
    %1321 = vmatpush1.bf16.msra.mxu0 %v946
    %1322 = vmatprep.subr.bf16.mxu0 %v951
    %1323 = vmatpush1.bf16.msra.mxu0 %v950
    %1324 = vmatprep.subr.bf16.mxu0 %v955
    %1325 = vmatpush1.bf16.msra.mxu0 %v954
    %1326 = vmatprep.subr.bf16.mxu0 %v959
    %1327 = vmatpush1.bf16.msra.mxu0 %v958
    %1328 = vmatprep.subr.bf16.mxu0 %v963
    %1329 = vmatpush1.bf16.msra.mxu0 %v962
    %1330 = vmatprep.mubr.bf16.mxu0 %v302
    %1331 = vmatmul.mubr.bf16.gmra.mrb[0].mxu0 %v301
    %v1332 = vpop.f32.mrb[0].mxu0
    %v1333 = vadd.f32 %v273, %v1332
    %v1334 = vpop.f32.mrb[0].mxu0
    %v1335 = vadd.f32 %v277, %v1334
    %v1336 = vpop.f32.mrb[0].mxu0
    %v1337 = vpop.f32.mrb[0].mxu0
    %1338 = vdwg.mxu0
    %1339 = vmatprep.subr.bf16.mxu0 %v967
    %1340 = vmatpush1.bf16.msra.mxu0 %v966
    %1341 = vmatprep.subr.bf16.mxu0 %v971
    %1342 = vmatpush1.bf16.msra.mxu0 %v970
    %1343 = vmatprep.subr.bf16.mxu0 %v975
    %1344 = vmatpush1.bf16.msra.mxu0 %v974
    %1345 = vmatprep.subr.bf16.mxu0 %v979
    %1346 = vmatpush1.bf16.msra.mxu0 %v978
    %1347 = vmatprep.subr.bf16.mxu0 %v983
    %1348 = vmatpush1.bf16.msra.mxu0 %v982
    %1349 = vmatprep.subr.bf16.mxu0 %v987
    %1350 = vmatpush1.bf16.msra.mxu0 %v986
    %1351 = vmatprep.subr.bf16.mxu0 %v991
    %1352 = vmatpush1.bf16.msra.mxu0 %v990
    %1353 = vmatprep.subr.bf16.mxu0 %v995
    %1354 = vmatpush1.bf16.msra.mxu0 %v994
    %1355 = vmatprep.subr.bf16.mxu0 %v999
    %1356 = vmatpush1.bf16.msra.mxu0 %v998
    %1357 = vmatprep.subr.bf16.mxu0 %v1003
    %1358 = vmatpush1.bf16.msra.mxu0 %v1002
    %1359 = vmatprep.subr.bf16.mxu0 %v1007
    %1360 = vmatpush1.bf16.msra.mxu0 %v1006
    %1361 = vmatprep.subr.bf16.mxu0 %v1011
    %1362 = vmatpush1.bf16.msra.mxu0 %v1010
    %1363 = vmatprep.subr.bf16.mxu0 %v1015
    %1364 = vmatpush1.bf16.msra.mxu0 %v1014
    %1365 = vmatprep.subr.bf16.mxu0 %v1019
    %1366 = vmatpush1.bf16.msra.mxu0 %v1018
    %1367 = vmatprep.subr.bf16.mxu0 %v1023
    %1368 = vmatpush1.bf16.msra.mxu0 %v1022
    %1369 = vmatprep.subr.bf16.mxu0 %v1027
    %1370 = vmatpush1.bf16.msra.mxu0 %v1026
    %1371 = vmatprep.mubr.bf16.mxu0 %v304
    %1372 = vmatmul.mubr.bf16.gmra.mrb[0].mxu0 %v303
    %v1373 = vpop.f32.mrb[0].mxu0
    %v1374 = vadd.f32 %v1333, %v1373
    %v1375 = vpop.f32.mrb[0].mxu0
    %v1376 = vadd.f32 %v1335, %v1375
    %v1377 = vpop.f32.mrb[0].mxu0
    %v1378 = vpop.f32.mrb[0].mxu0
    %1379 = vdwg.mxu0
    %1380 = vmatprep.subr.bf16.mxu0 %v1031
    %1381 = vmatpush1.bf16.msra.mxu0 %v1030
    %1382 = vmatprep.subr.bf16.mxu0 %v1035
    %1383 = vmatpush1.bf16.msra.mxu0 %v1034
    %1384 = vmatprep.subr.bf16.mxu0 %v1039
    %1385 = vmatpush1.bf16.msra.mxu0 %v1038
    %1386 = vmatprep.subr.bf16.mxu0 %v1043
    %1387 = vmatpush1.bf16.msra.mxu0 %v1042
    %1388 = vmatprep.subr.bf16.mxu0 %v1047
    %1389 = vmatpush1.bf16.msra.mxu0 %v1046
    %1390 = vmatprep.subr.bf16.mxu0 %v1051
    %1391 = vmatpush1.bf16.msra.mxu0 %v1050
    %1392 = vmatprep.subr.bf16.mxu0 %v1055
    %1393 = vmatpush1.bf16.msra.mxu0 %v1054
    %1394 = vmatprep.subr.bf16.mxu0 %v1059
    %1395 = vmatpush1.bf16.msra.mxu0 %v1058
    %1396 = vmatprep.subr.bf16.mxu0 %v1063
    %1397 = vmatpush1.bf16.msra.mxu0 %v1062
    %1398 = vmatprep.subr.bf16.mxu0 %v1067
    %1399 = vmatpush1.bf16.msra.mxu0 %v1066
    %1400 = vmatprep.subr.bf16.mxu0 %v1071
    %1401 = vmatpush1.bf16.msra.mxu0 %v1070
    %1402 = vmatprep.subr.bf16.mxu0 %v1075
    %1403 = vmatpush1.bf16.msra.mxu0 %v1074
    %1404 = vmatprep.subr.bf16.mxu0 %v1079
    %1405 = vmatpush1.bf16.msra.mxu0 %v1078
    %1406 = vmatprep.subr.bf16.mxu0 %v1083
    %1407 = vmatpush1.bf16.msra.mxu0 %v1082
    %1408 = vmatprep.subr.bf16.mxu0 %v1087
    %1409 = vmatpush1.bf16.msra.mxu0 %v1086
    %1410 = vmatprep.subr.bf16.mxu0 %v1091
    %1411 = vmatpush1.bf16.msra.mxu0 %v1090
    %1412 = vmatprep.mubr.bf16.mxu0 %v306
    %1413 = vmatmul.mubr.bf16.gmra.mrb[0].mxu0 %v305
    %v1414 = vpop.f32.mrb[0].mxu0
    %v1415 = vadd.f32 %v1374, %v1414
    %v1416 = vpop.f32.mrb[0].mxu0
    %v1417 = vadd.f32 %v1376, %v1416
    %v1418 = vpop.f32.mrb[0].mxu0
    %v1419 = vpop.f32.mrb[0].mxu0
    %1420 = vdwg.mxu0
    %1421 = vmatprep.subr.bf16.mxu0 %v1095
    %1422 = vmatpush1.bf16.msra.mxu0 %v1094
    %1423 = vmatprep.subr.bf16.mxu0 0
    %1424 = vmatpush1.bf16.msra.mxu0 0
    %1425 = vmatprep.subr.bf16.mxu0 0
    %1426 = vmatpush1.bf16.msra.mxu0 0
    %1427 = vmatprep.subr.bf16.mxu0 0
    %1428 = vmatpush1.bf16.msra.mxu0 0
    %1429 = vmatprep.subr.bf16.mxu0 0
    %1430 = vmatpush1.bf16.msra.mxu0 0
    %1431 = vmatprep.subr.bf16.mxu0 0
    %1432 = vmatpush1.bf16.msra.mxu0 0
    %1433 = vmatprep.subr.bf16.mxu0 0
    %1434 = vmatpush1.bf16.msra.mxu0 0
    %1435 = vmatprep.subr.bf16.mxu0 0
    %1436 = vmatpush1.bf16.msra.mxu0 0
    %1437 = vmatprep.subr.bf16.mxu0 0
    %1438 = vmatpush1.bf16.msra.mxu0 0
    %1439 = vmatprep.subr.bf16.mxu0 0
    %1440 = vmatpush1.bf16.msra.mxu0 0
    %1441 = vmatprep.subr.bf16.mxu0 0
    %1442 = vmatpush1.bf16.msra.mxu0 0
    %1443 = vmatprep.subr.bf16.mxu0 0
    %1444 = vmatpush1.bf16.msra.mxu0 0
    %1445 = vmatprep.subr.bf16.mxu0 0
    %1446 = vmatpush1.bf16.msra.mxu0 0
    %1447 = vmatprep.subr.bf16.mxu0 0
    %1448 = vmatpush1.bf16.msra.mxu0 0
    %1449 = vmatprep.subr.bf16.mxu0 0
    %1450 = vmatpush1.bf16.msra.mxu0 0
    %1451 = vmatprep.subr.bf16.mxu0 0
    %1452 = vmatpush1.bf16.msra.mxu0 0
    %1453 = vmatprep.mubr.bf16.mxu0 0
    %1454 = vmatmul.mubr.bf16.gmra.mrb[0].mxu0 %v1296
    %v1455 = vpop.f32.mrb[0].mxu0
    %v1456 = vadd.f32 %v1415, %v1455
    %v1457 = vpop.f32.mrb[0].mxu0
    %v1458 = vadd.f32 %v1417, %v1457
    %v1459 = vpop.f32.mrb[0].mxu0
    %v1460 = vpop.f32.mrb[0].mxu0
    %1461 = vdwg.mxu0
    %1462 = vmatprep.subr.bf16.mxu0 %v905
    %1463 = vmatpush1.bf16.msra.mxu0 %v904
    %1464 = vmatprep.subr.bf16.mxu0 %v909
    %1465 = vmatpush1.bf16.msra.mxu0 %v908
    %1466 = vmatprep.subr.bf16.mxu0 %v913
    %1467 = vmatpush1.bf16.msra.mxu0 %v912
    %1468 = vmatprep.subr.bf16.mxu0 %v917
    %1469 = vmatpush1.bf16.msra.mxu0 %v916
    %1470 = vmatprep.subr.bf16.mxu0 %v921
    %1471 = vmatpush1.bf16.msra.mxu0 %v920
    %1472 = vmatprep.subr.bf16.mxu0 %v925
    %1473 = vmatpush1.bf16.msra.mxu0 %v924
    %1474 = vmatprep.subr.bf16.mxu0 %v929
    %1475 = vmatpush1.bf16.msra.mxu0 %v928
    %1476 = vmatprep.subr.bf16.mxu0 %v933
    %1477 = vmatpush1.bf16.msra.mxu0 %v932
    %1478 = vmatprep.subr.bf16.mxu0 %v937
    %1479 = vmatpush1.bf16.msra.mxu0 %v936
    %1480 = vmatprep.subr.bf16.mxu0 %v941
    %1481 = vmatpush1.bf16.msra.mxu0 %v940
    %1482 = vmatprep.subr.bf16.mxu0 %v945
    %1483 = vmatpush1.bf16.msra.mxu0 %v944
    %1484 = vmatprep.subr.bf16.mxu0 %v949
    %1485 = vmatpush1.bf16.msra.mxu0 %v948
    %1486 = vmatprep.subr.bf16.mxu0 %v953
    %1487 = vmatpush1.bf16.msra.mxu0 %v952
    %1488 = vmatprep.subr.bf16.mxu0 %v957
    %1489 = vmatpush1.bf16.msra.mxu0 %v956
    %1490 = vmatprep.subr.bf16.mxu0 %v961
    %1491 = vmatpush1.bf16.msra.mxu0 %v960
    %1492 = vmatprep.subr.bf16.mxu0 %v965
    %1493 = vmatpush1.bf16.msra.mxu0 %v964
    %1494 = vmatprep.mubr.bf16.mxu0 %v302
    %1495 = vmatmul.mubr.bf16.gmra.mrb[0].mxu0 %v301
    %v1496 = vpop.f32.mrb[0].mxu0
    %v1497 = vadd.f32 %v281, %v1496
    %v1498 = vpop.f32.mrb[0].mxu0
    %v1499 = vadd.f32 %v285, %v1498
    %v1500 = vpop.f32.mrb[0].mxu0
    %v1501 = vpop.f32.mrb[0].mxu0
    %1502 = vdwg.mxu0
    %1503 = vmatprep.subr.bf16.mxu0 %v969
    %1504 = vmatpush1.bf16.msra.mxu0 %v968
    %1505 = vmatprep.subr.bf16.mxu0 %v973
    %1506 = vmatpush1.bf16.msra.mxu0 %v972
    %1507 = vmatprep.subr.bf16.mxu0 %v977
    %1508 = vmatpush1.bf16.msra.mxu0 %v976
    %1509 = vmatprep.subr.bf16.mxu0 %v981
    %1510 = vmatpush1.bf16.msra.mxu0 %v980
    %1511 = vmatprep.subr.bf16.mxu0 %v985
    %1512 = vmatpush1.bf16.msra.mxu0 %v984
    %1513 = vmatprep.subr.bf16.mxu0 %v989
    %1514 = vmatpush1.bf16.msra.mxu0 %v988
    %1515 = vmatprep.subr.bf16.mxu0 %v993
    %1516 = vmatpush1.bf16.msra.mxu0 %v992
    %1517 = vmatprep.subr.bf16.mxu0 %v997
    %1518 = vmatpush1.bf16.msra.mxu0 %v996
    %1519 = vmatprep.subr.bf16.mxu0 %v1001
    %1520 = vmatpush1.bf16.msra.mxu0 %v1000
    %1521 = vmatprep.subr.bf16.mxu0 %v1005
    %1522 = vmatpush1.bf16.msra.mxu0 %v1004
    %1523 = vmatprep.subr.bf16.mxu0 %v1009
    %1524 = vmatpush1.bf16.msra.mxu0 %v1008
    %1525 = vmatprep.subr.bf16.mxu0 %v1013
    %1526 = vmatpush1.bf16.msra.mxu0 %v1012
    %1527 = vmatprep.subr.bf16.mxu0 %v1017
    %1528 = vmatpush1.bf16.msra.mxu0 %v1016
    %1529 = vmatprep.subr.bf16.mxu0 %v1021
    %1530 = vmatpush1.bf16.msra.mxu0 %v1020
    %1531 = vmatprep.subr.bf16.mxu0 %v1025
    %1532 = vmatpush1.bf16.msra.mxu0 %v1024
    %1533 = vmatprep.subr.bf16.mxu0 %v1029
    %1534 = vmatpush1.bf16.msra.mxu0 %v1028
    %1535 = vmatprep.mubr.bf16.mxu0 %v304
    %1536 = vmatmul.mubr.bf16.gmra.mrb[0].mxu0 %v303
    %v1537 = vpop.f32.mrb[0].mxu0
    %v1538 = vadd.f32 %v1497, %v1537
    %v1539 = vpop.f32.mrb[0].mxu0
    %v1540 = vadd.f32 %v1499, %v1539
    %v1541 = vpop.f32.mrb[0].mxu0
    %v1542 = vpop.f32.mrb[0].mxu0
    %1543 = vdwg.mxu0
    %1544 = vmatprep.subr.bf16.mxu0 %v1033
    %1545 = vmatpush1.bf16.msra.mxu0 %v1032
    %1546 = vmatprep.subr.bf16.mxu0 %v1037
    %1547 = vmatpush1.bf16.msra.mxu0 %v1036
    %1548 = vmatprep.subr.bf16.mxu0 %v1041
    %1549 = vmatpush1.bf16.msra.mxu0 %v1040
    %1550 = vmatprep.subr.bf16.mxu0 %v1045
    %1551 = vmatpush1.bf16.msra.mxu0 %v1044
    %1552 = vmatprep.subr.bf16.mxu0 %v1049
    %1553 = vmatpush1.bf16.msra.mxu0 %v1048
    %1554 = vmatprep.subr.bf16.mxu0 %v1053
    %1555 = vmatpush1.bf16.msra.mxu0 %v1052
    %1556 = vmatprep.subr.bf16.mxu0 %v1057
    %1557 = vmatpush1.bf16.msra.mxu0 %v1056
    %1558 = vmatprep.subr.bf16.mxu0 %v1061
    %1559 = vmatpush1.bf16.msra.mxu0 %v1060
    %1560 = vmatprep.subr.bf16.mxu0 %v1065
    %1561 = vmatpush1.bf16.msra.mxu0 %v1064
    %1562 = vmatprep.subr.bf16.mxu0 %v1069
    %1563 = vmatpush1.bf16.msra.mxu0 %v1068
    %1564 = vmatprep.subr.bf16.mxu0 %v1073
    %1565 = vmatpush1.bf16.msra.mxu0 %v1072
    %1566 = vmatprep.subr.bf16.mxu0 %v1077
    %1567 = vmatpush1.bf16.msra.mxu0 %v1076
    %1568 = vmatprep.subr.bf16.mxu0 %v1081
    %1569 = vmatpush1.bf16.msra.mxu0 %v1080
    %1570 = vmatprep.subr.bf16.mxu0 %v1085
    %1571 = vmatpush1.bf16.msra.mxu0 %v1084
    %1572 = vmatprep.subr.bf16.mxu0 %v1089
    %1573 = vmatpush1.bf16.msra.mxu0 %v1088
    %1574 = vmatprep.subr.bf16.mxu0 %v1093
    %1575 = vmatpush1.bf16.msra.mxu0 %v1092
    %1576 = vmatprep.mubr.bf16.mxu0 %v306
    %1577 = vmatmul.mubr.bf16.gmra.mrb[0].mxu0 %v305
    %v1578 = vpop.f32.mrb[0].mxu0
    %v1579 = vadd.f32 %v1538, %v1578
    %v1580 = vpop.f32.mrb[0].mxu0
    %v1581 = vadd.f32 %v1540, %v1580
    %v1582 = vpop.f32.mrb[0].mxu0
    %v1583 = vpop.f32.mrb[0].mxu0
    %1584 = vdwg.mxu0
    %1585 = vmatprep.subr.bf16.mxu0 %v1097
    %1586 = vmatpush1.bf16.msra.mxu0 %v1096
    %1587 = vmatprep.subr.bf16.mxu0 0
    %1588 = vmatpush1.bf16.msra.mxu0 0
    %1589 = vmatprep.subr.bf16.mxu0 0
    %1590 = vmatpush1.bf16.msra.mxu0 0
    %1591 = vmatprep.subr.bf16.mxu0 0
    %1592 = vmatpush1.bf16.msra.mxu0 0
    %1593 = vmatprep.subr.bf16.mxu0 0
    %1594 = vmatpush1.bf16.msra.mxu0 0
    %1595 = vmatprep.subr.bf16.mxu0 0
    %1596 = vmatpush1.bf16.msra.mxu0 0
    %1597 = vmatprep.subr.bf16.mxu0 0
    %1598 = vmatpush1.bf16.msra.mxu0 0
    %1599 = vmatprep.subr.bf16.mxu0 0
    %1600 = vmatpush1.bf16.msra.mxu0 0
    %1601 = vmatprep.subr.bf16.mxu0 0
    %1602 = vmatpush1.bf16.msra.mxu0 0
    %1603 = vmatprep.subr.bf16.mxu0 0
    %1604 = vmatpush1.bf16.msra.mxu0 0
    %1605 = vmatprep.subr.bf16.mxu0 0
    %1606 = vmatpush1.bf16.msra.mxu0 0
    %1607 = vmatprep.subr.bf16.mxu0 0
    %1608 = vmatpush1.bf16.msra.mxu0 0
    %1609 = vmatprep.subr.bf16.mxu0 0
    %1610 = vmatpush1.bf16.msra.mxu0 0
    %1611 = vmatprep.subr.bf16.mxu0 0
    %1612 = vmatpush1.bf16.msra.mxu0 0
    %1613 = vmatprep.subr.bf16.mxu0 0
    %1614 = vmatpush1.bf16.msra.mxu0 0
    %1615 = vmatprep.subr.bf16.mxu0 0
    %1616 = vmatpush1.bf16.msra.mxu0 0
    %1617 = vmatprep.mubr.bf16.mxu0 0
    %1618 = vmatmul.mubr.bf16.gmra.mrb[0].mxu0 %v1296
    %v1619 = vpop.f32.mrb[0].mxu0
    %v1620 = vadd.f32 %v1579, %v1619
    %v1621 = vpop.f32.mrb[0].mxu0
    %v1622 = vadd.f32 %v1581, %v1621
    %v1623 = vpop.f32.mrb[0].mxu0
    %v1624 = vpop.f32.mrb[0].mxu0
    %1625 = vdwg.mxu0
    %v1626 = vmul.f32 %v1456, 0.1
    %v1627 = vmul.f32 %v1458, 0.1
    %v1628 = vmul.f32 %v1620, 0.1
    %v1629 = vmul.f32 %v1622, 0.1
    %v1630 = vmax.f32 %v1456, %v1626
    %v1631 = vmax.f32 %v1458, %v1627
    %v1632 = vmax.f32 %v1620, %v1628
    %v1633 = vmax.f32 %v1622, %v1629
    %v1634 = vpack.c.bf16 %v1630, %v1630
    %v1635 = vpack.c.bf16 %v1631, %v1631
    %v1636 = vpack.c.bf16 %v1632, %v1632
    %v1637 = vpack.c.bf16 %v1633, %v1633
    %v1638 = vld [vmem:[%s5] sm:$0xff]
    %v1639 = vld [vmem:[%s5 + $0x8] sm:$0xff]
    %v1640 = vld [vmem:[%s5 + $0x10] sm:$0xff]
    %v1641 = vld [vmem:[%s5 + $0x18] sm:$0xff]
    %v1642 = vld [vmem:[%s5 + $0x20] sm:$0xff]
    %v1643 = vld [vmem:[%s5 + $0x28] sm:$0xff]
    %v1644 = vld [vmem:[%s5 + $0x30] sm:$0xff]
    %v1645 = vld [vmem:[%s5 + $0x38] sm:$0xff]
    %v1646 = vld [vmem:[%s5 + $0x40] sm:$0xff]
    %v1647 = vld [vmem:[%s5 + $0x48] sm:$0xff]
    %v1648 = vld [vmem:[%s5 + $0x50] sm:$0xff]
    %v1649 = vld [vmem:[%s5 + $0x58] sm:$0xff]
    %v1650 = vld [vmem:[%s5 + $0x60] sm:$0xff]
    %v1651 = vld [vmem:[%s5 + $0x68] sm:$0xff]
    %v1652 = vld [vmem:[%s5 + $0x70] sm:$0xff]
    %v1653 = vld [vmem:[%s5 + $0x78] sm:$0xff]
    %v1654 = vld [vmem:[%s5 + $0x80] sm:$0xff]
    %v1655 = vld [vmem:[%s5 + $0x88] sm:$0xff]
    %v1656 = vld [vmem:[%s5 + $0x90] sm:$0xff]
    %v1657 = vld [vmem:[%s5 + $0x98] sm:$0xff]
    %v1658 = vld [vmem:[%s5 + $0xa0] sm:$0xff]
    %v1659 = vld [vmem:[%s5 + $0xa8] sm:$0xff]
    %v1660 = vld [vmem:[%s5 + $0xb0] sm:$0xff]
    %v1661 = vld [vmem:[%s5 + $0xb8] sm:$0xff]
    %v1662 = vld [vmem:[%s5 + $0xc0] sm:$0xff]
    %v1663 = vld [vmem:[%s5 + $0xc8] sm:$0xff]
    %v1664 = vld [vmem:[%s5 + $0xd0] sm:$0xff]
    %v1665 = vld [vmem:[%s5 + $0xd8] sm:$0xff]
    %v1666 = vld [vmem:[%s5 + $0xe0] sm:$0xff]
    %v1667 = vld [vmem:[%s5 + $0xe8] sm:$0xff]
    %v1668 = vld [vmem:[%s5 + $0xf0] sm:$0xff]
    %v1669 = vld [vmem:[%s5 + $0xf8] sm:$0xff]
    %v1670 = vld [vmem:[%s5 + $0x100] sm:$0xff]
    %v1671 = vld [vmem:[%s5 + $0x108] sm:$0xff]
    %v1672 = vld [vmem:[%s5 + $0x110] sm:$0xff]
    %v1673 = vld [vmem:[%s5 + $0x118] sm:$0xff]
    %v1674 = vld [vmem:[%s5 + $0x120] sm:$0xff]
    %v1675 = vld [vmem:[%s5 + $0x128] sm:$0xff]
    %v1676 = vld [vmem:[%s5 + $0x130] sm:$0xff]
    %v1677 = vld [vmem:[%s5 + $0x138] sm:$0xff]
    %v1678 = vld [vmem:[%s5 + $0x140] sm:$0xff]
    %v1679 = vld [vmem:[%s5 + $0x148] sm:$0xff]
    %v1680 = vld [vmem:[%s5 + $0x150] sm:$0xff]
    %v1681 = vld [vmem:[%s5 + $0x158] sm:$0xff]
    %v1682 = vld [vmem:[%s5 + $0x160] sm:$0xff]
    %v1683 = vld [vmem:[%s5 + $0x168] sm:$0xff]
    %v1684 = vld [vmem:[%s5 + $0x170] sm:$0xff]
    %v1685 = vld [vmem:[%s5 + $0x178] sm:$0xff]
    %v1686 = vld [vmem:[%s5 + $0x180] sm:$0xff]
    %v1687 = vld [vmem:[%s5 + $0x188] sm:$0xff]
    %v1688 = vld [vmem:[%s5 + $0x190] sm:$0xff]
    %v1689 = vld [vmem:[%s5 + $0x198] sm:$0xff]
    %v1690 = vld [vmem:[%s5 + $0x1a0] sm:$0xff]
    %v1691 = vld [vmem:[%s5 + $0x1a8] sm:$0xff]
    %v1692 = vld [vmem:[%s5 + $0x1b0] sm:$0xff]
    %v1693 = vld [vmem:[%s5 + $0x1b8] sm:$0xff]
    %v1694 = vld [vmem:[%s5 + $0x1c0] sm:$0xff]
    %v1695 = vld [vmem:[%s5 + $0x1c8] sm:$0xff]
    %v1696 = vld [vmem:[%s5 + $0x1d0] sm:$0xff]
    %v1697 = vld [vmem:[%s5 + $0x1d8] sm:$0xff]
    %v1698 = vld [vmem:[%s5 + $0x1e0] sm:$0xff]
    %v1699 = vld [vmem:[%s5 + $0x1e8] sm:$0xff]
    %v1700 = vld [vmem:[%s5 + $0x1f0] sm:$0xff]
    %v1701 = vld [vmem:[%s5 + $0x1f8] sm:$0xff]
    %v1702 = vld [vmem:[%s6] sm:$0x3]
    %v1704 = vlaneseq
    %v1705 = vshrl.u32 %v1704, 7
    %v1706 = vsub.s32 0, %v1705
    %v1707 = vrot.slane %v1702, %v1706
    %v1708 = vlaneseq
    %v1709 = vshrl.u32 %v1708, 7
    %v1710 = vsub.s32 1, %v1709
    %v1711 = vrot.slane %v1702, %v1710
    %v1778 = vunpack.c.l.b16 %v1638
    %v1779 = vunpack.c.h.b16 %v1638
    %v1780 = vunpack.c.l.b16 %v1639
    %v1781 = vunpack.c.h.b16 %v1639
    %v1782 = vunpack.c.l.b16 %v1640
    %v1783 = vunpack.c.h.b16 %v1640
    %v1784 = vunpack.c.l.b16 %v1641
    %v1785 = vunpack.c.h.b16 %v1641
    %v1786 = vunpack.c.l.b16 %v1642
    %v1787 = vunpack.c.h.b16 %v1642
    %v1788 = vunpack.c.l.b16 %v1643
    %v1789 = vunpack.c.h.b16 %v1643
    %v1790 = vunpack.c.l.b16 %v1644
    %v1791 = vunpack.c.h.b16 %v1644
    %v1792 = vunpack.c.l.b16 %v1645
    %v1793 = vunpack.c.h.b16 %v1645
    %v1794 = vunpack.c.l.b16 %v1646
    %v1795 = vunpack.c.h.b16 %v1646
    %v1796 = vunpack.c.l.b16 %v1647
    %v1797 = vunpack.c.h.b16 %v1647
    %v1798 = vunpack.c.l.b16 %v1648
    %v1799 = vunpack.c.h.b16 %v1648
    %v1800 = vunpack.c.l.b16 %v1649
    %v1801 = vunpack.c.h.b16 %v1649
    %v1802 = vunpack.c.l.b16 %v1650
    %v1803 = vunpack.c.h.b16 %v1650
    %v1804 = vunpack.c.l.b16 %v1651
    %v1805 = vunpack.c.h.b16 %v1651
    %v1806 = vunpack.c.l.b16 %v1652
    %v1807 = vunpack.c.h.b16 %v1652
    %v1808 = vunpack.c.l.b16 %v1653
    %v1809 = vunpack.c.h.b16 %v1653
    %v1810 = vunpack.c.l.b16 %v1654
    %v1811 = vunpack.c.h.b16 %v1654
    %v1812 = vunpack.c.l.b16 %v1655
    %v1813 = vunpack.c.h.b16 %v1655
    %v1814 = vunpack.c.l.b16 %v1656
    %v1815 = vunpack.c.h.b16 %v1656
    %v1816 = vunpack.c.l.b16 %v1657
    %v1817 = vunpack.c.h.b16 %v1657
    %v1818 = vunpack.c.l.b16 %v1658
    %v1819 = vunpack.c.h.b16 %v1658
    %v1820 = vunpack.c.l.b16 %v1659
    %v1821 = vunpack.c.h.b16 %v1659
    %v1822 = vunpack.c.l.b16 %v1660
    %v1823 = vunpack.c.h.b16 %v1660
    %v1824 = vunpack.c.l.b16 %v1661
    %v1825 = vunpack.c.h.b16 %v1661
    %v1826 = vunpack.c.l.b16 %v1662
    %v1827 = vunpack.c.h.b16 %v1662
    %v1828 = vunpack.c.l.b16 %v1663
    %v1829 = vunpack.c.h.b16 %v1663
    %v1830 = vunpack.c.l.b16 %v1664
    %v1831 = vunpack.c.h.b16 %v1664
    %v1832 = vunpack.c.l.b16 %v1665
    %v1833 = vunpack.c.h.b16 %v1665
    %v1834 = vunpack.c.l.b16 %v1666
    %v1835 = vunpack.c.h.b16 %v1666
    %v1836 = vunpack.c.l.b16 %v1667
    %v1837 = vunpack.c.h.b16 %v1667
    %v1838 = vunpack.c.l.b16 %v1668
    %v1839 = vunpack.c.h.b16 %v1668
    %v1840 = vunpack.c.l.b16 %v1669
    %v1841 = vunpack.c.h.b16 %v1669
    %v1842 = vunpack.c.l.b16 %v1670
    %v1843 = vunpack.c.h.b16 %v1670
    %v1844 = vunpack.c.l.b16 %v1671
    %v1845 = vunpack.c.h.b16 %v1671
    %v1846 = vunpack.c.l.b16 %v1672
    %v1847 = vunpack.c.h.b16 %v1672
    %v1848 = vunpack.c.l.b16 %v1673
    %v1849 = vunpack.c.h.b16 %v1673
    %v1850 = vunpack.c.l.b16 %v1674
    %v1851 = vunpack.c.h.b16 %v1674
    %v1852 = vunpack.c.l.b16 %v1675
    %v1853 = vunpack.c.h.b16 %v1675
    %v1854 = vunpack.c.l.b16 %v1676
    %v1855 = vunpack.c.h.b16 %v1676
    %v1856 = vunpack.c.l.b16 %v1677
    %v1857 = vunpack.c.h.b16 %v1677
    %v1858 = vunpack.c.l.b16 %v1678
    %v1859 = vunpack.c.h.b16 %v1678
    %v1860 = vunpack.c.l.b16 %v1679
    %v1861 = vunpack.c.h.b16 %v1679
    %v1862 = vunpack.c.l.b16 %v1680
    %v1863 = vunpack.c.h.b16 %v1680
    %v1864 = vunpack.c.l.b16 %v1681
    %v1865 = vunpack.c.h.b16 %v1681
    %v1866 = vunpack.c.l.b16 %v1682
    %v1867 = vunpack.c.h.b16 %v1682
    %v1868 = vunpack.c.l.b16 %v1683
    %v1869 = vunpack.c.h.b16 %v1683
    %v1870 = vunpack.c.l.b16 %v1684
    %v1871 = vunpack.c.h.b16 %v1684
    %v1872 = vunpack.c.l.b16 %v1685
    %v1873 = vunpack.c.h.b16 %v1685
    %v1874 = vunpack.c.l.b16 %v1686
    %v1875 = vunpack.c.h.b16 %v1686
    %v1876 = vunpack.c.l.b16 %v1687
    %v1877 = vunpack.c.h.b16 %v1687
    %v1878 = vunpack.c.l.b16 %v1688
    %v1879 = vunpack.c.h.b16 %v1688
    %v1880 = vunpack.c.l.b16 %v1689
    %v1881 = vunpack.c.h.b16 %v1689
    %v1882 = vunpack.c.l.b16 %v1690
    %v1883 = vunpack.c.h.b16 %v1690
    %v1884 = vunpack.c.l.b16 %v1691
    %v1885 = vunpack.c.h.b16 %v1691
    %v1886 = vunpack.c.l.b16 %v1692
    %v1887 = vunpack.c.h.b16 %v1692
    %v1888 = vunpack.c.l.b16 %v1693
    %v1889 = vunpack.c.h.b16 %v1693
    %v1890 = vunpack.c.l.b16 %v1694
    %v1891 = vunpack.c.h.b16 %v1694
    %v1892 = vunpack.c.l.b16 %v1695
    %v1893 = vunpack.c.h.b16 %v1695
    %v1894 = vunpack.c.l.b16 %v1696
    %v1895 = vunpack.c.h.b16 %v1696
    %v1896 = vunpack.c.l.b16 %v1697
    %v1897 = vunpack.c.h.b16 %v1697
    %v1898 = vunpack.c.l.b16 %v1698
    %v1899 = vunpack.c.h.b16 %v1698
    %v1900 = vunpack.c.l.b16 %v1699
    %v1901 = vunpack.c.h.b16 %v1699
    %v1902 = vunpack.c.l.b16 %v1700
    %v1903 = vunpack.c.h.b16 %v1700
    %v1904 = vunpack.c.l.b16 %v1701
    %v1905 = vunpack.c.h.b16 %v1701
    %v1906 = vpack.c.b16 %v1780, %v1778
    %v1907 = vpack.c.b16 %v1781, %v1779
    %v1908 = vpack.c.b16 %v1784, %v1782
    %v1909 = vpack.c.b16 %v1785, %v1783
    %v1910 = vpack.c.b16 %v1788, %v1786
    %v1911 = vpack.c.b16 %v1789, %v1787
    %v1912 = vpack.c.b16 %v1792, %v1790
    %v1913 = vpack.c.b16 %v1793, %v1791
    %v1914 = vpack.c.b16 %v1796, %v1794
    %v1915 = vpack.c.b16 %v1797, %v1795
    %v1916 = vpack.c.b16 %v1800, %v1798
    %v1917 = vpack.c.b16 %v1801, %v1799
    %v1918 = vpack.c.b16 %v1804, %v1802
    %v1919 = vpack.c.b16 %v1805, %v1803
    %v1920 = vpack.c.b16 %v1808, %v1806
    %v1921 = vpack.c.b16 %v1809, %v1807
    %v1922 = vpack.c.b16 %v1812, %v1810
    %v1923 = vpack.c.b16 %v1813, %v1811
    %v1924 = vpack.c.b16 %v1816, %v1814
    %v1925 = vpack.c.b16 %v1817, %v1815
    %v1926 = vpack.c.b16 %v1820, %v1818
    %v1927 = vpack.c.b16 %v1821, %v1819
    %v1928 = vpack.c.b16 %v1824, %v1822
    %v1929 = vpack.c.b16 %v1825, %v1823
    %v1930 = vpack.c.b16 %v1828, %v1826
    %v1931 = vpack.c.b16 %v1829, %v1827
    %v1932 = vpack.c.b16 %v1832, %v1830
    %v1933 = vpack.c.b16 %v1833, %v1831
    %v1934 = vpack.c.b16 %v1836, %v1834
    %v1935 = vpack.c.b16 %v1837, %v1835
    %v1936 = vpack.c.b16 %v1840, %v1838
    %v1937 = vpack.c.b16 %v1841, %v1839
    %v1938 = vpack.c.b16 %v1844, %v1842
    %v1939 = vpack.c.b16 %v1845, %v1843
    %v1940 = vpack.c.b16 %v1848, %v1846
    %v1941 = vpack.c.b16 %v1849, %v1847
    %v1942 = vpack.c.b16 %v1852, %v1850
    %v1943 = vpack.c.b16 %v1853, %v1851
    %v1944 = vpack.c.b16 %v1856, %v1854
    %v1945 = vpack.c.b16 %v1857, %v1855
    %v1946 = vpack.c.b16 %v1860, %v1858
    %v1947 = vpack.c.b16 %v1861, %v1859
    %v1948 = vpack.c.b16 %v1864, %v1862
    %v1949 = vpack.c.b16 %v1865, %v1863
    %v1950 = vpack.c.b16 %v1868, %v1866
    %v1951 = vpack.c.b16 %v1869, %v1867
    %v1952 = vpack.c.b16 %v1872, %v1870
    %v1953 = vpack.c.b16 %v1873, %v1871
    %v1954 = vpack.c.b16 %v1876, %v1874
    %v1955 = vpack.c.b16 %v1877, %v1875
    %v1956 = vpack.c.b16 %v1880, %v1878
    %v1957 = vpack.c.b16 %v1881, %v1879
    %v1958 = vpack.c.b16 %v1884, %v1882
    %v1959 = vpack.c.b16 %v1885, %v1883
    %v1960 = vpack.c.b16 %v1888, %v1886
    %v1961 = vpack.c.b16 %v1889, %v1887
    %v1962 = vpack.c.b16 %v1892, %v1890
    %v1963 = vpack.c.b16 %v1893, %v1891
    %v1964 = vpack.c.b16 %v1896, %v1894
    %v1965 = vpack.c.b16 %v1897, %v1895
    %v1966 = vpack.c.b16 %v1900, %v1898
    %v1967 = vpack.c.b16 %v1901, %v1899
    %v1968 = vpack.c.b16 %v1904, %v1902
    %v1969 = vpack.c.b16 %v1905, %v1903
    %2034 = vmatprep.subr.bf16.mxu0 %v1907
    %2035 = vmatpush1.bf16.msra.mxu0 %v1906
    %2036 = vmatprep.subr.bf16.mxu0 %v1909
    %2037 = vmatpush1.bf16.msra.mxu0 %v1908
    %2038 = vmatprep.subr.bf16.mxu0 %v1911
    %2039 = vmatpush1.bf16.msra.mxu0 %v1910
    %2040 = vmatprep.subr.bf16.mxu0 %v1913
    %2041 = vmatpush1.bf16.msra.mxu0 %v1912
    %2042 = vmatprep.subr.bf16.mxu0 %v1915
    %2043 = vmatpush1.bf16.msra.mxu0 %v1914
    %2044 = vmatprep.subr.bf16.mxu0 %v1917
    %2045 = vmatpush1.bf16.msra.mxu0 %v1916
    %2046 = vmatprep.subr.bf16.mxu0 %v1919
    %2047 = vmatpush1.bf16.msra.mxu0 %v1918
    %2048 = vmatprep.subr.bf16.mxu0 %v1921
    %2049 = vmatpush1.bf16.msra.mxu0 %v1920
    %2050 = vmatprep.subr.bf16.mxu0 %v1923
    %2051 = vmatpush1.bf16.msra.mxu0 %v1922
    %2052 = vmatprep.subr.bf16.mxu0 %v1925
    %2053 = vmatpush1.bf16.msra.mxu0 %v1924
    %2054 = vmatprep.subr.bf16.mxu0 %v1927
    %2055 = vmatpush1.bf16.msra.mxu0 %v1926
    %2056 = vmatprep.subr.bf16.mxu0 %v1929
    %2057 = vmatpush1.bf16.msra.mxu0 %v1928
    %2058 = vmatprep.subr.bf16.mxu0 %v1931
    %2059 = vmatpush1.bf16.msra.mxu0 %v1930
    %2060 = vmatprep.subr.bf16.mxu0 %v1933
    %2061 = vmatpush1.bf16.msra.mxu0 %v1932
    %2062 = vmatprep.subr.bf16.mxu0 %v1935
    %2063 = vmatpush1.bf16.msra.mxu0 %v1934
    %2064 = vmatprep.subr.bf16.mxu0 %v1937
    %2065 = vmatpush1.bf16.msra.mxu0 %v1936
    %2066 = vmatprep.mubr.bf16.mxu0 %v1635
    %2067 = vmatmul.mubr.bf16.gmra.mrb[0].mxu0 %v1634
    %v2068 = vpop.f32.mrb[0].mxu0
    %v2069 = vadd.f32 %v1707, %v2068
    %v2070 = vpop.f32.mrb[0].mxu0
    %v2071 = vadd.f32 %v1711, %v2070
    %v2072 = vpop.f32.mrb[0].mxu0
    %v2073 = vpop.f32.mrb[0].mxu0
    %2074 = vdwg.mxu0
    %2075 = vmatprep.subr.bf16.mxu0 %v1939
    %2076 = vmatpush1.bf16.msra.mxu0 %v1938
    %2077 = vmatprep.subr.bf16.mxu0 %v1941
    %2078 = vmatpush1.bf16.msra.mxu0 %v1940
    %2079 = vmatprep.subr.bf16.mxu0 %v1943
    %2080 = vmatpush1.bf16.msra.mxu0 %v1942
    %2081 = vmatprep.subr.bf16.mxu0 %v1945
    %2082 = vmatpush1.bf16.msra.mxu0 %v1944
    %2083 = vmatprep.subr.bf16.mxu0 %v1947
    %2084 = vmatpush1.bf16.msra.mxu0 %v1946
    %2085 = vmatprep.subr.bf16.mxu0 %v1949
    %2086 = vmatpush1.bf16.msra.mxu0 %v1948
    %2087 = vmatprep.subr.bf16.mxu0 %v1951
    %2088 = vmatpush1.bf16.msra.mxu0 %v1950
    %2089 = vmatprep.subr.bf16.mxu0 %v1953
    %2090 = vmatpush1.bf16.msra.mxu0 %v1952
    %2091 = vmatprep.subr.bf16.mxu0 %v1955
    %2092 = vmatpush1.bf16.msra.mxu0 %v1954
    %2093 = vmatprep.subr.bf16.mxu0 %v1957
    %2094 = vmatpush1.bf16.msra.mxu0 %v1956
    %2095 = vmatprep.subr.bf16.mxu0 %v1959
    %2096 = vmatpush1.bf16.msra.mxu0 %v1958
    %2097 = vmatprep.subr.bf16.mxu0 %v1961
    %2098 = vmatpush1.bf16.msra.mxu0 %v1960
    %2099 = vmatprep.subr.bf16.mxu0 %v1963
    %2100 = vmatpush1.bf16.msra.mxu0 %v1962
    %2101 = vmatprep.subr.bf16.mxu0 %v1965
    %2102 = vmatpush1.bf16.msra.mxu0 %v1964
    %2103 = vmatprep.subr.bf16.mxu0 %v1967
    %2104 = vmatpush1.bf16.msra.mxu0 %v1966
    %2105 = vmatprep.subr.bf16.mxu0 %v1969
    %2106 = vmatpush1.bf16.msra.mxu0 %v1968
    %2107 = vmatprep.mubr.bf16.mxu0 %v1637
    %2108 = vmatmul.mubr.bf16.gmra.mrb[0].mxu0 %v1636
    %v2109 = vpop.f32.mrb[0].mxu0
    %v2110 = vadd.f32 %v2069, %v2109
    %v2111 = vpop.f32.mrb[0].mxu0
    %v2112 = vadd.f32 %v2071, %v2111
    %v2113 = vpop.f32.mrb[0].mxu0
    %v2114 = vpop.f32.mrb[0].mxu0
    %2115 = vdwg.mxu0
    %v2116 = vmul.f32 %v2110, 0.1
    %v2117 = vmul.f32 %v2112, 0.1
    %v2118 = vmax.f32 %v2110, %v2116
    %v2119 = vmax.f32 %v2112, %v2117
    %v2120 = vpack.c.bf16 %v2118, %v2118
    %v2121 = vpack.c.bf16 %v2119, %v2119
    %v2122 = vld [vmem:[%s7] sm:$0xf]
    %v2123 = vld [vmem:[%s7 + $0x4] sm:$0xf]
    %v2124 = vld [vmem:[%s7 + $0x8] sm:$0xf]
    %v2125 = vld [vmem:[%s7 + $0xc] sm:$0xf]
    %v2126 = vld [vmem:[%s7 + $0x10] sm:$0xf]
    %v2127 = vld [vmem:[%s7 + $0x14] sm:$0xf]
    %v2128 = vld [vmem:[%s7 + $0x18] sm:$0xf]
    %v2129 = vld [vmem:[%s7 + $0x1c] sm:$0xf]
    %v2130 = vld [vmem:[%s7 + $0x20] sm:$0xf]
    %v2131 = vld [vmem:[%s7 + $0x24] sm:$0xf]
    %v2132 = vld [vmem:[%s7 + $0x28] sm:$0xf]
    %v2133 = vld [vmem:[%s7 + $0x2c] sm:$0xf]
    %v2134 = vld [vmem:[%s7 + $0x30] sm:$0xf]
    %v2135 = vld [vmem:[%s7 + $0x34] sm:$0xf]
    %v2136 = vld [vmem:[%s7 + $0x38] sm:$0xf]
    %v2137 = vld [vmem:[%s7 + $0x3c] sm:$0xf]
    %v2138 = vld [vmem:[%s7 + $0x40] sm:$0xf]
    %v2139 = vld [vmem:[%s7 + $0x44] sm:$0xf]
    %v2140 = vld [vmem:[%s7 + $0x48] sm:$0xf]
    %v2141 = vld [vmem:[%s7 + $0x4c] sm:$0xf]
    %v2142 = vld [vmem:[%s7 + $0x50] sm:$0xf]
    %v2143 = vld [vmem:[%s7 + $0x54] sm:$0xf]
    %v2144 = vld [vmem:[%s7 + $0x58] sm:$0xf]
    %v2145 = vld [vmem:[%s7 + $0x5c] sm:$0xf]
    %v2146 = vld [vmem:[%s7 + $0x60] sm:$0xf]
    %v2147 = vld [vmem:[%s7 + $0x64] sm:$0xf]
    %v2148 = vld [vmem:[%s7 + $0x68] sm:$0xf]
    %v2149 = vld [vmem:[%s7 + $0x6c] sm:$0xf]
    %v2150 = vld [vmem:[%s7 + $0x70] sm:$0xf]
    %v2151 = vld [vmem:[%s7 + $0x74] sm:$0xf]
    %v2152 = vld [vmem:[%s7 + $0x78] sm:$0xf]
    %v2153 = vld [vmem:[%s7 + $0x7c] sm:$0xf]
    %v2154 = vld [vmem:[%s8] sm:$0x1]
    %v2156 = vlaneseq
    %v2157 = vshrl.u32 %v2156, 7
    %v2158 = vsub.s32 0, %v2157
    %v2159 = vrot.slane %v2154, %v2158
    %v2193 = vunpack.c.l.b16 %v2122
    %v2194 = vunpack.c.l.b16 %v2123
    %v2195 = vunpack.c.l.b16 %v2124
    %v2196 = vunpack.c.l.b16 %v2125
    %v2197 = vunpack.c.l.b16 %v2126
    %v2198 = vunpack.c.l.b16 %v2127
    %v2199 = vunpack.c.l.b16 %v2128
    %v2200 = vunpack.c.l.b16 %v2129
    %v2201 = vunpack.c.l.b16 %v2130
    %v2202 = vunpack.c.l.b16 %v2131
    %v2203 = vunpack.c.l.b16 %v2132
    %v2204 = vunpack.c.l.b16 %v2133
    %v2205 = vunpack.c.l.b16 %v2134
    %v2206 = vunpack.c.l.b16 %v2135
    %v2207 = vunpack.c.l.b16 %v2136
    %v2208 = vunpack.c.l.b16 %v2137
    %v2209 = vunpack.c.l.b16 %v2138
    %v2210 = vunpack.c.l.b16 %v2139
    %v2211 = vunpack.c.l.b16 %v2140
    %v2212 = vunpack.c.l.b16 %v2141
    %v2213 = vunpack.c.l.b16 %v2142
    %v2214 = vunpack.c.l.b16 %v2143
    %v2215 = vunpack.c.l.b16 %v2144
    %v2216 = vunpack.c.l.b16 %v2145
    %v2217 = vunpack.c.l.b16 %v2146
    %v2218 = vunpack.c.l.b16 %v2147
    %v2219 = vunpack.c.l.b16 %v2148
    %v2220 = vunpack.c.l.b16 %v2149
    %v2221 = vunpack.c.l.b16 %v2150
    %v2222 = vunpack.c.l.b16 %v2151
    %v2223 = vunpack.c.l.b16 %v2152
    %v2224 = vunpack.c.l.b16 %v2153
    %v2225 = vpack.c.b16 %v2194, %v2193
    %v2226 = vpack.c.b16 %v2196, %v2195
    %v2227 = vpack.c.b16 %v2198, %v2197
    %v2228 = vpack.c.b16 %v2200, %v2199
    %v2229 = vpack.c.b16 %v2202, %v2201
    %v2230 = vpack.c.b16 %v2204, %v2203
    %v2231 = vpack.c.b16 %v2206, %v2205
    %v2232 = vpack.c.b16 %v2208, %v2207
    %v2233 = vpack.c.b16 %v2210, %v2209
    %v2234 = vpack.c.b16 %v2212, %v2211
    %v2235 = vpack.c.b16 %v2214, %v2213
    %v2236 = vpack.c.b16 %v2216, %v2215
    %v2237 = vpack.c.b16 %v2218, %v2217
    %v2238 = vpack.c.b16 %v2220, %v2219
    %v2239 = vpack.c.b16 %v2222, %v2221
    %v2240 = vpack.c.b16 %v2224, %v2223
    %2257 = vmatprep.subr.bf16.mxu0 0
    %2258 = vmatpush1.bf16.msra.mxu0 %v2225
    %2259 = vmatprep.subr.bf16.mxu0 0
    %2260 = vmatpush1.bf16.msra.mxu0 %v2226
    %2261 = vmatprep.subr.bf16.mxu0 0
    %2262 = vmatpush1.bf16.msra.mxu0 %v2227
    %2263 = vmatprep.subr.bf16.mxu0 0
    %2264 = vmatpush1.bf16.msra.mxu0 %v2228
    %2265 = vmatprep.subr.bf16.mxu0 0
    %2266 = vmatpush1.bf16.msra.mxu0 %v2229
    %2267 = vmatprep.subr.bf16.mxu0 0
    %2268 = vmatpush1.bf16.msra.mxu0 %v2230
    %2269 = vmatprep.subr.bf16.mxu0 0
    %2270 = vmatpush1.bf16.msra.mxu0 %v2231
    %2271 = vmatprep.subr.bf16.mxu0 0
    %2272 = vmatpush1.bf16.msra.mxu0 %v2232
    %2273 = vmatprep.subr.bf16.mxu0 0
    %2274 = vmatpush1.bf16.msra.mxu0 %v2233
    %2275 = vmatprep.subr.bf16.mxu0 0
    %2276 = vmatpush1.bf16.msra.mxu0 %v2234
    %2277 = vmatprep.subr.bf16.mxu0 0
    %2278 = vmatpush1.bf16.msra.mxu0 %v2235
    %2279 = vmatprep.subr.bf16.mxu0 0
    %2280 = vmatpush1.bf16.msra.mxu0 %v2236
    %2281 = vmatprep.subr.bf16.mxu0 0
    %2282 = vmatpush1.bf16.msra.mxu0 %v2237
    %2283 = vmatprep.subr.bf16.mxu0 0
    %2284 = vmatpush1.bf16.msra.mxu0 %v2238
    %2285 = vmatprep.subr.bf16.mxu0 0
    %2286 = vmatpush1.bf16.msra.mxu0 %v2239
    %2287 = vmatprep.subr.bf16.mxu0 0
    %2288 = vmatpush1.bf16.msra.mxu0 %v2240
    %2289 = vmatprep.mubr.bf16.mxu0 %v2121
    %2290 = vmatmul.mubr.bf16.gmra.mrb[0].mxu0 %v2120
    %v2291 = vpop.f32.mrb[0].mxu0
    %v2292 = vadd.f32 %v2159, %v2291
    %v2293 = vpop.f32.mrb[0].mxu0
    %v2294 = vpop.f32.mrb[0].mxu0
    %v2295 = vpop.f32.mrb[0].mxu0
    %2296 = vdwg.mxu0
    %v2297 = vmul.f32 %v2292, 0.1
    %v2298 = vmax.f32 %v2292, %v2297
    %v2299 = vpack.c.bf16 %v2298, %v2298
    %v2300 = vld [vmem:[%s9] sm:$0xff]
    %v2301 = vld [vmem:[%s9 + $0x8] sm:$0xff]
    %v2302 = vld [vmem:[%s9 + $0x10] sm:$0xff]
    %v2303 = vld [vmem:[%s9 + $0x18] sm:$0xff]
    %v2304 = vld [vmem:[%s9 + $0x20] sm:$0xff]
    %v2305 = vld [vmem:[%s9 + $0x28] sm:$0xff]
    %v2306 = vld [vmem:[%s9 + $0x30] sm:$0xff]
    %v2307 = vld [vmem:[%s9 + $0x38] sm:$0xff]
    %v2308 = vld [vmem:[%s9 + $0x40] sm:$0xff]
    %v2309 = vld [vmem:[%s9 + $0x48] sm:$0xff]
    %v2310 = vld [vmem:[%s9 + $0x50] sm:$0xff]
    %v2311 = vld [vmem:[%s9 + $0x58] sm:$0xff]
    %v2312 = vld [vmem:[%s9 + $0x60] sm:$0xff]
    %v2313 = vld [vmem:[%s9 + $0x68] sm:$0xff]
    %v2314 = vld [vmem:[%s9 + $0x70] sm:$0xff]
    %v2315 = vld [vmem:[%s9 + $0x78] sm:$0xff]
    %v2316 = vld [vmem:[%s10] sm:$0x3]
    %v2318 = vlaneseq
    %v2319 = vshrl.u32 %v2318, 7
    %v2320 = vsub.s32 0, %v2319
    %v2321 = vrot.slane %v2316, %v2320
    %v2322 = vlaneseq
    %v2323 = vshrl.u32 %v2322, 7
    %v2324 = vsub.s32 1, %v2323
    %v2325 = vrot.slane %v2316, %v2324
    %v2344 = vunpack.c.l.b16 %v2300
    %v2345 = vunpack.c.h.b16 %v2300
    %v2346 = vunpack.c.l.b16 %v2301
    %v2347 = vunpack.c.h.b16 %v2301
    %v2348 = vunpack.c.l.b16 %v2302
    %v2349 = vunpack.c.h.b16 %v2302
    %v2350 = vunpack.c.l.b16 %v2303
    %v2351 = vunpack.c.h.b16 %v2303
    %v2352 = vunpack.c.l.b16 %v2304
    %v2353 = vunpack.c.h.b16 %v2304
    %v2354 = vunpack.c.l.b16 %v2305
    %v2355 = vunpack.c.h.b16 %v2305
    %v2356 = vunpack.c.l.b16 %v2306
    %v2357 = vunpack.c.h.b16 %v2306
    %v2358 = vunpack.c.l.b16 %v2307
    %v2359 = vunpack.c.h.b16 %v2307
    %v2360 = vunpack.c.l.b16 %v2308
    %v2361 = vunpack.c.h.b16 %v2308
    %v2362 = vunpack.c.l.b16 %v2309
    %v2363 = vunpack.c.h.b16 %v2309
    %v2364 = vunpack.c.l.b16 %v2310
    %v2365 = vunpack.c.h.b16 %v2310
    %v2366 = vunpack.c.l.b16 %v2311
    %v2367 = vunpack.c.h.b16 %v2311
    %v2368 = vunpack.c.l.b16 %v2312
    %v2369 = vunpack.c.h.b16 %v2312
    %v2370 = vunpack.c.l.b16 %v2313
    %v2371 = vunpack.c.h.b16 %v2313
    %v2372 = vunpack.c.l.b16 %v2314
    %v2373 = vunpack.c.h.b16 %v2314
    %v2374 = vunpack.c.l.b16 %v2315
    %v2375 = vunpack.c.h.b16 %v2315
    %v2376 = vpack.c.b16 %v2346, %v2344
    %v2377 = vpack.c.b16 %v2347, %v2345
    %v2378 = vpack.c.b16 %v2350, %v2348
    %v2379 = vpack.c.b16 %v2351, %v2349
    %v2380 = vpack.c.b16 %v2354, %v2352
    %v2381 = vpack.c.b16 %v2355, %v2353
    %v2382 = vpack.c.b16 %v2358, %v2356
    %v2383 = vpack.c.b16 %v2359, %v2357
    %v2384 = vpack.c.b16 %v2362, %v2360
    %v2385 = vpack.c.b16 %v2363, %v2361
    %v2386 = vpack.c.b16 %v2366, %v2364
    %v2387 = vpack.c.b16 %v2367, %v2365
    %v2388 = vpack.c.b16 %v2370, %v2368
    %v2389 = vpack.c.b16 %v2371, %v2369
    %v2390 = vpack.c.b16 %v2374, %v2372
    %v2391 = vpack.c.b16 %v2375, %v2373
    %2408 = vmatprep.subr.bf16.mxu0 %v2377
    %2409 = vmatpush1.bf16.msra.mxu0 %v2376
    %2410 = vmatprep.subr.bf16.mxu0 %v2379
    %2411 = vmatpush1.bf16.msra.mxu0 %v2378
    %2412 = vmatprep.subr.bf16.mxu0 %v2381
    %2413 = vmatpush1.bf16.msra.mxu0 %v2380
    %2414 = vmatprep.subr.bf16.mxu0 %v2383
    %2415 = vmatpush1.bf16.msra.mxu0 %v2382
    %2416 = vmatprep.subr.bf16.mxu0 %v2385
    %2417 = vmatpush1.bf16.msra.mxu0 %v2384
    %2418 = vmatprep.subr.bf16.mxu0 %v2387
    %2419 = vmatpush1.bf16.msra.mxu0 %v2386
    %2420 = vmatprep.subr.bf16.mxu0 %v2389
    %2421 = vmatpush1.bf16.msra.mxu0 %v2388
    %2422 = vmatprep.subr.bf16.mxu0 %v2391
    %2423 = vmatpush1.bf16.msra.mxu0 %v2390
    %2424 = vmatprep.subr.bf16.mxu0 0
    %2425 = vmatpush1.bf16.msra.mxu0 0
    %2426 = vmatprep.subr.bf16.mxu0 0
    %2427 = vmatpush1.bf16.msra.mxu0 0
    %2428 = vmatprep.subr.bf16.mxu0 0
    %2429 = vmatpush1.bf16.msra.mxu0 0
    %2430 = vmatprep.subr.bf16.mxu0 0
    %2431 = vmatpush1.bf16.msra.mxu0 0
    %2432 = vmatprep.subr.bf16.mxu0 0
    %2433 = vmatpush1.bf16.msra.mxu0 0
    %2434 = vmatprep.subr.bf16.mxu0 0
    %2435 = vmatpush1.bf16.msra.mxu0 0
    %2436 = vmatprep.subr.bf16.mxu0 0
    %2437 = vmatpush1.bf16.msra.mxu0 0
    %2438 = vmatprep.subr.bf16.mxu0 0
    %2439 = vmatpush1.bf16.msra.mxu0 0
    %2440 = vmatprep.mubr.bf16.mxu0 0
    %2441 = vmatmul.mubr.bf16.gmra.mrb[0].mxu0 %v2299
    %v2442 = vpop.f32.mrb[0].mxu0
    %v2443 = vadd.f32 %v2321, %v2442
    %v2444 = vpop.f32.mrb[0].mxu0
    %v2445 = vadd.f32 %v2325, %v2444
    %v2446 = vpop.f32.mrb[0].mxu0
    %v2447 = vpop.f32.mrb[0].mxu0
    %2448 = vdwg.mxu0
    %v2449 = vmul.f32 %v2445, 0.5
    %v2450 = vmul.f32 %v2449, 1.442695
    %v2451 = vpow.pop %v2450
    %v2452 = vld [vmem:[%s2] sm:$0xff]
    %v2453 = vmul.f32 %v2451, %v2452
    %v2454 = vadd.f32 %v2443, %v2453
    %v2455 = vlaneseq
    %v2456 = vand.u32 %v2455, 127
    %v2457 = vld [vmem:[%s1] sm:$0xff]
    %2458 = vset.pattern.permute.xlu0 0
    %2459 = vperm.xlu0 %2458, %v2457
    %v2460 = vpop.permute.xlu0 %2459
    %vm2461 = vcmp.eq.s32.totalorder %v2456, %v2460
    %v2462 = vsel %vm2461, 1, 0
    %v2463 = vcvt.s32.f32 %v2462
    %v2464 = vpack.c.bf16 %v2463, %v2463
    %v2465 = vpack.c.bf16 %v2454, %v2454
    %v2466 = vld [vmem:[%s11] sm:$0xf]
    %v2467 = vld [vmem:[%s11 + $0x4] sm:$0xf]
    %v2468 = vld [vmem:[%s11 + $0x8] sm:$0xf]
    %v2469 = vld [vmem:[%s11 + $0xc] sm:$0xf]
    %v2470 = vld [vmem:[%s11 + $0x10] sm:$0xf]
    %v2471 = vld [vmem:[%s11 + $0x14] sm:$0xf]
    %v2472 = vld [vmem:[%s11 + $0x18] sm:$0xf]
    %v2473 = vld [vmem:[%s11 + $0x1c] sm:$0xf]
    %v2474 = vld [vmem:[%s11 + $0x20] sm:$0xf]
    %v2475 = vld [vmem:[%s11 + $0x24] sm:$0xf]
    %v2476 = vld [vmem:[%s11 + $0x28] sm:$0xf]
    %v2477 = vld [vmem:[%s11 + $0x2c] sm:$0xf]
    %v2478 = vld [vmem:[%s11 + $0x30] sm:$0xf]
    %v2479 = vld [vmem:[%s11 + $0x34] sm:$0xf]
    %v2480 = vld [vmem:[%s11 + $0x38] sm:$0xf]
    %v2481 = vld [vmem:[%s11 + $0x3c] sm:$0xf]
    %v2482 = vld [vmem:[%s11 + $0x40] sm:$0xf]
    %v2483 = vld [vmem:[%s11 + $0x44] sm:$0xf]
    %v2484 = vld [vmem:[%s11 + $0x48] sm:$0xf]
    %v2485 = vld [vmem:[%s11 + $0x4c] sm:$0xf]
    %v2486 = vld [vmem:[%s11 + $0x50] sm:$0xf]
    %v2487 = vld [vmem:[%s11 + $0x54] sm:$0xf]
    %v2488 = vld [vmem:[%s11 + $0x58] sm:$0xf]
    %v2489 = vld [vmem:[%s11 + $0x5c] sm:$0xf]
    %v2490 = vld [vmem:[%s11 + $0x60] sm:$0xf]
    %v2491 = vld [vmem:[%s11 + $0x64] sm:$0xf]
    %v2492 = vld [vmem:[%s11 + $0x68] sm:$0xf]
    %v2493 = vld [vmem:[%s11 + $0x6c] sm:$0xf]
    %v2494 = vld [vmem:[%s11 + $0x70] sm:$0xf]
    %v2495 = vld [vmem:[%s11 + $0x74] sm:$0xf]
    %v2496 = vld [vmem:[%s11 + $0x78] sm:$0xf]
    %v2497 = vld [vmem:[%s11 + $0x7c] sm:$0xf]
    %v2498 = vld [vmem:[%s12] sm:$0x1]
    %v2500 = vlaneseq
    %v2501 = vshrl.u32 %v2500, 7
    %v2502 = vsub.s32 0, %v2501
    %v2503 = vrot.slane %v2498, %v2502
    %v2537 = vunpack.c.l.b16 %v2466
    %v2538 = vunpack.c.l.b16 %v2467
    %v2539 = vunpack.c.l.b16 %v2468
    %v2540 = vunpack.c.l.b16 %v2469
    %v2541 = vunpack.c.l.b16 %v2470
    %v2542 = vunpack.c.l.b16 %v2471
    %v2543 = vunpack.c.l.b16 %v2472
    %v2544 = vunpack.c.l.b16 %v2473
    %v2545 = vunpack.c.l.b16 %v2474
    %v2546 = vunpack.c.l.b16 %v2475
    %v2547 = vunpack.c.l.b16 %v2476
    %v2548 = vunpack.c.l.b16 %v2477
    %v2549 = vunpack.c.l.b16 %v2478
    %v2550 = vunpack.c.l.b16 %v2479
    %v2551 = vunpack.c.l.b16 %v2480
    %v2552 = vunpack.c.l.b16 %v2481
    %v2553 = vunpack.c.l.b16 %v2482
    %v2554 = vunpack.c.l.b16 %v2483
    %v2555 = vunpack.c.l.b16 %v2484
    %v2556 = vunpack.c.l.b16 %v2485
    %v2557 = vunpack.c.l.b16 %v2486
    %v2558 = vunpack.c.l.b16 %v2487
    %v2559 = vunpack.c.l.b16 %v2488
    %v2560 = vunpack.c.l.b16 %v2489
    %v2561 = vunpack.c.l.b16 %v2490
    %v2562 = vunpack.c.l.b16 %v2491
    %v2563 = vunpack.c.l.b16 %v2492
    %v2564 = vunpack.c.l.b16 %v2493
    %v2565 = vunpack.c.l.b16 %v2494
    %v2566 = vunpack.c.l.b16 %v2495
    %v2567 = vunpack.c.l.b16 %v2496
    %v2568 = vunpack.c.l.b16 %v2497
    %v2569 = vpack.c.b16 %v2538, %v2537
    %v2570 = vpack.c.b16 %v2540, %v2539
    %v2571 = vpack.c.b16 %v2542, %v2541
    %v2572 = vpack.c.b16 %v2544, %v2543
    %v2573 = vpack.c.b16 %v2546, %v2545
    %v2574 = vpack.c.b16 %v2548, %v2547
    %v2575 = vpack.c.b16 %v2550, %v2549
    %v2576 = vpack.c.b16 %v2552, %v2551
    %v2577 = vpack.c.b16 %v2554, %v2553
    %v2578 = vpack.c.b16 %v2556, %v2555
    %v2579 = vpack.c.b16 %v2558, %v2557
    %v2580 = vpack.c.b16 %v2560, %v2559
    %v2581 = vpack.c.b16 %v2562, %v2561
    %v2582 = vpack.c.b16 %v2564, %v2563
    %v2583 = vpack.c.b16 %v2566, %v2565
    %v2584 = vpack.c.b16 %v2568, %v2567
    %2601 = vmatprep.subr.bf16.mxu0 0
    %2602 = vmatpush1.bf16.msra.mxu0 %v2569
    %2603 = vmatprep.subr.bf16.mxu0 0
    %2604 = vmatpush1.bf16.msra.mxu0 %v2570
    %2605 = vmatprep.subr.bf16.mxu0 0
    %2606 = vmatpush1.bf16.msra.mxu0 %v2571
    %2607 = vmatprep.subr.bf16.mxu0 0
    %2608 = vmatpush1.bf16.msra.mxu0 %v2572
    %2609 = vmatprep.subr.bf16.mxu0 0
    %2610 = vmatpush1.bf16.msra.mxu0 %v2573
    %2611 = vmatprep.subr.bf16.mxu0 0
    %2612 = vmatpush1.bf16.msra.mxu0 %v2574
    %2613 = vmatprep.subr.bf16.mxu0 0
    %2614 = vmatpush1.bf16.msra.mxu0 %v2575
    %2615 = vmatprep.subr.bf16.mxu0 0
    %2616 = vmatpush1.bf16.msra.mxu0 %v2576
    %2617 = vmatprep.subr.bf16.mxu0 0
    %2618 = vmatpush1.bf16.msra.mxu0 %v2577
    %2619 = vmatprep.subr.bf16.mxu0 0
    %2620 = vmatpush1.bf16.msra.mxu0 %v2578
    %2621 = vmatprep.subr.bf16.mxu0 0
    %2622 = vmatpush1.bf16.msra.mxu0 %v2579
    %2623 = vmatprep.subr.bf16.mxu0 0
    %2624 = vmatpush1.bf16.msra.mxu0 %v2580
    %2625 = vmatprep.subr.bf16.mxu0 0
    %2626 = vmatpush1.bf16.msra.mxu0 %v2581
    %2627 = vmatprep.subr.bf16.mxu0 0
    %2628 = vmatpush1.bf16.msra.mxu0 %v2582
    %2629 = vmatprep.subr.bf16.mxu0 0
    %2630 = vmatpush1.bf16.msra.mxu0 %v2583
    %2631 = vmatprep.subr.bf16.mxu0 0
    %2632 = vmatpush1.bf16.msra.mxu0 %v2584
    %2633 = vmatprep.mubr.bf16.mxu0 %v2464
    %2634 = vmatmul.mubr.bf16.gmra.mrb[0].mxu0 %v2465
    %v2635 = vpop.f32.mrb[0].mxu0
    %v2636 = vadd.f32 %v2503, %v2635
    %v2637 = vpop.f32.mrb[0].mxu0
    %v2638 = vpop.f32.mrb[0].mxu0
    %v2639 = vpop.f32.mrb[0].mxu0
    %2640 = vdwg.mxu0
    %v2641 = vmul.f32 %v2636, 0.1
    %v2642 = vmax.f32 %v2636, %v2641
    %v2643 = vpack.c.bf16 %v2642, %v2642
    %v2644 = vld [vmem:[%s13] sm:$0xff]
    %v2645 = vld [vmem:[%s13 + $0x8] sm:$0xff]
    %v2646 = vld [vmem:[%s13 + $0x10] sm:$0xff]
    %v2647 = vld [vmem:[%s13 + $0x18] sm:$0xff]
    %v2648 = vld [vmem:[%s13 + $0x20] sm:$0xff]
    %v2649 = vld [vmem:[%s13 + $0x28] sm:$0xff]
    %v2650 = vld [vmem:[%s13 + $0x30] sm:$0xff]
    %v2651 = vld [vmem:[%s13 + $0x38] sm:$0xff]
    %v2652 = vld [vmem:[%s13 + $0x40] sm:$0xff]
    %v2653 = vld [vmem:[%s13 + $0x48] sm:$0xff]
    %v2654 = vld [vmem:[%s13 + $0x50] sm:$0xff]
    %v2655 = vld [vmem:[%s13 + $0x58] sm:$0xff]
    %v2656 = vld [vmem:[%s13 + $0x60] sm:$0xff]
    %v2657 = vld [vmem:[%s13 + $0x68] sm:$0xff]
    %v2658 = vld [vmem:[%s13 + $0x70] sm:$0xff]
    %v2659 = vld [vmem:[%s13 + $0x78] sm:$0xff]
    %v2660 = vld [vmem:[%s14] sm:$0x3]
    %v2662 = vlaneseq
    %v2663 = vshrl.u32 %v2662, 7
    %v2664 = vsub.s32 0, %v2663
    %v2665 = vrot.slane %v2660, %v2664
    %v2666 = vlaneseq
    %v2667 = vshrl.u32 %v2666, 7
    %v2668 = vsub.s32 1, %v2667
    %v2669 = vrot.slane %v2660, %v2668
    %v2688 = vunpack.c.l.b16 %v2644
    %v2689 = vunpack.c.h.b16 %v2644
    %v2690 = vunpack.c.l.b16 %v2645
    %v2691 = vunpack.c.h.b16 %v2645
    %v2692 = vunpack.c.l.b16 %v2646
    %v2693 = vunpack.c.h.b16 %v2646
    %v2694 = vunpack.c.l.b16 %v2647
    %v2695 = vunpack.c.h.b16 %v2647
    %v2696 = vunpack.c.l.b16 %v2648
    %v2697 = vunpack.c.h.b16 %v2648
    %v2698 = vunpack.c.l.b16 %v2649
    %v2699 = vunpack.c.h.b16 %v2649
    %v2700 = vunpack.c.l.b16 %v2650
    %v2701 = vunpack.c.h.b16 %v2650
    %v2702 = vunpack.c.l.b16 %v2651
    %v2703 = vunpack.c.h.b16 %v2651
    %v2704 = vunpack.c.l.b16 %v2652
    %v2705 = vunpack.c.h.b16 %v2652
    %v2706 = vunpack.c.l.b16 %v2653
    %v2707 = vunpack.c.h.b16 %v2653
    %v2708 = vunpack.c.l.b16 %v2654
    %v2709 = vunpack.c.h.b16 %v2654
    %v2710 = vunpack.c.l.b16 %v2655
    %v2711 = vunpack.c.h.b16 %v2655
    %v2712 = vunpack.c.l.b16 %v2656
    %v2713 = vunpack.c.h.b16 %v2656
    %v2714 = vunpack.c.l.b16 %v2657
    %v2715 = vunpack.c.h.b16 %v2657
    %v2716 = vunpack.c.l.b16 %v2658
    %v2717 = vunpack.c.h.b16 %v2658
    %v2718 = vunpack.c.l.b16 %v2659
    %v2719 = vunpack.c.h.b16 %v2659
    %v2720 = vpack.c.b16 %v2690, %v2688
    %v2721 = vpack.c.b16 %v2691, %v2689
    %v2722 = vpack.c.b16 %v2694, %v2692
    %v2723 = vpack.c.b16 %v2695, %v2693
    %v2724 = vpack.c.b16 %v2698, %v2696
    %v2725 = vpack.c.b16 %v2699, %v2697
    %v2726 = vpack.c.b16 %v2702, %v2700
    %v2727 = vpack.c.b16 %v2703, %v2701
    %v2728 = vpack.c.b16 %v2706, %v2704
    %v2729 = vpack.c.b16 %v2707, %v2705
    %v2730 = vpack.c.b16 %v2710, %v2708
    %v2731 = vpack.c.b16 %v2711, %v2709
    %v2732 = vpack.c.b16 %v2714, %v2712
    %v2733 = vpack.c.b16 %v2715, %v2713
    %v2734 = vpack.c.b16 %v2718, %v2716
    %v2735 = vpack.c.b16 %v2719, %v2717
    %2752 = vmatprep.subr.bf16.mxu0 %v2721
    %2753 = vmatpush1.bf16.msra.mxu0 %v2720
    %2754 = vmatprep.subr.bf16.mxu0 %v2723
    %2755 = vmatpush1.bf16.msra.mxu0 %v2722
    %2756 = vmatprep.subr.bf16.mxu0 %v2725
    %2757 = vmatpush1.bf16.msra.mxu0 %v2724
    %2758 = vmatprep.subr.bf16.mxu0 %v2727
    %2759 = vmatpush1.bf16.msra.mxu0 %v2726
    %2760 = vmatprep.subr.bf16.mxu0 %v2729
    %2761 = vmatpush1.bf16.msra.mxu0 %v2728
    %2762 = vmatprep.subr.bf16.mxu0 %v2731
    %2763 = vmatpush1.bf16.msra.mxu0 %v2730
    %2764 = vmatprep.subr.bf16.mxu0 %v2733
    %2765 = vmatpush1.bf16.msra.mxu0 %v2732
    %2766 = vmatprep.subr.bf16.mxu0 %v2735
    %2767 = vmatpush1.bf16.msra.mxu0 %v2734
    %2768 = vmatprep.subr.bf16.mxu0 0
    %2769 = vmatpush1.bf16.msra.mxu0 0
    %2770 = vmatprep.subr.bf16.mxu0 0
    %2771 = vmatpush1.bf16.msra.mxu0 0
    %2772 = vmatprep.subr.bf16.mxu0 0
    %2773 = vmatpush1.bf16.msra.mxu0 0
    %2774 = vmatprep.subr.bf16.mxu0 0
    %2775 = vmatpush1.bf16.msra.mxu0 0
    %2776 = vmatprep.subr.bf16.mxu0 0
    %2777 = vmatpush1.bf16.msra.mxu0 0
    %2778 = vmatprep.subr.bf16.mxu0 0
    %2779 = vmatpush1.bf16.msra.mxu0 0
    %2780 = vmatprep.subr.bf16.mxu0 0
    %2781 = vmatpush1.bf16.msra.mxu0 0
    %2782 = vmatprep.subr.bf16.mxu0 0
    %2783 = vmatpush1.bf16.msra.mxu0 0
    %2784 = vmatprep.mubr.bf16.mxu0 0
    %2785 = vmatmul.mubr.bf16.gmra.mrb[0].mxu0 %v2643
    %v2786 = vpop.f32.mrb[0].mxu0
    %v2787 = vadd.f32 %v2665, %v2786
    %v2788 = vpop.f32.mrb[0].mxu0
    %v2789 = vadd.f32 %v2669, %v2788
    %v2790 = vpop.f32.mrb[0].mxu0
    %v2791 = vpop.f32.mrb[0].mxu0
    %2792 = vdwg.mxu0
    %v2793 = vmul.f32 %v2787, 0.1
    %v2794 = vmul.f32 %v2789, 0.1
    %v2795 = vmax.f32 %v2787, %v2793
    %v2796 = vmax.f32 %v2789, %v2794
    %v2797 = vpack.c.bf16 %v2795, %v2795
    %v2798 = vpack.c.bf16 %v2796, %v2796
    %v2799 = vld [vmem:[%s15] sm:$0xff]
    %v2800 = vld [vmem:[%s15 + $0x8] sm:$0xff]
    %v2801 = vld [vmem:[%s15 + $0x10] sm:$0xff]
    %v2802 = vld [vmem:[%s15 + $0x18] sm:$0xff]
    %v2803 = vld [vmem:[%s15 + $0x20] sm:$0xff]
    %v2804 = vld [vmem:[%s15 + $0x28] sm:$0xff]
    %v2805 = vld [vmem:[%s15 + $0x30] sm:$0xff]
    %v2806 = vld [vmem:[%s15 + $0x38] sm:$0xff]
    %v2807 = vld [vmem:[%s15 + $0x40] sm:$0xff]
    %v2808 = vld [vmem:[%s15 + $0x48] sm:$0xff]
    %v2809 = vld [vmem:[%s15 + $0x50] sm:$0xff]
    %v2810 = vld [vmem:[%s15 + $0x58] sm:$0xff]
    %v2811 = vld [vmem:[%s15 + $0x60] sm:$0xff]
    %v2812 = vld [vmem:[%s15 + $0x68] sm:$0xff]
    %v2813 = vld [vmem:[%s15 + $0x70] sm:$0xff]
    %v2814 = vld [vmem:[%s15 + $0x78] sm:$0xff]
    %v2815 = vld [vmem:[%s15 + $0x80] sm:$0xff]
    %v2816 = vld [vmem:[%s15 + $0x88] sm:$0xff]
    %v2817 = vld [vmem:[%s15 + $0x90] sm:$0xff]
    %v2818 = vld [vmem:[%s15 + $0x98] sm:$0xff]
    %v2819 = vld [vmem:[%s15 + $0xa0] sm:$0xff]
    %v2820 = vld [vmem:[%s15 + $0xa8] sm:$0xff]
    %v2821 = vld [vmem:[%s15 + $0xb0] sm:$0xff]
    %v2822 = vld [vmem:[%s15 + $0xb8] sm:$0xff]
    %v2823 = vld [vmem:[%s15 + $0xc0] sm:$0xff]
    %v2824 = vld [vmem:[%s15 + $0xc8] sm:$0xff]
    %v2825 = vld [vmem:[%s15 + $0xd0] sm:$0xff]
    %v2826 = vld [vmem:[%s15 + $0xd8] sm:$0xff]
    %v2827 = vld [vmem:[%s15 + $0xe0] sm:$0xff]
    %v2828 = vld [vmem:[%s15 + $0xe8] sm:$0xff]
    %v2829 = vld [vmem:[%s15 + $0xf0] sm:$0xff]
    %v2830 = vld [vmem:[%s15 + $0xf8] sm:$0xff]
    %v2831 = vld [vmem:[%s15 + $0x100] sm:$0xff]
    %v2832 = vld [vmem:[%s15 + $0x108] sm:$0xff]
    %v2833 = vld [vmem:[%s15 + $0x110] sm:$0xff]
    %v2834 = vld [vmem:[%s15 + $0x118] sm:$0xff]
    %v2835 = vld [vmem:[%s15 + $0x120] sm:$0xff]
    %v2836 = vld [vmem:[%s15 + $0x128] sm:$0xff]
    %v2837 = vld [vmem:[%s15 + $0x130] sm:$0xff]
    %v2838 = vld [vmem:[%s15 + $0x138] sm:$0xff]
    %v2839 = vld [vmem:[%s15 + $0x140] sm:$0xff]
    %v2840 = vld [vmem:[%s15 + $0x148] sm:$0xff]
    %v2841 = vld [vmem:[%s15 + $0x150] sm:$0xff]
    %v2842 = vld [vmem:[%s15 + $0x158] sm:$0xff]
    %v2843 = vld [vmem:[%s15 + $0x160] sm:$0xff]
    %v2844 = vld [vmem:[%s15 + $0x168] sm:$0xff]
    %v2845 = vld [vmem:[%s15 + $0x170] sm:$0xff]
    %v2846 = vld [vmem:[%s15 + $0x178] sm:$0xff]
    %v2847 = vld [vmem:[%s15 + $0x180] sm:$0xff]
    %v2848 = vld [vmem:[%s15 + $0x188] sm:$0xff]
    %v2849 = vld [vmem:[%s15 + $0x190] sm:$0xff]
    %v2850 = vld [vmem:[%s15 + $0x198] sm:$0xff]
    %v2851 = vld [vmem:[%s15 + $0x1a0] sm:$0xff]
    %v2852 = vld [vmem:[%s15 + $0x1a8] sm:$0xff]
    %v2853 = vld [vmem:[%s15 + $0x1b0] sm:$0xff]
    %v2854 = vld [vmem:[%s15 + $0x1b8] sm:$0xff]
    %v2855 = vld [vmem:[%s15 + $0x1c0] sm:$0xff]
    %v2856 = vld [vmem:[%s15 + $0x1c8] sm:$0xff]
    %v2857 = vld [vmem:[%s15 + $0x1d0] sm:$0xff]
    %v2858 = vld [vmem:[%s15 + $0x1d8] sm:$0xff]
    %v2859 = vld [vmem:[%s15 + $0x1e0] sm:$0xff]
    %v2860 = vld [vmem:[%s15 + $0x1e8] sm:$0xff]
    %v2861 = vld [vmem:[%s15 + $0x1f0] sm:$0xff]
    %v2862 = vld [vmem:[%s15 + $0x1f8] sm:$0xff]
    %v2863 = vld [vmem:[%s16] sm:$0xf]
    %v2865 = vlaneseq
    %v2866 = vshrl.u32 %v2865, 7
    %v2867 = vsub.s32 0, %v2866
    %v2868 = vrot.slane %v2863, %v2867
    %v2869 = vlaneseq
    %v2870 = vshrl.u32 %v2869, 7
    %v2871 = vsub.s32 1, %v2870
    %v2872 = vrot.slane %v2863, %v2871
    %v2873 = vlaneseq
    %v2874 = vshrl.u32 %v2873, 7
    %v2875 = vsub.s32 2, %v2874
    %v2876 = vrot.slane %v2863, %v2875
    %v2877 = vlaneseq
    %v2878 = vshrl.u32 %v2877, 7
    %v2879 = vsub.s32 3, %v2878
    %v2880 = vrot.slane %v2863, %v2879
    %v2949 = vunpack.c.l.b16 %v2799
    %v2950 = vunpack.c.h.b16 %v2799
    %v2951 = vunpack.c.l.b16 %v2800
    %v2952 = vunpack.c.h.b16 %v2800
    %v2953 = vunpack.c.l.b16 %v2801
    %v2954 = vunpack.c.h.b16 %v2801
    %v2955 = vunpack.c.l.b16 %v2802
    %v2956 = vunpack.c.h.b16 %v2802
    %v2957 = vunpack.c.l.b16 %v2803
    %v2958 = vunpack.c.h.b16 %v2803
    %v2959 = vunpack.c.l.b16 %v2804
    %v2960 = vunpack.c.h.b16 %v2804
    %v2961 = vunpack.c.l.b16 %v2805
    %v2962 = vunpack.c.h.b16 %v2805
    %v2963 = vunpack.c.l.b16 %v2806
    %v2964 = vunpack.c.h.b16 %v2806
    %v2965 = vunpack.c.l.b16 %v2807
    %v2966 = vunpack.c.h.b16 %v2807
    %v2967 = vunpack.c.l.b16 %v2808
    %v2968 = vunpack.c.h.b16 %v2808
    %v2969 = vunpack.c.l.b16 %v2809
    %v2970 = vunpack.c.h.b16 %v2809
    %v2971 = vunpack.c.l.b16 %v2810
    %v2972 = vunpack.c.h.b16 %v2810
    %v2973 = vunpack.c.l.b16 %v2811
    %v2974 = vunpack.c.h.b16 %v2811
    %v2975 = vunpack.c.l.b16 %v2812
    %v2976 = vunpack.c.h.b16 %v2812
    %v2977 = vunpack.c.l.b16 %v2813
    %v2978 = vunpack.c.h.b16 %v2813
    %v2979 = vunpack.c.l.b16 %v2814
    %v2980 = vunpack.c.h.b16 %v2814
    %v2981 = vunpack.c.l.b16 %v2815
    %v2982 = vunpack.c.h.b16 %v2815
    %v2983 = vunpack.c.l.b16 %v2816
    %v2984 = vunpack.c.h.b16 %v2816
    %v2985 = vunpack.c.l.b16 %v2817
    %v2986 = vunpack.c.h.b16 %v2817
    %v2987 = vunpack.c.l.b16 %v2818
    %v2988 = vunpack.c.h.b16 %v2818
    %v2989 = vunpack.c.l.b16 %v2819
    %v2990 = vunpack.c.h.b16 %v2819
    %v2991 = vunpack.c.l.b16 %v2820
    %v2992 = vunpack.c.h.b16 %v2820
    %v2993 = vunpack.c.l.b16 %v2821
    %v2994 = vunpack.c.h.b16 %v2821
    %v2995 = vunpack.c.l.b16 %v2822
    %v2996 = vunpack.c.h.b16 %v2822
    %v2997 = vunpack.c.l.b16 %v2823
    %v2998 = vunpack.c.h.b16 %v2823
    %v2999 = vunpack.c.l.b16 %v2824
    %v3000 = vunpack.c.h.b16 %v2824
    %v3001 = vunpack.c.l.b16 %v2825
    %v3002 = vunpack.c.h.b16 %v2825
    %v3003 = vunpack.c.l.b16 %v2826
    %v3004 = vunpack.c.h.b16 %v2826
    %v3005 = vunpack.c.l.b16 %v2827
    %v3006 = vunpack.c.h.b16 %v2827
    %v3007 = vunpack.c.l.b16 %v2828
    %v3008 = vunpack.c.h.b16 %v2828
    %v3009 = vunpack.c.l.b16 %v2829
    %v3010 = vunpack.c.h.b16 %v2829
    %v3011 = vunpack.c.l.b16 %v2830
    %v3012 = vunpack.c.h.b16 %v2830
    %v3013 = vunpack.c.l.b16 %v2831
    %v3014 = vunpack.c.h.b16 %v2831
    %v3015 = vunpack.c.l.b16 %v2832
    %v3016 = vunpack.c.h.b16 %v2832
    %v3017 = vunpack.c.l.b16 %v2833
    %v3018 = vunpack.c.h.b16 %v2833
    %v3019 = vunpack.c.l.b16 %v2834
    %v3020 = vunpack.c.h.b16 %v2834
    %v3021 = vunpack.c.l.b16 %v2835
    %v3022 = vunpack.c.h.b16 %v2835
    %v3023 = vunpack.c.l.b16 %v2836
    %v3024 = vunpack.c.h.b16 %v2836
    %v3025 = vunpack.c.l.b16 %v2837
    %v3026 = vunpack.c.h.b16 %v2837
    %v3027 = vunpack.c.l.b16 %v2838
    %v3028 = vunpack.c.h.b16 %v2838
    %v3029 = vunpack.c.l.b16 %v2839
    %v3030 = vunpack.c.h.b16 %v2839
    %v3031 = vunpack.c.l.b16 %v2840
    %v3032 = vunpack.c.h.b16 %v2840
    %v3033 = vunpack.c.l.b16 %v2841
    %v3034 = vunpack.c.h.b16 %v2841
    %v3035 = vunpack.c.l.b16 %v2842
    %v3036 = vunpack.c.h.b16 %v2842
    %v3037 = vunpack.c.l.b16 %v2843
    %v3038 = vunpack.c.h.b16 %v2843
    %v3039 = vunpack.c.l.b16 %v2844
    %v3040 = vunpack.c.h.b16 %v2844
    %v3041 = vunpack.c.l.b16 %v2845
    %v3042 = vunpack.c.h.b16 %v2845
    %v3043 = vunpack.c.l.b16 %v2846
    %v3044 = vunpack.c.h.b16 %v2846
    %v3045 = vunpack.c.l.b16 %v2847
    %v3046 = vunpack.c.h.b16 %v2847
    %v3047 = vunpack.c.l.b16 %v2848
    %v3048 = vunpack.c.h.b16 %v2848
    %v3049 = vunpack.c.l.b16 %v2849
    %v3050 = vunpack.c.h.b16 %v2849
    %v3051 = vunpack.c.l.b16 %v2850
    %v3052 = vunpack.c.h.b16 %v2850
    %v3053 = vunpack.c.l.b16 %v2851
    %v3054 = vunpack.c.h.b16 %v2851
    %v3055 = vunpack.c.l.b16 %v2852
    %v3056 = vunpack.c.h.b16 %v2852
    %v3057 = vunpack.c.l.b16 %v2853
    %v3058 = vunpack.c.h.b16 %v2853
    %v3059 = vunpack.c.l.b16 %v2854
    %v3060 = vunpack.c.h.b16 %v2854
    %v3061 = vunpack.c.l.b16 %v2855
    %v3062 = vunpack.c.h.b16 %v2855
    %v3063 = vunpack.c.l.b16 %v2856
    %v3064 = vunpack.c.h.b16 %v2856
    %v3065 = vunpack.c.l.b16 %v2857
    %v3066 = vunpack.c.h.b16 %v2857
    %v3067 = vunpack.c.l.b16 %v2858
    %v3068 = vunpack.c.h.b16 %v2858
    %v3069 = vunpack.c.l.b16 %v2859
    %v3070 = vunpack.c.h.b16 %v2859
    %v3071 = vunpack.c.l.b16 %v2860
    %v3072 = vunpack.c.h.b16 %v2860
    %v3073 = vunpack.c.l.b16 %v2861
    %v3074 = vunpack.c.h.b16 %v2861
    %v3075 = vunpack.c.l.b16 %v2862
    %v3076 = vunpack.c.h.b16 %v2862
    %v3077 = vpack.c.b16 %v2953, %v2949
    %v3078 = vpack.c.b16 %v2954, %v2950
    %v3079 = vpack.c.b16 %v2955, %v2951
    %v3080 = vpack.c.b16 %v2956, %v2952
    %v3081 = vpack.c.b16 %v2961, %v2957
    %v3082 = vpack.c.b16 %v2962, %v2958
    %v3083 = vpack.c.b16 %v2963, %v2959
    %v3084 = vpack.c.b16 %v2964, %v2960
    %v3085 = vpack.c.b16 %v2969, %v2965
    %v3086 = vpack.c.b16 %v2970, %v2966
    %v3087 = vpack.c.b16 %v2971, %v2967
    %v3088 = vpack.c.b16 %v2972, %v2968
    %v3089 = vpack.c.b16 %v2977, %v2973
    %v3090 = vpack.c.b16 %v2978, %v2974
    %v3091 = vpack.c.b16 %v2979, %v2975
    %v3092 = vpack.c.b16 %v2980, %v2976
    %v3093 = vpack.c.b16 %v2985, %v2981
    %v3094 = vpack.c.b16 %v2986, %v2982
    %v3095 = vpack.c.b16 %v2987, %v2983
    %v3096 = vpack.c.b16 %v2988, %v2984
    %v3097 = vpack.c.b16 %v2993, %v2989
    %v3098 = vpack.c.b16 %v2994, %v2990
    %v3099 = vpack.c.b16 %v2995, %v2991
    %v3100 = vpack.c.b16 %v2996, %v2992
    %v3101 = vpack.c.b16 %v3001, %v2997
    %v3102 = vpack.c.b16 %v3002, %v2998
    %v3103 = vpack.c.b16 %v3003, %v2999
    %v3104 = vpack.c.b16 %v3004, %v3000
    %v3105 = vpack.c.b16 %v3009, %v3005
    %v3106 = vpack.c.b16 %v3010, %v3006
    %v3107 = vpack.c.b16 %v3011, %v3007
    %v3108 = vpack.c.b16 %v3012, %v3008
    %v3109 = vpack.c.b16 %v3017, %v3013
    %v3110 = vpack.c.b16 %v3018, %v3014
    %v3111 = vpack.c.b16 %v3019, %v3015
    %v3112 = vpack.c.b16 %v3020, %v3016
    %v3113 = vpack.c.b16 %v3025, %v3021
    %v3114 = vpack.c.b16 %v3026, %v3022
    %v3115 = vpack.c.b16 %v3027, %v3023
    %v3116 = vpack.c.b16 %v3028, %v3024
    %v3117 = vpack.c.b16 %v3033, %v3029
    %v3118 = vpack.c.b16 %v3034, %v3030
    %v3119 = vpack.c.b16 %v3035, %v3031
    %v3120 = vpack.c.b16 %v3036, %v3032
    %v3121 = vpack.c.b16 %v3041, %v3037
    %v3122 = vpack.c.b16 %v3042, %v3038
    %v3123 = vpack.c.b16 %v3043, %v3039
    %v3124 = vpack.c.b16 %v3044, %v3040
    %v3125 = vpack.c.b16 %v3049, %v3045
    %v3126 = vpack.c.b16 %v3050, %v3046
    %v3127 = vpack.c.b16 %v3051, %v3047
    %v3128 = vpack.c.b16 %v3052, %v3048
    %v3129 = vpack.c.b16 %v3057, %v3053
    %v3130 = vpack.c.b16 %v3058, %v3054
    %v3131 = vpack.c.b16 %v3059, %v3055
    %v3132 = vpack.c.b16 %v3060, %v3056
    %v3133 = vpack.c.b16 %v3065, %v3061
    %v3134 = vpack.c.b16 %v3066, %v3062
    %v3135 = vpack.c.b16 %v3067, %v3063
    %v3136 = vpack.c.b16 %v3068, %v3064
    %v3137 = vpack.c.b16 %v3073, %v3069
    %v3138 = vpack.c.b16 %v3074, %v3070
    %v3139 = vpack.c.b16 %v3075, %v3071
    %v3140 = vpack.c.b16 %v3076, %v3072
    %3205 = vmatprep.subr.bf16.mxu0 %v3078
    %3206 = vmatpush1.bf16.msra.mxu0 %v3077
    %3207 = vmatprep.subr.bf16.mxu0 %v3082
    %3208 = vmatpush1.bf16.msra.mxu0 %v3081
    %3209 = vmatprep.subr.bf16.mxu0 %v3086
    %3210 = vmatpush1.bf16.msra.mxu0 %v3085
    %3211 = vmatprep.subr.bf16.mxu0 %v3090
    %3212 = vmatpush1.bf16.msra.mxu0 %v3089
    %3213 = vmatprep.subr.bf16.mxu0 %v3094
    %3214 = vmatpush1.bf16.msra.mxu0 %v3093
    %3215 = vmatprep.subr.bf16.mxu0 %v3098
    %3216 = vmatpush1.bf16.msra.mxu0 %v3097
    %3217 = vmatprep.subr.bf16.mxu0 %v3102
    %3218 = vmatpush1.bf16.msra.mxu0 %v3101
    %3219 = vmatprep.subr.bf16.mxu0 %v3106
    %3220 = vmatpush1.bf16.msra.mxu0 %v3105
    %3221 = vmatprep.subr.bf16.mxu0 %v3110
    %3222 = vmatpush1.bf16.msra.mxu0 %v3109
    %3223 = vmatprep.subr.bf16.mxu0 %v3114
    %3224 = vmatpush1.bf16.msra.mxu0 %v3113
    %3225 = vmatprep.subr.bf16.mxu0 %v3118
    %3226 = vmatpush1.bf16.msra.mxu0 %v3117
    %3227 = vmatprep.subr.bf16.mxu0 %v3122
    %3228 = vmatpush1.bf16.msra.mxu0 %v3121
    %3229 = vmatprep.subr.bf16.mxu0 %v3126
    %3230 = vmatpush1.bf16.msra.mxu0 %v3125
    %3231 = vmatprep.subr.bf16.mxu0 %v3130
    %3232 = vmatpush1.bf16.msra.mxu0 %v3129
    %3233 = vmatprep.subr.bf16.mxu0 %v3134
    %3234 = vmatpush1.bf16.msra.mxu0 %v3133
    %3235 = vmatprep.subr.bf16.mxu0 %v3138
    %3236 = vmatpush1.bf16.msra.mxu0 %v3137
    %3237 = vmatprep.mubr.bf16.mxu0 %v2798
    %3238 = vmatmul.mubr.bf16.gmra.mrb[0].mxu0 %v2797
    %v3239 = vpop.f32.mrb[0].mxu0
    %v3240 = vadd.f32 %v2868, %v3239
    %v3241 = vpop.f32.mrb[0].mxu0
    %v3242 = vadd.f32 %v2872, %v3241
    %v3243 = vpop.f32.mrb[0].mxu0
    %v3244 = vpop.f32.mrb[0].mxu0
    %3245 = vdwg.mxu0
    %3246 = vmatprep.subr.bf16.mxu0 %v3080
    %3247 = vmatpush1.bf16.msra.mxu0 %v3079
    %3248 = vmatprep.subr.bf16.mxu0 %v3084
    %3249 = vmatpush1.bf16.msra.mxu0 %v3083
    %3250 = vmatprep.subr.bf16.mxu0 %v3088
    %3251 = vmatpush1.bf16.msra.mxu0 %v3087
    %3252 = vmatprep.subr.bf16.mxu0 %v3092
    %3253 = vmatpush1.bf16.msra.mxu0 %v3091
    %3254 = vmatprep.subr.bf16.mxu0 %v3096
    %3255 = vmatpush1.bf16.msra.mxu0 %v3095
    %3256 = vmatprep.subr.bf16.mxu0 %v3100
    %3257 = vmatpush1.bf16.msra.mxu0 %v3099
    %3258 = vmatprep.subr.bf16.mxu0 %v3104
    %3259 = vmatpush1.bf16.msra.mxu0 %v3103
    %3260 = vmatprep.subr.bf16.mxu0 %v3108
    %3261 = vmatpush1.bf16.msra.mxu0 %v3107
    %3262 = vmatprep.subr.bf16.mxu0 %v3112
    %3263 = vmatpush1.bf16.msra.mxu0 %v3111
    %3264 = vmatprep.subr.bf16.mxu0 %v3116
    %3265 = vmatpush1.bf16.msra.mxu0 %v3115
    %3266 = vmatprep.subr.bf16.mxu0 %v3120
    %3267 = vmatpush1.bf16.msra.mxu0 %v3119
    %3268 = vmatprep.subr.bf16.mxu0 %v3124
    %3269 = vmatpush1.bf16.msra.mxu0 %v3123
    %3270 = vmatprep.subr.bf16.mxu0 %v3128
    %3271 = vmatpush1.bf16.msra.mxu0 %v3127
    %3272 = vmatprep.subr.bf16.mxu0 %v3132
    %3273 = vmatpush1.bf16.msra.mxu0 %v3131
    %3274 = vmatprep.subr.bf16.mxu0 %v3136
    %3275 = vmatpush1.bf16.msra.mxu0 %v3135
    %3276 = vmatprep.subr.bf16.mxu0 %v3140
    %3277 = vmatpush1.bf16.msra.mxu0 %v3139
    %3278 = vmatprep.mubr.bf16.mxu0 %v2798
    %3279 = vmatmul.mubr.bf16.gmra.mrb[0].mxu0 %v2797
    %v3280 = vpop.f32.mrb[0].mxu0
    %v3281 = vadd.f32 %v2876, %v3280
    %v3282 = vpop.f32.mrb[0].mxu0
    %v3283 = vadd.f32 %v2880, %v3282
    %v3284 = vpop.f32.mrb[0].mxu0
    %v3285 = vpop.f32.mrb[0].mxu0
    %3286 = vdwg.mxu0
    %v3287 = vmul.f32 %v3240, 0.1
    %v3288 = vmul.f32 %v3242, 0.1
    %v3289 = vmul.f32 %v3281, 0.1
    %v3290 = vmul.f32 %v3283, 0.1
    %v3291 = vmax.f32 %v3240, %v3287
    %v3292 = vmax.f32 %v3242, %v3288
    %v3293 = vmax.f32 %v3281, %v3289
    %v3294 = vmax.f32 %v3283, %v3290
    %v3295 = vpack.c.bf16 %v3291, %v3291
    %v3296 = vpack.c.bf16 %v3292, %v3292
    %v3297 = vpack.c.bf16 %v3293, %v3293
    %v3298 = vpack.c.bf16 %v3294, %v3294
    %v3299 = vld [vmem:[%s17] sm:$0xff]
    %v3300 = vld [vmem:[%s17 + $0x8] sm:$0xff]
    %v3301 = vld [vmem:[%s17 + $0x10] sm:$0xff]
    %v3302 = vld [vmem:[%s17 + $0x18] sm:$0xf]
    %v3303 = vld [vmem:[%s17 + $0x1c] sm:$0xff]
    %v3304 = vld [vmem:[%s17 + $0x24] sm:$0xff]
    %v3305 = vld [vmem:[%s17 + $0x2c] sm:$0xff]
    %v3306 = vld [vmem:[%s17 + $0x34] sm:$0xf]
    %v3307 = vld [vmem:[%s17 + $0x38] sm:$0xff]
    %v3308 = vld [vmem:[%s17 + $0x40] sm:$0xff]
    %v3309 = vld [vmem:[%s17 + $0x48] sm:$0xff]
    %v3310 = vld [vmem:[%s17 + $0x50] sm:$0xf]
    %v3311 = vld [vmem:[%s17 + $0x54] sm:$0xff]
    %v3312 = vld [vmem:[%s17 + $0x5c] sm:$0xff]
    %v3313 = vld [vmem:[%s17 + $0x64] sm:$0xff]
    %v3314 = vld [vmem:[%s17 + $0x6c] sm:$0xf]
    %v3315 = vld [vmem:[%s17 + $0x70] sm:$0xff]
    %v3316 = vld [vmem:[%s17 + $0x78] sm:$0xff]
    %v3317 = vld [vmem:[%s17 + $0x80] sm:$0xff]
    %v3318 = vld [vmem:[%s17 + $0x88] sm:$0xf]
    %v3319 = vld [vmem:[%s17 + $0x8c] sm:$0xff]
    %v3320 = vld [vmem:[%s17 + $0x94] sm:$0xff]
    %v3321 = vld [vmem:[%s17 + $0x9c] sm:$0xff]
    %v3322 = vld [vmem:[%s17 + $0xa4] sm:$0xf]
    %v3323 = vld [vmem:[%s17 + $0xa8] sm:$0xff]
    %v3324 = vld [vmem:[%s17 + $0xb0] sm:$0xff]
    %v3325 = vld [vmem:[%s17 + $0xb8] sm:$0xff]
    %v3326 = vld [vmem:[%s17 + $0xc0] sm:$0xf]
    %v3327 = vld [vmem:[%s17 + $0xc4] sm:$0xff]
    %v3328 = vld [vmem:[%s17 + $0xcc] sm:$0xff]
    %v3329 = vld [vmem:[%s17 + $0xd4] sm:$0xff]
    %v3330 = vld [vmem:[%s17 + $0xdc] sm:$0xf]
    %v3331 = vld [vmem:[%s17 + $0xe0] sm:$0xff]
    %v3332 = vld [vmem:[%s17 + $0xe8] sm:$0xff]
    %v3333 = vld [vmem:[%s17 + $0xf0] sm:$0xff]
    %v3334 = vld [vmem:[%s17 + $0xf8] sm:$0xf]
    %v3335 = vld [vmem:[%s17 + $0xfc] sm:$0xff]
    %v3336 = vld [vmem:[%s17 + $0x104] sm:$0xff]
    %v3337 = vld [vmem:[%s17 + $0x10c] sm:$0xff]
    %v3338 = vld [vmem:[%s17 + $0x114] sm:$0xf]
    %v3339 = vld [vmem:[%s17 + $0x118] sm:$0xff]
    %v3340 = vld [vmem:[%s17 + $0x120] sm:$0xff]
    %v3341 = vld [vmem:[%s17 + $0x128] sm:$0xff]
    %v3342 = vld [vmem:[%s17 + $0x130] sm:$0xf]
    %v3343 = vld [vmem:[%s17 + $0x134] sm:$0xff]
    %v3344 = vld [vmem:[%s17 + $0x13c] sm:$0xff]
    %v3345 = vld [vmem:[%s17 + $0x144] sm:$0xff]
    %v3346 = vld [vmem:[%s17 + $0x14c] sm:$0xf]
    %v3347 = vld [vmem:[%s17 + $0x150] sm:$0xff]
    %v3348 = vld [vmem:[%s17 + $0x158] sm:$0xff]
    %v3349 = vld [vmem:[%s17 + $0x160] sm:$0xff]
    %v3350 = vld [vmem:[%s17 + $0x168] sm:$0xf]
    %v3351 = vld [vmem:[%s17 + $0x16c] sm:$0xff]
    %v3352 = vld [vmem:[%s17 + $0x174] sm:$0xff]
    %v3353 = vld [vmem:[%s17 + $0x17c] sm:$0xff]
    %v3354 = vld [vmem:[%s17 + $0x184] sm:$0xf]
    %v3355 = vld [vmem:[%s17 + $0x188] sm:$0xff]
    %v3356 = vld [vmem:[%s17 + $0x190] sm:$0xff]
    %v3357 = vld [vmem:[%s17 + $0x198] sm:$0xff]
    %v3358 = vld [vmem:[%s17 + $0x1a0] sm:$0xf]
    %v3359 = vld [vmem:[%s17 + $0x1a4] sm:$0xff]
    %v3360 = vld [vmem:[%s17 + $0x1ac] sm:$0xff]
    %v3361 = vld [vmem:[%s17 + $0x1b4] sm:$0xff]
    %v3362 = vld [vmem:[%s17 + $0x1bc] sm:$0xf]
    %v3363 = vld [vmem:[%s17 + $0x1c0] sm:$0xff]
    %v3364 = vld [vmem:[%s17 + $0x1c8] sm:$0xff]
    %v3365 = vld [vmem:[%s17 + $0x1d0] sm:$0xff]
    %v3366 = vld [vmem:[%s17 + $0x1d8] sm:$0xf]
    %v3367 = vld [vmem:[%s17 + $0x1dc] sm:$0xff]
    %v3368 = vld [vmem:[%s17 + $0x1e4] sm:$0xff]
    %v3369 = vld [vmem:[%s17 + $0x1ec] sm:$0xff]
    %v3370 = vld [vmem:[%s17 + $0x1f4] sm:$0xf]
    %v3371 = vld [vmem:[%s17 + $0x1f8] sm:$0xff]
    %v3372 = vld [vmem:[%s17 + $0x200] sm:$0xff]
    %v3373 = vld [vmem:[%s17 + $0x208] sm:$0xff]
    %v3374 = vld [vmem:[%s17 + $0x210] sm:$0xf]
    %v3375 = vld [vmem:[%s17 + $0x214] sm:$0xff]
    %v3376 = vld [vmem:[%s17 + $0x21c] sm:$0xff]
    %v3377 = vld [vmem:[%s17 + $0x224] sm:$0xff]
    %v3378 = vld [vmem:[%s17 + $0x22c] sm:$0xf]
    %v3379 = vld [vmem:[%s17 + $0x230] sm:$0xff]
    %v3380 = vld [vmem:[%s17 + $0x238] sm:$0xff]
    %v3381 = vld [vmem:[%s17 + $0x240] sm:$0xff]
    %v3382 = vld [vmem:[%s17 + $0x248] sm:$0xf]
    %v3383 = vld [vmem:[%s17 + $0x24c] sm:$0xff]
    %v3384 = vld [vmem:[%s17 + $0x254] sm:$0xff]
    %v3385 = vld [vmem:[%s17 + $0x25c] sm:$0xff]
    %v3386 = vld [vmem:[%s17 + $0x264] sm:$0xf]
    %v3387 = vld [vmem:[%s17 + $0x268] sm:$0xff]
    %v3388 = vld [vmem:[%s17 + $0x270] sm:$0xff]
    %v3389 = vld [vmem:[%s17 + $0x278] sm:$0xff]
    %v3390 = vld [vmem:[%s17 + $0x280] sm:$0xf]
    %v3391 = vld [vmem:[%s17 + $0x284] sm:$0xff]
    %v3392 = vld [vmem:[%s17 + $0x28c] sm:$0xff]
    %v3393 = vld [vmem:[%s17 + $0x294] sm:$0xff]
    %v3394 = vld [vmem:[%s17 + $0x29c] sm:$0xf]
    %v3395 = vld [vmem:[%s17 + $0x2a0] sm:$0xff]
    %v3396 = vld [vmem:[%s17 + $0x2a8] sm:$0xff]
    %v3397 = vld [vmem:[%s17 + $0x2b0] sm:$0xff]
    %v3398 = vld [vmem:[%s17 + $0x2b8] sm:$0xf]
    %v3399 = vld [vmem:[%s17 + $0x2bc] sm:$0xff]
    %v3400 = vld [vmem:[%s17 + $0x2c4] sm:$0xff]
    %v3401 = vld [vmem:[%s17 + $0x2cc] sm:$0xff]
    %v3402 = vld [vmem:[%s17 + $0x2d4] sm:$0xf]
    %v3403 = vld [vmem:[%s17 + $0x2d8] sm:$0xff]
    %v3404 = vld [vmem:[%s17 + $0x2e0] sm:$0xff]
    %v3405 = vld [vmem:[%s17 + $0x2e8] sm:$0xff]
    %v3406 = vld [vmem:[%s17 + $0x2f0] sm:$0xf]
    %v3407 = vld [vmem:[%s17 + $0x2f4] sm:$0xff]
    %v3408 = vld [vmem:[%s17 + $0x2fc] sm:$0xff]
    %v3409 = vld [vmem:[%s17 + $0x304] sm:$0xff]
    %v3410 = vld [vmem:[%s17 + $0x30c] sm:$0xf]
    %v3411 = vld [vmem:[%s17 + $0x310] sm:$0xff]
    %v3412 = vld [vmem:[%s17 + $0x318] sm:$0xff]
    %v3413 = vld [vmem:[%s17 + $0x320] sm:$0xff]
    %v3414 = vld [vmem:[%s17 + $0x328] sm:$0xf]
    %v3415 = vld [vmem:[%s17 + $0x32c] sm:$0xff]
    %v3416 = vld [vmem:[%s17 + $0x334] sm:$0xff]
    %v3417 = vld [vmem:[%s17 + $0x33c] sm:$0xff]
    %v3418 = vld [vmem:[%s17 + $0x344] sm:$0xf]
    %v3419 = vld [vmem:[%s17 + $0x348] sm:$0xff]
    %v3420 = vld [vmem:[%s17 + $0x350] sm:$0xff]
    %v3421 = vld [vmem:[%s17 + $0x358] sm:$0xff]
    %v3422 = vld [vmem:[%s17 + $0x360] sm:$0xf]
    %v3423 = vld [vmem:[%s17 + $0x364] sm:$0xff]
    %v3424 = vld [vmem:[%s17 + $0x36c] sm:$0xff]
    %v3425 = vld [vmem:[%s17 + $0x374] sm:$0xff]
    %v3426 = vld [vmem:[%s17 + $0x37c] sm:$0xf]
    %v3427 = vld [vmem:[%s17 + $0x380] sm:$0xff]
    %v3428 = vld [vmem:[%s17 + $0x388] sm:$0xff]
    %v3429 = vld [vmem:[%s17 + $0x390] sm:$0xff]
    %v3430 = vld [vmem:[%s17 + $0x398] sm:$0xf]
    %v3431 = vld [vmem:[%s17 + $0x39c] sm:$0xff]
    %v3432 = vld [vmem:[%s17 + $0x3a4] sm:$0xff]
    %v3433 = vld [vmem:[%s17 + $0x3ac] sm:$0xff]
    %v3434 = vld [vmem:[%s17 + $0x3b4] sm:$0xf]
    %v3435 = vld [vmem:[%s17 + $0x3b8] sm:$0xff]
    %v3436 = vld [vmem:[%s17 + $0x3c0] sm:$0xff]
    %v3437 = vld [vmem:[%s17 + $0x3c8] sm:$0xff]
    %v3438 = vld [vmem:[%s17 + $0x3d0] sm:$0xf]
    %v3439 = vld [vmem:[%s17 + $0x3d4] sm:$0xff]
    %v3440 = vld [vmem:[%s17 + $0x3dc] sm:$0xff]
    %v3441 = vld [vmem:[%s17 + $0x3e4] sm:$0xff]
    %v3442 = vld [vmem:[%s17 + $0x3ec] sm:$0xf]
    %v3443 = vld [vmem:[%s17 + $0x3f0] sm:$0xff]
    %v3444 = vld [vmem:[%s17 + $0x3f8] sm:$0xff]
    %v3445 = vld [vmem:[%s17 + $0x400] sm:$0xff]
    %v3446 = vld [vmem:[%s17 + $0x408] sm:$0xf]
    %v3447 = vld [vmem:[%s17 + $0x40c] sm:$0xff]
    %v3448 = vld [vmem:[%s17 + $0x414] sm:$0xff]
    %v3449 = vld [vmem:[%s17 + $0x41c] sm:$0xff]
    %v3450 = vld [vmem:[%s17 + $0x424] sm:$0xf]
    %v3451 = vld [vmem:[%s17 + $0x428] sm:$0xff]
    %v3452 = vld [vmem:[%s17 + $0x430] sm:$0xff]
    %v3453 = vld [vmem:[%s17 + $0x438] sm:$0xff]
    %v3454 = vld [vmem:[%s17 + $0x440] sm:$0xf]
    %v3455 = vld [vmem:[%s17 + $0x444] sm:$0xff]
    %v3456 = vld [vmem:[%s17 + $0x44c] sm:$0xff]
    %v3457 = vld [vmem:[%s17 + $0x454] sm:$0xff]
    %v3458 = vld [vmem:[%s17 + $0x45c] sm:$0xf]
    %v3459 = vld [vmem:[%s17 + $0x460] sm:$0xff]
    %v3460 = vld [vmem:[%s17 + $0x468] sm:$0xff]
    %v3461 = vld [vmem:[%s17 + $0x470] sm:$0xff]
    %v3462 = vld [vmem:[%s17 + $0x478] sm:$0xf]
    %v3463 = vld [vmem:[%s17 + $0x47c] sm:$0xff]
    %v3464 = vld [vmem:[%s17 + $0x484] sm:$0xff]
    %v3465 = vld [vmem:[%s17 + $0x48c] sm:$0xff]
    %v3466 = vld [vmem:[%s17 + $0x494] sm:$0xf]
    %v3467 = vld [vmem:[%s17 + $0x498] sm:$0xff]
    %v3468 = vld [vmem:[%s17 + $0x4a0] sm:$0xff]
    %v3469 = vld [vmem:[%s17 + $0x4a8] sm:$0xff]
    %v3470 = vld [vmem:[%s17 + $0x4b0] sm:$0xf]
    %v3471 = vld [vmem:[%s17 + $0x4b4] sm:$0xff]
    %v3472 = vld [vmem:[%s17 + $0x4bc] sm:$0xff]
    %v3473 = vld [vmem:[%s17 + $0x4c4] sm:$0xff]
    %v3474 = vld [vmem:[%s17 + $0x4cc] sm:$0xf]
    %v3475 = vld [vmem:[%s17 + $0x4d0] sm:$0xff]
    %v3476 = vld [vmem:[%s17 + $0x4d8] sm:$0xff]
    %v3477 = vld [vmem:[%s17 + $0x4e0] sm:$0xff]
    %v3478 = vld [vmem:[%s17 + $0x4e8] sm:$0xf]
    %v3479 = vld [vmem:[%s17 + $0x4ec] sm:$0xff]
    %v3480 = vld [vmem:[%s17 + $0x4f4] sm:$0xff]
    %v3481 = vld [vmem:[%s17 + $0x4fc] sm:$0xff]
    %v3482 = vld [vmem:[%s17 + $0x504] sm:$0xf]
    %v3483 = vld [vmem:[%s17 + $0x508] sm:$0xff]
    %v3484 = vld [vmem:[%s17 + $0x510] sm:$0xff]
    %v3485 = vld [vmem:[%s17 + $0x518] sm:$0xff]
    %v3486 = vld [vmem:[%s17 + $0x520] sm:$0xf]
    %v3487 = vld [vmem:[%s17 + $0x524] sm:$0xff]
    %v3488 = vld [vmem:[%s17 + $0x52c] sm:$0xff]
    %v3489 = vld [vmem:[%s17 + $0x534] sm:$0xff]
    %v3490 = vld [vmem:[%s17 + $0x53c] sm:$0xf]
    %v3491 = vld [vmem:[%s17 + $0x540] sm:$0xff]
    %v3492 = vld [vmem:[%s17 + $0x548] sm:$0xff]
    %v3493 = vld [vmem:[%s17 + $0x550] sm:$0xff]
    %v3494 = vld [vmem:[%s17 + $0x558] sm:$0xf]
    %v3495 = vld [vmem:[%s17 + $0x55c] sm:$0xff]
    %v3496 = vld [vmem:[%s17 + $0x564] sm:$0xff]
    %v3497 = vld [vmem:[%s17 + $0x56c] sm:$0xff]
    %v3498 = vld [vmem:[%s17 + $0x574] sm:$0xf]
    %v3499 = vld [vmem:[%s17 + $0x578] sm:$0xff]
    %v3500 = vld [vmem:[%s17 + $0x580] sm:$0xff]
    %v3501 = vld [vmem:[%s17 + $0x588] sm:$0xff]
    %v3502 = vld [vmem:[%s17 + $0x590] sm:$0xf]
    %v3503 = vld [vmem:[%s17 + $0x594] sm:$0xff]
    %v3504 = vld [vmem:[%s17 + $0x59c] sm:$0xff]
    %v3505 = vld [vmem:[%s17 + $0x5a4] sm:$0xff]
    %v3506 = vld [vmem:[%s17 + $0x5ac] sm:$0xf]
    %v3507 = vld [vmem:[%s17 + $0x5b0] sm:$0xff]
    %v3508 = vld [vmem:[%s17 + $0x5b8] sm:$0xff]
    %v3509 = vld [vmem:[%s17 + $0x5c0] sm:$0xff]
    %v3510 = vld [vmem:[%s17 + $0x5c8] sm:$0xf]
    %v3511 = vld [vmem:[%s17 + $0x5cc] sm:$0xff]
    %v3512 = vld [vmem:[%s17 + $0x5d4] sm:$0xff]
    %v3513 = vld [vmem:[%s17 + $0x5dc] sm:$0xff]
    %v3514 = vld [vmem:[%s17 + $0x5e4] sm:$0xf]
    %v3515 = vld [vmem:[%s17 + $0x5e8] sm:$0xff]
    %v3516 = vld [vmem:[%s17 + $0x5f0] sm:$0xff]
    %v3517 = vld [vmem:[%s17 + $0x5f8] sm:$0xff]
    %v3518 = vld [vmem:[%s17 + $0x600] sm:$0xf]
    %v3519 = vld [vmem:[%s17 + $0x604] sm:$0xff]
    %v3520 = vld [vmem:[%s17 + $0x60c] sm:$0xff]
    %v3521 = vld [vmem:[%s17 + $0x614] sm:$0xff]
    %v3522 = vld [vmem:[%s17 + $0x61c] sm:$0xf]
    %v3523 = vld [vmem:[%s17 + $0x620] sm:$0xff]
    %v3524 = vld [vmem:[%s17 + $0x628] sm:$0xff]
    %v3525 = vld [vmem:[%s17 + $0x630] sm:$0xff]
    %v3526 = vld [vmem:[%s17 + $0x638] sm:$0xf]
    %v3527 = vld [vmem:[%s17 + $0x63c] sm:$0xff]
    %v3528 = vld [vmem:[%s17 + $0x644] sm:$0xff]
    %v3529 = vld [vmem:[%s17 + $0x64c] sm:$0xff]
    %v3530 = vld [vmem:[%s17 + $0x654] sm:$0xf]
    %v3531 = vld [vmem:[%s17 + $0x658] sm:$0xff]
    %v3532 = vld [vmem:[%s17 + $0x660] sm:$0xff]
    %v3533 = vld [vmem:[%s17 + $0x668] sm:$0xff]
    %v3534 = vld [vmem:[%s17 + $0x670] sm:$0xf]
    %v3535 = vld [vmem:[%s17 + $0x674] sm:$0xff]
    %v3536 = vld [vmem:[%s17 + $0x67c] sm:$0xff]
    %v3537 = vld [vmem:[%s17 + $0x684] sm:$0xff]
    %v3538 = vld [vmem:[%s17 + $0x68c] sm:$0xf]
    %v3539 = vld [vmem:[%s17 + $0x690] sm:$0xff]
    %v3540 = vld [vmem:[%s17 + $0x698] sm:$0xff]
    %v3541 = vld [vmem:[%s17 + $0x6a0] sm:$0xff]
    %v3542 = vld [vmem:[%s17 + $0x6a8] sm:$0xf]
    %v3543 = vld [vmem:[%s17 + $0x6ac] sm:$0xff]
    %v3544 = vld [vmem:[%s17 + $0x6b4] sm:$0xff]
    %v3545 = vld [vmem:[%s17 + $0x6bc] sm:$0xff]
    %v3546 = vld [vmem:[%s17 + $0x6c4] sm:$0xf]
    %v3547 = vld [vmem:[%s17 + $0x6c8] sm:$0xff]
    %v3548 = vld [vmem:[%s17 + $0x6d0] sm:$0xff]
    %v3549 = vld [vmem:[%s17 + $0x6d8] sm:$0xff]
    %v3550 = vld [vmem:[%s17 + $0x6e0] sm:$0xf]
    %v3551 = vld [vmem:[%s17 + $0x6e4] sm:$0xff]
    %v3552 = vld [vmem:[%s17 + $0x6ec] sm:$0xff]
    %v3553 = vld [vmem:[%s17 + $0x6f4] sm:$0xff]
    %v3554 = vld [vmem:[%s17 + $0x6fc] sm:$0xf]
    %v3555 = vld [vmem:[%s18] sm:$0x7f]
    %v3557 = vlaneseq
    %v3558 = vshrl.u32 %v3557, 7
    %v3559 = vsub.s32 0, %v3558
    %v3560 = vrot.slane %v3555, %v3559
    %v3561 = vlaneseq
    %v3562 = vshrl.u32 %v3561, 7
    %v3563 = vsub.s32 1, %v3562
    %v3564 = vrot.slane %v3555, %v3563
    %v3565 = vlaneseq
    %v3566 = vshrl.u32 %v3565, 7
    %v3567 = vsub.s32 2, %v3566
    %v3568 = vrot.slane %v3555, %v3567
    %v3569 = vlaneseq
    %v3570 = vshrl.u32 %v3569, 7
    %v3571 = vsub.s32 3, %v3570
    %v3572 = vrot.slane %v3555, %v3571
    %v3573 = vlaneseq
    %v3574 = vshrl.u32 %v3573, 7
    %v3575 = vsub.s32 4, %v3574
    %v3576 = vrot.slane %v3555, %v3575
    %v3577 = vlaneseq
    %v3578 = vshrl.u32 %v3577, 7
    %v3579 = vsub.s32 5, %v3578
    %v3580 = vrot.slane %v3555, %v3579
    %v3581 = vlaneseq
    %v3582 = vshrl.u32 %v3581, 7
    %v3583 = vsub.s32 6, %v3582
    %v3584 = vrot.slane %v3555, %v3583
    %v3848 = vunpack.c.l.b16 %v3299
    %v3849 = vunpack.c.h.b16 %v3299
    %v3850 = vunpack.c.l.b16 %v3300
    %v3851 = vunpack.c.h.b16 %v3300
    %v3852 = vunpack.c.l.b16 %v3301
    %v3853 = vunpack.c.h.b16 %v3301
    %v3854 = vunpack.c.l.b16 %v3302
    %v3855 = vunpack.c.l.b16 %v3303
    %v3856 = vunpack.c.h.b16 %v3303
    %v3857 = vunpack.c.l.b16 %v3304
    %v3858 = vunpack.c.h.b16 %v3304
    %v3859 = vunpack.c.l.b16 %v3305
    %v3860 = vunpack.c.h.b16 %v3305
    %v3861 = vunpack.c.l.b16 %v3306
    %v3862 = vunpack.c.l.b16 %v3307
    %v3863 = vunpack.c.h.b16 %v3307
    %v3864 = vunpack.c.l.b16 %v3308
    %v3865 = vunpack.c.h.b16 %v3308
    %v3866 = vunpack.c.l.b16 %v3309
    %v3867 = vunpack.c.h.b16 %v3309
    %v3868 = vunpack.c.l.b16 %v3310
    %v3869 = vunpack.c.l.b16 %v3311
    %v3870 = vunpack.c.h.b16 %v3311
    %v3871 = vunpack.c.l.b16 %v3312
    %v3872 = vunpack.c.h.b16 %v3312
    %v3873 = vunpack.c.l.b16 %v3313
    %v3874 = vunpack.c.h.b16 %v3313
    %v3875 = vunpack.c.l.b16 %v3314
    %v3876 = vunpack.c.l.b16 %v3315
    %v3877 = vunpack.c.h.b16 %v3315
    %v3878 = vunpack.c.l.b16 %v3316
    %v3879 = vunpack.c.h.b16 %v3316
    %v3880 = vunpack.c.l.b16 %v3317
    %v3881 = vunpack.c.h.b16 %v3317
    %v3882 = vunpack.c.l.b16 %v3318
    %v3883 = vunpack.c.l.b16 %v3319
    %v3884 = vunpack.c.h.b16 %v3319
    %v3885 = vunpack.c.l.b16 %v3320
    %v3886 = vunpack.c.h.b16 %v3320
    %v3887 = vunpack.c.l.b16 %v3321
    %v3888 = vunpack.c.h.b16 %v3321
    %v3889 = vunpack.c.l.b16 %v3322
    %v3890 = vunpack.c.l.b16 %v3323
    %v3891 = vunpack.c.h.b16 %v3323
    %v3892 = vunpack.c.l.b16 %v3324
    %v3893 = vunpack.c.h.b16 %v3324
    %v3894 = vunpack.c.l.b16 %v3325
    %v3895 = vunpack.c.h.b16 %v3325
    %v3896 = vunpack.c.l.b16 %v3326
    %v3897 = vunpack.c.l.b16 %v3327
    %v3898 = vunpack.c.h.b16 %v3327
    %v3899 = vunpack.c.l.b16 %v3328
    %v3900 = vunpack.c.h.b16 %v3328
    %v3901 = vunpack.c.l.b16 %v3329
    %v3902 = vunpack.c.h.b16 %v3329
    %v3903 = vunpack.c.l.b16 %v3330
    %v3904 = vunpack.c.l.b16 %v3331
    %v3905 = vunpack.c.h.b16 %v3331
    %v3906 = vunpack.c.l.b16 %v3332
    %v3907 = vunpack.c.h.b16 %v3332
    %v3908 = vunpack.c.l.b16 %v3333
    %v3909 = vunpack.c.h.b16 %v3333
    %v3910 = vunpack.c.l.b16 %v3334
    %v3911 = vunpack.c.l.b16 %v3335
    %v3912 = vunpack.c.h.b16 %v3335
    %v3913 = vunpack.c.l.b16 %v3336
    %v3914 = vunpack.c.h.b16 %v3336
    %v3915 = vunpack.c.l.b16 %v3337
    %v3916 = vunpack.c.h.b16 %v3337
    %v3917 = vunpack.c.l.b16 %v3338
    %v3918 = vunpack.c.l.b16 %v3339
    %v3919 = vunpack.c.h.b16 %v3339
    %v3920 = vunpack.c.l.b16 %v3340
    %v3921 = vunpack.c.h.b16 %v3340
    %v3922 = vunpack.c.l.b16 %v3341
    %v3923 = vunpack.c.h.b16 %v3341
    %v3924 = vunpack.c.l.b16 %v3342
    %v3925 = vunpack.c.l.b16 %v3343
    %v3926 = vunpack.c.h.b16 %v3343
    %v3927 = vunpack.c.l.b16 %v3344
    %v3928 = vunpack.c.h.b16 %v3344
    %v3929 = vunpack.c.l.b16 %v3345
    %v3930 = vunpack.c.h.b16 %v3345
    %v3931 = vunpack.c.l.b16 %v3346
    %v3932 = vunpack.c.l.b16 %v3347
    %v3933 = vunpack.c.h.b16 %v3347
    %v3934 = vunpack.c.l.b16 %v3348
    %v3935 = vunpack.c.h.b16 %v3348
    %v3936 = vunpack.c.l.b16 %v3349
    %v3937 = vunpack.c.h.b16 %v3349
    %v3938 = vunpack.c.l.b16 %v3350
    %v3939 = vunpack.c.l.b16 %v3351
    %v3940 = vunpack.c.h.b16 %v3351
    %v3941 = vunpack.c.l.b16 %v3352
    %v3942 = vunpack.c.h.b16 %v3352
    %v3943 = vunpack.c.l.b16 %v3353
    %v3944 = vunpack.c.h.b16 %v3353
    %v3945 = vunpack.c.l.b16 %v3354
    %v3946 = vunpack.c.l.b16 %v3355
    %v3947 = vunpack.c.h.b16 %v3355
    %v3948 = vunpack.c.l.b16 %v3356
    %v3949 = vunpack.c.h.b16 %v3356
    %v3950 = vunpack.c.l.b16 %v3357
    %v3951 = vunpack.c.h.b16 %v3357
    %v3952 = vunpack.c.l.b16 %v3358
    %v3953 = vunpack.c.l.b16 %v3359
    %v3954 = vunpack.c.h.b16 %v3359
    %v3955 = vunpack.c.l.b16 %v3360
    %v3956 = vunpack.c.h.b16 %v3360
    %v3957 = vunpack.c.l.b16 %v3361
    %v3958 = vunpack.c.h.b16 %v3361
    %v3959 = vunpack.c.l.b16 %v3362
    %v3960 = vunpack.c.l.b16 %v3363
    %v3961 = vunpack.c.h.b16 %v3363
    %v3962 = vunpack.c.l.b16 %v3364
    %v3963 = vunpack.c.h.b16 %v3364
    %v3964 = vunpack.c.l.b16 %v3365
    %v3965 = vunpack.c.h.b16 %v3365
    %v3966 = vunpack.c.l.b16 %v3366
    %v3967 = vunpack.c.l.b16 %v3367
    %v3968 = vunpack.c.h.b16 %v3367
    %v3969 = vunpack.c.l.b16 %v3368
    %v3970 = vunpack.c.h.b16 %v3368
    %v3971 = vunpack.c.l.b16 %v3369
    %v3972 = vunpack.c.h.b16 %v3369
    %v3973 = vunpack.c.l.b16 %v3370
    %v3974 = vunpack.c.l.b16 %v3371
    %v3975 = vunpack.c.h.b16 %v3371
    %v3976 = vunpack.c.l.b16 %v3372
    %v3977 = vunpack.c.h.b16 %v3372
    %v3978 = vunpack.c.l.b16 %v3373
    %v3979 = vunpack.c.h.b16 %v3373
    %v3980 = vunpack.c.l.b16 %v3374
    %v3981 = vunpack.c.l.b16 %v3375
    %v3982 = vunpack.c.h.b16 %v3375
    %v3983 = vunpack.c.l.b16 %v3376
    %v3984 = vunpack.c.h.b16 %v3376
    %v3985 = vunpack.c.l.b16 %v3377
    %v3986 = vunpack.c.h.b16 %v3377
    %v3987 = vunpack.c.l.b16 %v3378
    %v3988 = vunpack.c.l.b16 %v3379
    %v3989 = vunpack.c.h.b16 %v3379
    %v3990 = vunpack.c.l.b16 %v3380
    %v3991 = vunpack.c.h.b16 %v3380
    %v3992 = vunpack.c.l.b16 %v3381
    %v3993 = vunpack.c.h.b16 %v3381
    %v3994 = vunpack.c.l.b16 %v3382
    %v3995 = vunpack.c.l.b16 %v3383
    %v3996 = vunpack.c.h.b16 %v3383
    %v3997 = vunpack.c.l.b16 %v3384
    %v3998 = vunpack.c.h.b16 %v3384
    %v3999 = vunpack.c.l.b16 %v3385
    %v4000 = vunpack.c.h.b16 %v3385
    %v4001 = vunpack.c.l.b16 %v3386
    %v4002 = vunpack.c.l.b16 %v3387
    %v4003 = vunpack.c.h.b16 %v3387
    %v4004 = vunpack.c.l.b16 %v3388
    %v4005 = vunpack.c.h.b16 %v3388
    %v4006 = vunpack.c.l.b16 %v3389
    %v4007 = vunpack.c.h.b16 %v3389
    %v4008 = vunpack.c.l.b16 %v3390
    %v4009 = vunpack.c.l.b16 %v3391
    %v4010 = vunpack.c.h.b16 %v3391
    %v4011 = vunpack.c.l.b16 %v3392
    %v4012 = vunpack.c.h.b16 %v3392
    %v4013 = vunpack.c.l.b16 %v3393
    %v4014 = vunpack.c.h.b16 %v3393
    %v4015 = vunpack.c.l.b16 %v3394
    %v4016 = vunpack.c.l.b16 %v3395
    %v4017 = vunpack.c.h.b16 %v3395
    %v4018 = vunpack.c.l.b16 %v3396
    %v4019 = vunpack.c.h.b16 %v3396
    %v4020 = vunpack.c.l.b16 %v3397
    %v4021 = vunpack.c.h.b16 %v3397
    %v4022 = vunpack.c.l.b16 %v3398
    %v4023 = vunpack.c.l.b16 %v3399
    %v4024 = vunpack.c.h.b16 %v3399
    %v4025 = vunpack.c.l.b16 %v3400
    %v4026 = vunpack.c.h.b16 %v3400
    %v4027 = vunpack.c.l.b16 %v3401
    %v4028 = vunpack.c.h.b16 %v3401
    %v4029 = vunpack.c.l.b16 %v3402
    %v4030 = vunpack.c.l.b16 %v3403
    %v4031 = vunpack.c.h.b16 %v3403
    %v4032 = vunpack.c.l.b16 %v3404
    %v4033 = vunpack.c.h.b16 %v3404
    %v4034 = vunpack.c.l.b16 %v3405
    %v4035 = vunpack.c.h.b16 %v3405
    %v4036 = vunpack.c.l.b16 %v3406
    %v4037 = vunpack.c.l.b16 %v3407
    %v4038 = vunpack.c.h.b16 %v3407
    %v4039 = vunpack.c.l.b16 %v3408
    %v4040 = vunpack.c.h.b16 %v3408
    %v4041 = vunpack.c.l.b16 %v3409
    %v4042 = vunpack.c.h.b16 %v3409
    %v4043 = vunpack.c.l.b16 %v3410
    %v4044 = vunpack.c.l.b16 %v3411
    %v4045 = vunpack.c.h.b16 %v3411
    %v4046 = vunpack.c.l.b16 %v3412
    %v4047 = vunpack.c.h.b16 %v3412
    %v4048 = vunpack.c.l.b16 %v3413
    %v4049 = vunpack.c.h.b16 %v3413
    %v4050 = vunpack.c.l.b16 %v3414
    %v4051 = vunpack.c.l.b16 %v3415
    %v4052 = vunpack.c.h.b16 %v3415
    %v4053 = vunpack.c.l.b16 %v3416
    %v4054 = vunpack.c.h.b16 %v3416
    %v4055 = vunpack.c.l.b16 %v3417
    %v4056 = vunpack.c.h.b16 %v3417
    %v4057 = vunpack.c.l.b16 %v3418
    %v4058 = vunpack.c.l.b16 %v3419
    %v4059 = vunpack.c.h.b16 %v3419
    %v4060 = vunpack.c.l.b16 %v3420
    %v4061 = vunpack.c.h.b16 %v3420
    %v4062 = vunpack.c.l.b16 %v3421
    %v4063 = vunpack.c.h.b16 %v3421
    %v4064 = vunpack.c.l.b16 %v3422
    %v4065 = vunpack.c.l.b16 %v3423
    %v4066 = vunpack.c.h.b16 %v3423
    %v4067 = vunpack.c.l.b16 %v3424
    %v4068 = vunpack.c.h.b16 %v3424
    %v4069 = vunpack.c.l.b16 %v3425
    %v4070 = vunpack.c.h.b16 %v3425
    %v4071 = vunpack.c.l.b16 %v3426
    %v4072 = vunpack.c.l.b16 %v3427
    %v4073 = vunpack.c.h.b16 %v3427
    %v4074 = vunpack.c.l.b16 %v3428
    %v4075 = vunpack.c.h.b16 %v3428
    %v4076 = vunpack.c.l.b16 %v3429
    %v4077 = vunpack.c.h.b16 %v3429
    %v4078 = vunpack.c.l.b16 %v3430
    %v4079 = vunpack.c.l.b16 %v3431
    %v4080 = vunpack.c.h.b16 %v3431
    %v4081 = vunpack.c.l.b16 %v3432
    %v4082 = vunpack.c.h.b16 %v3432
    %v4083 = vunpack.c.l.b16 %v3433
    %v4084 = vunpack.c.h.b16 %v3433
    %v4085 = vunpack.c.l.b16 %v3434
    %v4086 = vunpack.c.l.b16 %v3435
    %v4087 = vunpack.c.h.b16 %v3435
    %v4088 = vunpack.c.l.b16 %v3436
    %v4089 = vunpack.c.h.b16 %v3436
    %v4090 = vunpack.c.l.b16 %v3437
    %v4091 = vunpack.c.h.b16 %v3437
    %v4092 = vunpack.c.l.b16 %v3438
    %v4093 = vunpack.c.l.b16 %v3439
    %v4094 = vunpack.c.h.b16 %v3439
    %v4095 = vunpack.c.l.b16 %v3440
    %v4096 = vunpack.c.h.b16 %v3440
    %v4097 = vunpack.c.l.b16 %v3441
    %v4098 = vunpack.c.h.b16 %v3441
    %v4099 = vunpack.c.l.b16 %v3442
    %v4100 = vunpack.c.l.b16 %v3443
    %v4101 = vunpack.c.h.b16 %v3443
    %v4102 = vunpack.c.l.b16 %v3444
    %v4103 = vunpack.c.h.b16 %v3444
    %v4104 = vunpack.c.l.b16 %v3445
    %v4105 = vunpack.c.h.b16 %v3445
    %v4106 = vunpack.c.l.b16 %v3446
    %v4107 = vunpack.c.l.b16 %v3447
    %v4108 = vunpack.c.h.b16 %v3447
    %v4109 = vunpack.c.l.b16 %v3448
    %v4110 = vunpack.c.h.b16 %v3448
    %v4111 = vunpack.c.l.b16 %v3449
    %v4112 = vunpack.c.h.b16 %v3449
    %v4113 = vunpack.c.l.b16 %v3450
    %v4114 = vunpack.c.l.b16 %v3451
    %v4115 = vunpack.c.h.b16 %v3451
    %v4116 = vunpack.c.l.b16 %v3452
    %v4117 = vunpack.c.h.b16 %v3452
    %v4118 = vunpack.c.l.b16 %v3453
    %v4119 = vunpack.c.h.b16 %v3453
    %v4120 = vunpack.c.l.b16 %v3454
    %v4121 = vunpack.c.l.b16 %v3455
    %v4122 = vunpack.c.h.b16 %v3455
    %v4123 = vunpack.c.l.b16 %v3456
    %v4124 = vunpack.c.h.b16 %v3456
    %v4125 = vunpack.c.l.b16 %v3457
    %v4126 = vunpack.c.h.b16 %v3457
    %v4127 = vunpack.c.l.b16 %v3458
    %v4128 = vunpack.c.l.b16 %v3459
    %v4129 = vunpack.c.h.b16 %v3459
    %v4130 = vunpack.c.l.b16 %v3460
    %v4131 = vunpack.c.h.b16 %v3460
    %v4132 = vunpack.c.l.b16 %v3461
    %v4133 = vunpack.c.h.b16 %v3461
    %v4134 = vunpack.c.l.b16 %v3462
    %v4135 = vunpack.c.l.b16 %v3463
    %v4136 = vunpack.c.h.b16 %v3463
    %v4137 = vunpack.c.l.b16 %v3464
    %v4138 = vunpack.c.h.b16 %v3464
    %v4139 = vunpack.c.l.b16 %v3465
    %v4140 = vunpack.c.h.b16 %v3465
    %v4141 = vunpack.c.l.b16 %v3466
    %v4142 = vunpack.c.l.b16 %v3467
    %v4143 = vunpack.c.h.b16 %v3467
    %v4144 = vunpack.c.l.b16 %v3468
    %v4145 = vunpack.c.h.b16 %v3468
    %v4146 = vunpack.c.l.b16 %v3469
    %v4147 = vunpack.c.h.b16 %v3469
    %v4148 = vunpack.c.l.b16 %v3470
    %v4149 = vunpack.c.l.b16 %v3471
    %v4150 = vunpack.c.h.b16 %v3471
    %v4151 = vunpack.c.l.b16 %v3472
    %v4152 = vunpack.c.h.b16 %v3472
    %v4153 = vunpack.c.l.b16 %v3473
    %v4154 = vunpack.c.h.b16 %v3473
    %v4155 = vunpack.c.l.b16 %v3474
    %v4156 = vunpack.c.l.b16 %v3475
    %v4157 = vunpack.c.h.b16 %v3475
    %v4158 = vunpack.c.l.b16 %v3476
    %v4159 = vunpack.c.h.b16 %v3476
    %v4160 = vunpack.c.l.b16 %v3477
    %v4161 = vunpack.c.h.b16 %v3477
    %v4162 = vunpack.c.l.b16 %v3478
    %v4163 = vunpack.c.l.b16 %v3479
    %v4164 = vunpack.c.h.b16 %v3479
    %v4165 = vunpack.c.l.b16 %v3480
    %v4166 = vunpack.c.h.b16 %v3480
    %v4167 = vunpack.c.l.b16 %v3481
    %v4168 = vunpack.c.h.b16 %v3481
    %v4169 = vunpack.c.l.b16 %v3482
    %v4170 = vunpack.c.l.b16 %v3483
    %v4171 = vunpack.c.h.b16 %v3483
    %v4172 = vunpack.c.l.b16 %v3484
    %v4173 = vunpack.c.h.b16 %v3484
    %v4174 = vunpack.c.l.b16 %v3485
    %v4175 = vunpack.c.h.b16 %v3485
    %v4176 = vunpack.c.l.b16 %v3486
    %v4177 = vunpack.c.l.b16 %v3487
    %v4178 = vunpack.c.h.b16 %v3487
    %v4179 = vunpack.c.l.b16 %v3488
    %v4180 = vunpack.c.h.b16 %v3488
    %v4181 = vunpack.c.l.b16 %v3489
    %v4182 = vunpack.c.h.b16 %v3489
    %v4183 = vunpack.c.l.b16 %v3490
    %v4184 = vunpack.c.l.b16 %v3491
    %v4185 = vunpack.c.h.b16 %v3491
    %v4186 = vunpack.c.l.b16 %v3492
    %v4187 = vunpack.c.h.b16 %v3492
    %v4188 = vunpack.c.l.b16 %v3493
    %v4189 = vunpack.c.h.b16 %v3493
    %v4190 = vunpack.c.l.b16 %v3494
    %v4191 = vunpack.c.l.b16 %v3495
    %v4192 = vunpack.c.h.b16 %v3495
    %v4193 = vunpack.c.l.b16 %v3496
    %v4194 = vunpack.c.h.b16 %v3496
    %v4195 = vunpack.c.l.b16 %v3497
    %v4196 = vunpack.c.h.b16 %v3497
    %v4197 = vunpack.c.l.b16 %v3498
    %v4198 = vunpack.c.l.b16 %v3499
    %v4199 = vunpack.c.h.b16 %v3499
    %v4200 = vunpack.c.l.b16 %v3500
    %v4201 = vunpack.c.h.b16 %v3500
    %v4202 = vunpack.c.l.b16 %v3501
    %v4203 = vunpack.c.h.b16 %v3501
    %v4204 = vunpack.c.l.b16 %v3502
    %v4205 = vunpack.c.l.b16 %v3503
    %v4206 = vunpack.c.h.b16 %v3503
    %v4207 = vunpack.c.l.b16 %v3504
    %v4208 = vunpack.c.h.b16 %v3504
    %v4209 = vunpack.c.l.b16 %v3505
    %v4210 = vunpack.c.h.b16 %v3505
    %v4211 = vunpack.c.l.b16 %v3506
    %v4212 = vunpack.c.l.b16 %v3507
    %v4213 = vunpack.c.h.b16 %v3507
    %v4214 = vunpack.c.l.b16 %v3508
    %v4215 = vunpack.c.h.b16 %v3508
    %v4216 = vunpack.c.l.b16 %v3509
    %v4217 = vunpack.c.h.b16 %v3509
    %v4218 = vunpack.c.l.b16 %v3510
    %v4219 = vunpack.c.l.b16 %v3511
    %v4220 = vunpack.c.h.b16 %v3511
    %v4221 = vunpack.c.l.b16 %v3512
    %v4222 = vunpack.c.h.b16 %v3512
    %v4223 = vunpack.c.l.b16 %v3513
    %v4224 = vunpack.c.h.b16 %v3513
    %v4225 = vunpack.c.l.b16 %v3514
    %v4226 = vunpack.c.l.b16 %v3515
    %v4227 = vunpack.c.h.b16 %v3515
    %v4228 = vunpack.c.l.b16 %v3516
    %v4229 = vunpack.c.h.b16 %v3516
    %v4230 = vunpack.c.l.b16 %v3517
    %v4231 = vunpack.c.h.b16 %v3517
    %v4232 = vunpack.c.l.b16 %v3518
    %v4233 = vunpack.c.l.b16 %v3519
    %v4234 = vunpack.c.h.b16 %v3519
    %v4235 = vunpack.c.l.b16 %v3520
    %v4236 = vunpack.c.h.b16 %v3520
    %v4237 = vunpack.c.l.b16 %v3521
    %v4238 = vunpack.c.h.b16 %v3521
    %v4239 = vunpack.c.l.b16 %v3522
    %v4240 = vunpack.c.l.b16 %v3523
    %v4241 = vunpack.c.h.b16 %v3523
    %v4242 = vunpack.c.l.b16 %v3524
    %v4243 = vunpack.c.h.b16 %v3524
    %v4244 = vunpack.c.l.b16 %v3525
    %v4245 = vunpack.c.h.b16 %v3525
    %v4246 = vunpack.c.l.b16 %v3526
    %v4247 = vunpack.c.l.b16 %v3527
    %v4248 = vunpack.c.h.b16 %v3527
    %v4249 = vunpack.c.l.b16 %v3528
    %v4250 = vunpack.c.h.b16 %v3528
    %v4251 = vunpack.c.l.b16 %v3529
    %v4252 = vunpack.c.h.b16 %v3529
    %v4253 = vunpack.c.l.b16 %v3530
    %v4254 = vunpack.c.l.b16 %v3531
    %v4255 = vunpack.c.h.b16 %v3531
    %v4256 = vunpack.c.l.b16 %v3532
    %v4257 = vunpack.c.h.b16 %v3532
    %v4258 = vunpack.c.l.b16 %v3533
    %v4259 = vunpack.c.h.b16 %v3533
    %v4260 = vunpack.c.l.b16 %v3534
    %v4261 = vunpack.c.l.b16 %v3535
    %v4262 = vunpack.c.h.b16 %v3535
    %v4263 = vunpack.c.l.b16 %v3536
    %v4264 = vunpack.c.h.b16 %v3536
    %v4265 = vunpack.c.l.b16 %v3537
    %v4266 = vunpack.c.h.b16 %v3537
    %v4267 = vunpack.c.l.b16 %v3538
    %v4268 = vunpack.c.l.b16 %v3539
    %v4269 = vunpack.c.h.b16 %v3539
    %v4270 = vunpack.c.l.b16 %v3540
    %v4271 = vunpack.c.h.b16 %v3540
    %v4272 = vunpack.c.l.b16 %v3541
    %v4273 = vunpack.c.h.b16 %v3541
    %v4274 = vunpack.c.l.b16 %v3542
    %v4275 = vunpack.c.l.b16 %v3543
    %v4276 = vunpack.c.h.b16 %v3543
    %v4277 = vunpack.c.l.b16 %v3544
    %v4278 = vunpack.c.h.b16 %v3544
    %v4279 = vunpack.c.l.b16 %v3545
    %v4280 = vunpack.c.h.b16 %v3545
    %v4281 = vunpack.c.l.b16 %v3546
    %v4282 = vunpack.c.l.b16 %v3547
    %v4283 = vunpack.c.h.b16 %v3547
    %v4284 = vunpack.c.l.b16 %v3548
    %v4285 = vunpack.c.h.b16 %v3548
    %v4286 = vunpack.c.l.b16 %v3549
    %v4287 = vunpack.c.h.b16 %v3549
    %v4288 = vunpack.c.l.b16 %v3550
    %v4289 = vunpack.c.l.b16 %v3551
    %v4290 = vunpack.c.h.b16 %v3551
    %v4291 = vunpack.c.l.b16 %v3552
    %v4292 = vunpack.c.h.b16 %v3552
    %v4293 = vunpack.c.l.b16 %v3553
    %v4294 = vunpack.c.h.b16 %v3553
    %v4295 = vunpack.c.l.b16 %v3554
    %v4296 = vpack.c.b16 %v3855, %v3848
    %v4297 = vpack.c.b16 %v3856, %v3849
    %v4298 = vpack.c.b16 %v3857, %v3850
    %v4299 = vpack.c.b16 %v3858, %v3851
    %v4300 = vpack.c.b16 %v3859, %v3852
    %v4301 = vpack.c.b16 %v3860, %v3853
    %v4302 = vpack.c.b16 %v3861, %v3854
    %v4303 = vpack.c.b16 %v3869, %v3862
    %v4304 = vpack.c.b16 %v3870, %v3863
    %v4305 = vpack.c.b16 %v3871, %v3864
    %v4306 = vpack.c.b16 %v3872, %v3865
    %v4307 = vpack.c.b16 %v3873, %v3866
    %v4308 = vpack.c.b16 %v3874, %v3867
    %v4309 = vpack.c.b16 %v3875, %v3868
    %v4310 = vpack.c.b16 %v3883, %v3876
    %v4311 = vpack.c.b16 %v3884, %v3877
    %v4312 = vpack.c.b16 %v3885, %v3878
    %v4313 = vpack.c.b16 %v3886, %v3879
    %v4314 = vpack.c.b16 %v3887, %v3880
    %v4315 = vpack.c.b16 %v3888, %v3881
    %v4316 = vpack.c.b16 %v3889, %v3882
    %v4317 = vpack.c.b16 %v3897, %v3890
    %v4318 = vpack.c.b16 %v3898, %v3891
    %v4319 = vpack.c.b16 %v3899, %v3892
    %v4320 = vpack.c.b16 %v3900, %v3893
    %v4321 = vpack.c.b16 %v3901, %v3894
    %v4322 = vpack.c.b16 %v3902, %v3895
    %v4323 = vpack.c.b16 %v3903, %v3896
    %v4324 = vpack.c.b16 %v3911, %v3904
    %v4325 = vpack.c.b16 %v3912, %v3905
    %v4326 = vpack.c.b16 %v3913, %v3906
    %v4327 = vpack.c.b16 %v3914, %v3907
    %v4328 = vpack.c.b16 %v3915, %v3908
    %v4329 = vpack.c.b16 %v3916, %v3909
    %v4330 = vpack.c.b16 %v3917, %v3910
    %v4331 = vpack.c.b16 %v3925, %v3918
    %v4332 = vpack.c.b16 %v3926, %v3919
    %v4333 = vpack.c.b16 %v3927, %v3920
    %v4334 = vpack.c.b16 %v3928, %v3921
    %v4335 = vpack.c.b16 %v3929, %v3922
    %v4336 = vpack.c.b16 %v3930, %v3923
    %v4337 = vpack.c.b16 %v3931, %v3924
    %v4338 = vpack.c.b16 %v3939, %v3932
    %v4339 = vpack.c.b16 %v3940, %v3933
    %v4340 = vpack.c.b16 %v3941, %v3934
    %v4341 = vpack.c.b16 %v3942, %v3935
    %v4342 = vpack.c.b16 %v3943, %v3936
    %v4343 = vpack.c.b16 %v3944, %v3937
    %v4344 = vpack.c.b16 %v3945, %v3938
    %v4345 = vpack.c.b16 %v3953, %v3946
    %v4346 = vpack.c.b16 %v3954, %v3947
    %v4347 = vpack.c.b16 %v3955, %v3948
    %v4348 = vpack.c.b16 %v3956, %v3949
    %v4349 = vpack.c.b16 %v3957, %v3950
    %v4350 = vpack.c.b16 %v3958, %v3951
    %v4351 = vpack.c.b16 %v3959, %v3952
    %v4352 = vpack.c.b16 %v3967, %v3960
    %v4353 = vpack.c.b16 %v3968, %v3961
    %v4354 = vpack.c.b16 %v3969, %v3962
    %v4355 = vpack.c.b16 %v3970, %v3963
    %v4356 = vpack.c.b16 %v3971, %v3964
    %v4357 = vpack.c.b16 %v3972, %v3965
    %v4358 = vpack.c.b16 %v3973, %v3966
    %v4359 = vpack.c.b16 %v3981, %v3974
    %v4360 = vpack.c.b16 %v3982, %v3975
    %v4361 = vpack.c.b16 %v3983, %v3976
    %v4362 = vpack.c.b16 %v3984, %v3977
    %v4363 = vpack.c.b16 %v3985, %v3978
    %v4364 = vpack.c.b16 %v3986, %v3979
    %v4365 = vpack.c.b16 %v3987, %v3980
    %v4366 = vpack.c.b16 %v3995, %v3988
    %v4367 = vpack.c.b16 %v3996, %v3989
    %v4368 = vpack.c.b16 %v3997, %v3990
    %v4369 = vpack.c.b16 %v3998, %v3991
    %v4370 = vpack.c.b16 %v3999, %v3992
    %v4371 = vpack.c.b16 %v4000, %v3993
    %v4372 = vpack.c.b16 %v4001, %v3994
    %v4373 = vpack.c.b16 %v4009, %v4002
    %v4374 = vpack.c.b16 %v4010, %v4003
    %v4375 = vpack.c.b16 %v4011, %v4004
    %v4376 = vpack.c.b16 %v4012, %v4005
    %v4377 = vpack.c.b16 %v4013, %v4006
    %v4378 = vpack.c.b16 %v4014, %v4007
    %v4379 = vpack.c.b16 %v4015, %v4008
    %v4380 = vpack.c.b16 %v4023, %v4016
    %v4381 = vpack.c.b16 %v4024, %v4017
    %v4382 = vpack.c.b16 %v4025, %v4018
    %v4383 = vpack.c.b16 %v4026, %v4019
    %v4384 = vpack.c.b16 %v4027, %v4020
    %v4385 = vpack.c.b16 %v4028, %v4021
    %v4386 = vpack.c.b16 %v4029, %v4022
    %v4387 = vpack.c.b16 %v4037, %v4030
    %v4388 = vpack.c.b16 %v4038, %v4031
    %v4389 = vpack.c.b16 %v4039, %v4032
    %v4390 = vpack.c.b16 %v4040, %v4033
    %v4391 = vpack.c.b16 %v4041, %v4034
    %v4392 = vpack.c.b16 %v4042, %v4035
    %v4393 = vpack.c.b16 %v4043, %v4036
    %v4394 = vpack.c.b16 %v4051, %v4044
    %v4395 = vpack.c.b16 %v4052, %v4045
    %v4396 = vpack.c.b16 %v4053, %v4046
    %v4397 = vpack.c.b16 %v4054, %v4047
    %v4398 = vpack.c.b16 %v4055, %v4048
    %v4399 = vpack.c.b16 %v4056, %v4049
    %v4400 = vpack.c.b16 %v4057, %v4050
    %v4401 = vpack.c.b16 %v4065, %v4058
    %v4402 = vpack.c.b16 %v4066, %v4059
    %v4403 = vpack.c.b16 %v4067, %v4060
    %v4404 = vpack.c.b16 %v4068, %v4061
    %v4405 = vpack.c.b16 %v4069, %v4062
    %v4406 = vpack.c.b16 %v4070, %v4063
    %v4407 = vpack.c.b16 %v4071, %v4064
    %v4408 = vpack.c.b16 %v4079, %v4072
    %v4409 = vpack.c.b16 %v4080, %v4073
    %v4410 = vpack.c.b16 %v4081, %v4074
    %v4411 = vpack.c.b16 %v4082, %v4075
    %v4412 = vpack.c.b16 %v4083, %v4076
    %v4413 = vpack.c.b16 %v4084, %v4077
    %v4414 = vpack.c.b16 %v4085, %v4078
    %v4415 = vpack.c.b16 %v4093, %v4086
    %v4416 = vpack.c.b16 %v4094, %v4087
    %v4417 = vpack.c.b16 %v4095, %v4088
    %v4418 = vpack.c.b16 %v4096, %v4089
    %v4419 = vpack.c.b16 %v4097, %v4090
    %v4420 = vpack.c.b16 %v4098, %v4091
    %v4421 = vpack.c.b16 %v4099, %v4092
    %v4422 = vpack.c.b16 %v4107, %v4100
    %v4423 = vpack.c.b16 %v4108, %v4101
    %v4424 = vpack.c.b16 %v4109, %v4102
    %v4425 = vpack.c.b16 %v4110, %v4103
    %v4426 = vpack.c.b16 %v4111, %v4104
    %v4427 = vpack.c.b16 %v4112, %v4105
    %v4428 = vpack.c.b16 %v4113, %v4106
    %v4429 = vpack.c.b16 %v4121, %v4114
    %v4430 = vpack.c.b16 %v4122, %v4115
    %v4431 = vpack.c.b16 %v4123, %v4116
    %v4432 = vpack.c.b16 %v4124, %v4117
    %v4433 = vpack.c.b16 %v4125, %v4118
    %v4434 = vpack.c.b16 %v4126, %v4119
    %v4435 = vpack.c.b16 %v4127, %v4120
    %v4436 = vpack.c.b16 %v4135, %v4128
    %v4437 = vpack.c.b16 %v4136, %v4129
    %v4438 = vpack.c.b16 %v4137, %v4130
    %v4439 = vpack.c.b16 %v4138, %v4131
    %v4440 = vpack.c.b16 %v4139, %v4132
    %v4441 = vpack.c.b16 %v4140, %v4133
    %v4442 = vpack.c.b16 %v4141, %v4134
    %v4443 = vpack.c.b16 %v4149, %v4142
    %v4444 = vpack.c.b16 %v4150, %v4143
    %v4445 = vpack.c.b16 %v4151, %v4144
    %v4446 = vpack.c.b16 %v4152, %v4145
    %v4447 = vpack.c.b16 %v4153, %v4146
    %v4448 = vpack.c.b16 %v4154, %v4147
    %v4449 = vpack.c.b16 %v4155, %v4148
    %v4450 = vpack.c.b16 %v4163, %v4156
    %v4451 = vpack.c.b16 %v4164, %v4157
    %v4452 = vpack.c.b16 %v4165, %v4158
    %v4453 = vpack.c.b16 %v4166, %v4159
    %v4454 = vpack.c.b16 %v4167, %v4160
    %v4455 = vpack.c.b16 %v4168, %v4161
    %v4456 = vpack.c.b16 %v4169, %v4162
    %v4457 = vpack.c.b16 %v4177, %v4170
    %v4458 = vpack.c.b16 %v4178, %v4171
    %v4459 = vpack.c.b16 %v4179, %v4172
    %v4460 = vpack.c.b16 %v4180, %v4173
    %v4461 = vpack.c.b16 %v4181, %v4174
    %v4462 = vpack.c.b16 %v4182, %v4175
    %v4463 = vpack.c.b16 %v4183, %v4176
    %v4464 = vpack.c.b16 %v4191, %v4184
    %v4465 = vpack.c.b16 %v4192, %v4185
    %v4466 = vpack.c.b16 %v4193, %v4186
    %v4467 = vpack.c.b16 %v4194, %v4187
    %v4468 = vpack.c.b16 %v4195, %v4188
    %v4469 = vpack.c.b16 %v4196, %v4189
    %v4470 = vpack.c.b16 %v4197, %v4190
    %v4471 = vpack.c.b16 %v4205, %v4198
    %v4472 = vpack.c.b16 %v4206, %v4199
    %v4473 = vpack.c.b16 %v4207, %v4200
    %v4474 = vpack.c.b16 %v4208, %v4201
    %v4475 = vpack.c.b16 %v4209, %v4202
    %v4476 = vpack.c.b16 %v4210, %v4203
    %v4477 = vpack.c.b16 %v4211, %v4204
    %v4478 = vpack.c.b16 %v4219, %v4212
    %v4479 = vpack.c.b16 %v4220, %v4213
    %v4480 = vpack.c.b16 %v4221, %v4214
    %v4481 = vpack.c.b16 %v4222, %v4215
    %v4482 = vpack.c.b16 %v4223, %v4216
    %v4483 = vpack.c.b16 %v4224, %v4217
    %v4484 = vpack.c.b16 %v4225, %v4218
    %v4485 = vpack.c.b16 %v4233, %v4226
    %v4486 = vpack.c.b16 %v4234, %v4227
    %v4487 = vpack.c.b16 %v4235, %v4228
    %v4488 = vpack.c.b16 %v4236, %v4229
    %v4489 = vpack.c.b16 %v4237, %v4230
    %v4490 = vpack.c.b16 %v4238, %v4231
    %v4491 = vpack.c.b16 %v4239, %v4232
    %v4492 = vpack.c.b16 %v4247, %v4240
    %v4493 = vpack.c.b16 %v4248, %v4241
    %v4494 = vpack.c.b16 %v4249, %v4242
    %v4495 = vpack.c.b16 %v4250, %v4243
    %v4496 = vpack.c.b16 %v4251, %v4244
    %v4497 = vpack.c.b16 %v4252, %v4245
    %v4498 = vpack.c.b16 %v4253, %v4246
    %v4499 = vpack.c.b16 %v4261, %v4254
    %v4500 = vpack.c.b16 %v4262, %v4255
    %v4501 = vpack.c.b16 %v4263, %v4256
    %v4502 = vpack.c.b16 %v4264, %v4257
    %v4503 = vpack.c.b16 %v4265, %v4258
    %v4504 = vpack.c.b16 %v4266, %v4259
    %v4505 = vpack.c.b16 %v4267, %v4260
    %v4506 = vpack.c.b16 %v4275, %v4268
    %v4507 = vpack.c.b16 %v4276, %v4269
    %v4508 = vpack.c.b16 %v4277, %v4270
    %v4509 = vpack.c.b16 %v4278, %v4271
    %v4510 = vpack.c.b16 %v4279, %v4272
    %v4511 = vpack.c.b16 %v4280, %v4273
    %v4512 = vpack.c.b16 %v4281, %v4274
    %v4513 = vpack.c.b16 %v4289, %v4282
    %v4514 = vpack.c.b16 %v4290, %v4283
    %v4515 = vpack.c.b16 %v4291, %v4284
    %v4516 = vpack.c.b16 %v4292, %v4285
    %v4517 = vpack.c.b16 %v4293, %v4286
    %v4518 = vpack.c.b16 %v4294, %v4287
    %v4519 = vpack.c.b16 %v4295, %v4288
    %4744 = vmatprep.subr.bf16.mxu0 %v4297
    %4745 = vmatpush1.bf16.msra.mxu0 %v4296
    %4746 = vmatprep.subr.bf16.mxu0 %v4304
    %4747 = vmatpush1.bf16.msra.mxu0 %v4303
    %4748 = vmatprep.subr.bf16.mxu0 %v4311
    %4749 = vmatpush1.bf16.msra.mxu0 %v4310
    %4750 = vmatprep.subr.bf16.mxu0 %v4318
    %4751 = vmatpush1.bf16.msra.mxu0 %v4317
    %4752 = vmatprep.subr.bf16.mxu0 %v4325
    %4753 = vmatpush1.bf16.msra.mxu0 %v4324
    %4754 = vmatprep.subr.bf16.mxu0 %v4332
    %4755 = vmatpush1.bf16.msra.mxu0 %v4331
    %4756 = vmatprep.subr.bf16.mxu0 %v4339
    %4757 = vmatpush1.bf16.msra.mxu0 %v4338
    %4758 = vmatprep.subr.bf16.mxu0 %v4346
    %4759 = vmatpush1.bf16.msra.mxu0 %v4345
    %4760 = vmatprep.subr.bf16.mxu0 %v4353
    %4761 = vmatpush1.bf16.msra.mxu0 %v4352
    %4762 = vmatprep.subr.bf16.mxu0 %v4360
    %4763 = vmatpush1.bf16.msra.mxu0 %v4359
    %4764 = vmatprep.subr.bf16.mxu0 %v4367
    %4765 = vmatpush1.bf16.msra.mxu0 %v4366
    %4766 = vmatprep.subr.bf16.mxu0 %v4374
    %4767 = vmatpush1.bf16.msra.mxu0 %v4373
    %4768 = vmatprep.subr.bf16.mxu0 %v4381
    %4769 = vmatpush1.bf16.msra.mxu0 %v4380
    %4770 = vmatprep.subr.bf16.mxu0 %v4388
    %4771 = vmatpush1.bf16.msra.mxu0 %v4387
    %4772 = vmatprep.subr.bf16.mxu0 %v4395
    %4773 = vmatpush1.bf16.msra.mxu0 %v4394
    %4774 = vmatprep.subr.bf16.mxu0 %v4402
    %4775 = vmatpush1.bf16.msra.mxu0 %v4401
    %4776 = vmatprep.mubr.bf16.mxu0 %v3296
    %4777 = vmatmul.mubr.bf16.gmra.mrb[0].mxu0 %v3295
    %v4778 = vpop.f32.mrb[0].mxu0
    %v4779 = vadd.f32 %v3560, %v4778
    %v4780 = vpop.f32.mrb[0].mxu0
    %v4781 = vadd.f32 %v3564, %v4780
    %v4782 = vpop.f32.mrb[0].mxu0
    %v4783 = vpop.f32.mrb[0].mxu0
    %4784 = vdwg.mxu0
    %4785 = vmatprep.subr.bf16.mxu0 %v4409
    %4786 = vmatpush1.bf16.msra.mxu0 %v4408
    %4787 = vmatprep.subr.bf16.mxu0 %v4416
    %4788 = vmatpush1.bf16.msra.mxu0 %v4415
    %4789 = vmatprep.subr.bf16.mxu0 %v4423
    %4790 = vmatpush1.bf16.msra.mxu0 %v4422
    %4791 = vmatprep.subr.bf16.mxu0 %v4430
    %4792 = vmatpush1.bf16.msra.mxu0 %v4429
    %4793 = vmatprep.subr.bf16.mxu0 %v4437
    %4794 = vmatpush1.bf16.msra.mxu0 %v4436
    %4795 = vmatprep.subr.bf16.mxu0 %v4444
    %4796 = vmatpush1.bf16.msra.mxu0 %v4443
    %4797 = vmatprep.subr.bf16.mxu0 %v4451
    %4798 = vmatpush1.bf16.msra.mxu0 %v4450
    %4799 = vmatprep.subr.bf16.mxu0 %v4458
    %4800 = vmatpush1.bf16.msra.mxu0 %v4457
    %4801 = vmatprep.subr.bf16.mxu0 %v4465
    %4802 = vmatpush1.bf16.msra.mxu0 %v4464
    %4803 = vmatprep.subr.bf16.mxu0 %v4472
    %4804 = vmatpush1.bf16.msra.mxu0 %v4471
    %4805 = vmatprep.subr.bf16.mxu0 %v4479
    %4806 = vmatpush1.bf16.msra.mxu0 %v4478
    %4807 = vmatprep.subr.bf16.mxu0 %v4486
    %4808 = vmatpush1.bf16.msra.mxu0 %v4485
    %4809 = vmatprep.subr.bf16.mxu0 %v4493
    %4810 = vmatpush1.bf16.msra.mxu0 %v4492
    %4811 = vmatprep.subr.bf16.mxu0 %v4500
    %4812 = vmatpush1.bf16.msra.mxu0 %v4499
    %4813 = vmatprep.subr.bf16.mxu0 %v4507
    %4814 = vmatpush1.bf16.msra.mxu0 %v4506
    %4815 = vmatprep.subr.bf16.mxu0 %v4514
    %4816 = vmatpush1.bf16.msra.mxu0 %v4513
    %4817 = vmatprep.mubr.bf16.mxu0 %v3298
    %4818 = vmatmul.mubr.bf16.gmra.mrb[0].mxu0 %v3297
    %v4819 = vpop.f32.mrb[0].mxu0
    %v4820 = vadd.f32 %v4779, %v4819
    %v4821 = vpop.f32.mrb[0].mxu0
    %v4822 = vadd.f32 %v4781, %v4821
    %v4823 = vpop.f32.mrb[0].mxu0
    %v4824 = vpop.f32.mrb[0].mxu0
    %4825 = vdwg.mxu0
    %4826 = vmatprep.subr.bf16.mxu0 %v4299
    %4827 = vmatpush1.bf16.msra.mxu0 %v4298
    %4828 = vmatprep.subr.bf16.mxu0 %v4306
    %4829 = vmatpush1.bf16.msra.mxu0 %v4305
    %4830 = vmatprep.subr.bf16.mxu0 %v4313
    %4831 = vmatpush1.bf16.msra.mxu0 %v4312
    %4832 = vmatprep.subr.bf16.mxu0 %v4320
    %4833 = vmatpush1.bf16.msra.mxu0 %v4319
    %4834 = vmatprep.subr.bf16.mxu0 %v4327
    %4835 = vmatpush1.bf16.msra.mxu0 %v4326
    %4836 = vmatprep.subr.bf16.mxu0 %v4334
    %4837 = vmatpush1.bf16.msra.mxu0 %v4333
    %4838 = vmatprep.subr.bf16.mxu0 %v4341
    %4839 = vmatpush1.bf16.msra.mxu0 %v4340
    %4840 = vmatprep.subr.bf16.mxu0 %v4348
    %4841 = vmatpush1.bf16.msra.mxu0 %v4347
    %4842 = vmatprep.subr.bf16.mxu0 %v4355
    %4843 = vmatpush1.bf16.msra.mxu0 %v4354
    %4844 = vmatprep.subr.bf16.mxu0 %v4362
    %4845 = vmatpush1.bf16.msra.mxu0 %v4361
    %4846 = vmatprep.subr.bf16.mxu0 %v4369
    %4847 = vmatpush1.bf16.msra.mxu0 %v4368
    %4848 = vmatprep.subr.bf16.mxu0 %v4376
    %4849 = vmatpush1.bf16.msra.mxu0 %v4375
    %4850 = vmatprep.subr.bf16.mxu0 %v4383
    %4851 = vmatpush1.bf16.msra.mxu0 %v4382
    %4852 = vmatprep.subr.bf16.mxu0 %v4390
    %4853 = vmatpush1.bf16.msra.mxu0 %v4389
    %4854 = vmatprep.subr.bf16.mxu0 %v4397
    %4855 = vmatpush1.bf16.msra.mxu0 %v4396
    %4856 = vmatprep.subr.bf16.mxu0 %v4404
    %4857 = vmatpush1.bf16.msra.mxu0 %v4403
    %4858 = vmatprep.mubr.bf16.mxu0 %v3296
    %4859 = vmatmul.mubr.bf16.gmra.mrb[0].mxu0 %v3295
    %v4860 = vpop.f32.mrb[0].mxu0
    %v4861 = vadd.f32 %v3568, %v4860
    %v4862 = vpop.f32.mrb[0].mxu0
    %v4863 = vadd.f32 %v3572, %v4862
    %v4864 = vpop.f32.mrb[0].mxu0
    %v4865 = vpop.f32.mrb[0].mxu0
    %4866 = vdwg.mxu0
    %4867 = vmatprep.subr.bf16.mxu0 %v4411
    %4868 = vmatpush1.bf16.msra.mxu0 %v4410
    %4869 = vmatprep.subr.bf16.mxu0 %v4418
    %4870 = vmatpush1.bf16.msra.mxu0 %v4417
    %4871 = vmatprep.subr.bf16.mxu0 %v4425
    %4872 = vmatpush1.bf16.msra.mxu0 %v4424
    %4873 = vmatprep.subr.bf16.mxu0 %v4432
    %4874 = vmatpush1.bf16.msra.mxu0 %v4431
    %4875 = vmatprep.subr.bf16.mxu0 %v4439
    %4876 = vmatpush1.bf16.msra.mxu0 %v4438
    %4877 = vmatprep.subr.bf16.mxu0 %v4446
    %4878 = vmatpush1.bf16.msra.mxu0 %v4445
    %4879 = vmatprep.subr.bf16.mxu0 %v4453
    %4880 = vmatpush1.bf16.msra.mxu0 %v4452
    %4881 = vmatprep.subr.bf16.mxu0 %v4460
    %4882 = vmatpush1.bf16.msra.mxu0 %v4459
    %4883 = vmatprep.subr.bf16.mxu0 %v4467
    %4884 = vmatpush1.bf16.msra.mxu0 %v4466
    %4885 = vmatprep.subr.bf16.mxu0 %v4474
    %4886 = vmatpush1.bf16.msra.mxu0 %v4473
    %4887 = vmatprep.subr.bf16.mxu0 %v4481
    %4888 = vmatpush1.bf16.msra.mxu0 %v4480
    %4889 = vmatprep.subr.bf16.mxu0 %v4488
    %4890 = vmatpush1.bf16.msra.mxu0 %v4487
    %4891 = vmatprep.subr.bf16.mxu0 %v4495
    %4892 = vmatpush1.bf16.msra.mxu0 %v4494
    %4893 = vmatprep.subr.bf16.mxu0 %v4502
    %4894 = vmatpush1.bf16.msra.mxu0 %v4501
    %4895 = vmatprep.subr.bf16.mxu0 %v4509
    %4896 = vmatpush1.bf16.msra.mxu0 %v4508
    %4897 = vmatprep.subr.bf16.mxu0 %v4516
    %4898 = vmatpush1.bf16.msra.mxu0 %v4515
    %4899 = vmatprep.mubr.bf16.mxu0 %v3298
    %4900 = vmatmul.mubr.bf16.gmra.mrb[0].mxu0 %v3297
    %v4901 = vpop.f32.mrb[0].mxu0
    %v4902 = vadd.f32 %v4861, %v4901
    %v4903 = vpop.f32.mrb[0].mxu0
    %v4904 = vadd.f32 %v4863, %v4903
    %v4905 = vpop.f32.mrb[0].mxu0
    %v4906 = vpop.f32.mrb[0].mxu0
    %4907 = vdwg.mxu0
    %4908 = vmatprep.subr.bf16.mxu0 %v4301
    %4909 = vmatpush1.bf16.msra.mxu0 %v4300
    %4910 = vmatprep.subr.bf16.mxu0 %v4308
    %4911 = vmatpush1.bf16.msra.mxu0 %v4307
    %4912 = vmatprep.subr.bf16.mxu0 %v4315
    %4913 = vmatpush1.bf16.msra.mxu0 %v4314
    %4914 = vmatprep.subr.bf16.mxu0 %v4322
    %4915 = vmatpush1.bf16.msra.mxu0 %v4321
    %4916 = vmatprep.subr.bf16.mxu0 %v4329
    %4917 = vmatpush1.bf16.msra.mxu0 %v4328
    %4918 = vmatprep.subr.bf16.mxu0 %v4336
    %4919 = vmatpush1.bf16.msra.mxu0 %v4335
    %4920 = vmatprep.subr.bf16.mxu0 %v4343
    %4921 = vmatpush1.bf16.msra.mxu0 %v4342
    %4922 = vmatprep.subr.bf16.mxu0 %v4350
    %4923 = vmatpush1.bf16.msra.mxu0 %v4349
    %4924 = vmatprep.subr.bf16.mxu0 %v4357
    %4925 = vmatpush1.bf16.msra.mxu0 %v4356
    %4926 = vmatprep.subr.bf16.mxu0 %v4364
    %4927 = vmatpush1.bf16.msra.mxu0 %v4363
    %4928 = vmatprep.subr.bf16.mxu0 %v4371
    %4929 = vmatpush1.bf16.msra.mxu0 %v4370
    %4930 = vmatprep.subr.bf16.mxu0 %v4378
    %4931 = vmatpush1.bf16.msra.mxu0 %v4377
    %4932 = vmatprep.subr.bf16.mxu0 %v4385
    %4933 = vmatpush1.bf16.msra.mxu0 %v4384
    %4934 = vmatprep.subr.bf16.mxu0 %v4392
    %4935 = vmatpush1.bf16.msra.mxu0 %v4391
    %4936 = vmatprep.subr.bf16.mxu0 %v4399
    %4937 = vmatpush1.bf16.msra.mxu0 %v4398
    %4938 = vmatprep.subr.bf16.mxu0 %v4406
    %4939 = vmatpush1.bf16.msra.mxu0 %v4405
    %4940 = vmatprep.mubr.bf16.mxu0 %v3296
    %4941 = vmatmul.mubr.bf16.gmra.mrb[0].mxu0 %v3295
    %v4942 = vpop.f32.mrb[0].mxu0
    %v4943 = vadd.f32 %v3576, %v4942
    %v4944 = vpop.f32.mrb[0].mxu0
    %v4945 = vadd.f32 %v3580, %v4944
    %v4946 = vpop.f32.mrb[0].mxu0
    %v4947 = vpop.f32.mrb[0].mxu0
    %4948 = vdwg.mxu0
    %4949 = vmatprep.subr.bf16.mxu0 %v4413
    %4950 = vmatpush1.bf16.msra.mxu0 %v4412
    %4951 = vmatprep.subr.bf16.mxu0 %v4420
    %4952 = vmatpush1.bf16.msra.mxu0 %v4419
    %4953 = vmatprep.subr.bf16.mxu0 %v4427
    %4954 = vmatpush1.bf16.msra.mxu0 %v4426
    %4955 = vmatprep.subr.bf16.mxu0 %v4434
    %4956 = vmatpush1.bf16.msra.mxu0 %v4433
    %4957 = vmatprep.subr.bf16.mxu0 %v4441
    %4958 = vmatpush1.bf16.msra.mxu0 %v4440
    %4959 = vmatprep.subr.bf16.mxu0 %v4448
    %4960 = vmatpush1.bf16.msra.mxu0 %v4447
    %4961 = vmatprep.subr.bf16.mxu0 %v4455
    %4962 = vmatpush1.bf16.msra.mxu0 %v4454
    %4963 = vmatprep.subr.bf16.mxu0 %v4462
    %4964 = vmatpush1.bf16.msra.mxu0 %v4461
    %4965 = vmatprep.subr.bf16.mxu0 %v4469
    %4966 = vmatpush1.bf16.msra.mxu0 %v4468
    %4967 = vmatprep.subr.bf16.mxu0 %v4476
    %4968 = vmatpush1.bf16.msra.mxu0 %v4475
    %4969 = vmatprep.subr.bf16.mxu0 %v4483
    %4970 = vmatpush1.bf16.msra.mxu0 %v4482
    %4971 = vmatprep.subr.bf16.mxu0 %v4490
    %4972 = vmatpush1.bf16.msra.mxu0 %v4489
    %4973 = vmatprep.subr.bf16.mxu0 %v4497
    %4974 = vmatpush1.bf16.msra.mxu0 %v4496
    %4975 = vmatprep.subr.bf16.mxu0 %v4504
    %4976 = vmatpush1.bf16.msra.mxu0 %v4503
    %4977 = vmatprep.subr.bf16.mxu0 %v4511
    %4978 = vmatpush1.bf16.msra.mxu0 %v4510
    %4979 = vmatprep.subr.bf16.mxu0 %v4518
    %4980 = vmatpush1.bf16.msra.mxu0 %v4517
    %4981 = vmatprep.mubr.bf16.mxu0 %v3298
    %4982 = vmatmul.mubr.bf16.gmra.mrb[0].mxu0 %v3297
    %v4983 = vpop.f32.mrb[0].mxu0
    %v4984 = vadd.f32 %v4943, %v4983
    %v4985 = vpop.f32.mrb[0].mxu0
    %v4986 = vadd.f32 %v4945, %v4985
    %v4987 = vpop.f32.mrb[0].mxu0
    %v4988 = vpop.f32.mrb[0].mxu0
    %4989 = vdwg.mxu0
    %4990 = vmatprep.subr.bf16.mxu0 0
    %4991 = vmatpush1.bf16.msra.mxu0 %v4302
    %4992 = vmatprep.subr.bf16.mxu0 0
    %4993 = vmatpush1.bf16.msra.mxu0 %v4309
    %4994 = vmatprep.subr.bf16.mxu0 0
    %4995 = vmatpush1.bf16.msra.mxu0 %v4316
    %4996 = vmatprep.subr.bf16.mxu0 0
    %4997 = vmatpush1.bf16.msra.mxu0 %v4323
    %4998 = vmatprep.subr.bf16.mxu0 0
    %4999 = vmatpush1.bf16.msra.mxu0 %v4330
    %5000 = vmatprep.subr.bf16.mxu0 0
    %5001 = vmatpush1.bf16.msra.mxu0 %v4337
    %5002 = vmatprep.subr.bf16.mxu0 0
    %5003 = vmatpush1.bf16.msra.mxu0 %v4344
    %5004 = vmatprep.subr.bf16.mxu0 0
    %5005 = vmatpush1.bf16.msra.mxu0 %v4351
    %5006 = vmatprep.subr.bf16.mxu0 0
    %5007 = vmatpush1.bf16.msra.mxu0 %v4358
    %5008 = vmatprep.subr.bf16.mxu0 0
    %5009 = vmatpush1.bf16.msra.mxu0 %v4365
    %5010 = vmatprep.subr.bf16.mxu0 0
    %5011 = vmatpush1.bf16.msra.mxu0 %v4372
    %5012 = vmatprep.subr.bf16.mxu0 0
    %5013 = vmatpush1.bf16.msra.mxu0 %v4379
    %5014 = vmatprep.subr.bf16.mxu0 0
    %5015 = vmatpush1.bf16.msra.mxu0 %v4386
    %5016 = vmatprep.subr.bf16.mxu0 0
    %5017 = vmatpush1.bf16.msra.mxu0 %v4393
    %5018 = vmatprep.subr.bf16.mxu0 0
    %5019 = vmatpush1.bf16.msra.mxu0 %v4400
    %5020 = vmatprep.subr.bf16.mxu0 0
    %5021 = vmatpush1.bf16.msra.mxu0 %v4407
    %5022 = vmatprep.mubr.bf16.mxu0 %v3296
    %5023 = vmatmul.mubr.bf16.gmra.mrb[0].mxu0 %v3295
    %v5024 = vpop.f32.mrb[0].mxu0
    %v5025 = vadd.f32 %v3584, %v5024
    %v5026 = vpop.f32.mrb[0].mxu0
    %v5027 = vpop.f32.mrb[0].mxu0
    %v5028 = vpop.f32.mrb[0].mxu0
    %5029 = vdwg.mxu0
    %5030 = vmatprep.subr.bf16.mxu0 0
    %5031 = vmatpush1.bf16.msra.mxu0 %v4414
    %5032 = vmatprep.subr.bf16.mxu0 0
    %5033 = vmatpush1.bf16.msra.mxu0 %v4421
    %5034 = vmatprep.subr.bf16.mxu0 0
    %5035 = vmatpush1.bf16.msra.mxu0 %v4428
    %5036 = vmatprep.subr.bf16.mxu0 0
    %5037 = vmatpush1.bf16.msra.mxu0 %v4435
    %5038 = vmatprep.subr.bf16.mxu0 0
    %5039 = vmatpush1.bf16.msra.mxu0 %v4442
    %5040 = vmatprep.subr.bf16.mxu0 0
    %5041 = vmatpush1.bf16.msra.mxu0 %v4449
    %5042 = vmatprep.subr.bf16.mxu0 0
    %5043 = vmatpush1.bf16.msra.mxu0 %v4456
    %5044 = vmatprep.subr.bf16.mxu0 0
    %5045 = vmatpush1.bf16.msra.mxu0 %v4463
    %5046 = vmatprep.subr.bf16.mxu0 0
    %5047 = vmatpush1.bf16.msra.mxu0 %v4470
    %5048 = vmatprep.subr.bf16.mxu0 0
    %5049 = vmatpush1.bf16.msra.mxu0 %v4477
    %5050 = vmatprep.subr.bf16.mxu0 0
    %5051 = vmatpush1.bf16.msra.mxu0 %v4484
    %5052 = vmatprep.subr.bf16.mxu0 0
    %5053 = vmatpush1.bf16.msra.mxu0 %v4491
    %5054 = vmatprep.subr.bf16.mxu0 0
    %5055 = vmatpush1.bf16.msra.mxu0 %v4498
    %5056 = vmatprep.subr.bf16.mxu0 0
    %5057 = vmatpush1.bf16.msra.mxu0 %v4505
    %5058 = vmatprep.subr.bf16.mxu0 0
    %5059 = vmatpush1.bf16.msra.mxu0 %v4512
    %5060 = vmatprep.subr.bf16.mxu0 0
    %5061 = vmatpush1.bf16.msra.mxu0 %v4519
    %5062 = vmatprep.mubr.bf16.mxu0 %v3298
    %5063 = vmatmul.mubr.bf16.gmra.mrb[0].mxu0 %v3297
    %v5064 = vpop.f32.mrb[0].mxu0
    %v5065 = vadd.f32 %v5025, %v5064
    %v5066 = vpop.f32.mrb[0].mxu0
    %v5067 = vpop.f32.mrb[0].mxu0
    %v5068 = vpop.f32.mrb[0].mxu0
    %5069 = vdwg.mxu0
    %v5070 = vxor.u32 %v4820, 2147483648
    %v5071 = vxor.u32 %v4822, 2147483648
    %v5072 = vxor.u32 %v4902, 2147483648
    %v5073 = vxor.u32 %v4904, 2147483648
    %v5074 = vxor.u32 %v4984, 2147483648
    %v5075 = vxor.u32 %v4986, 2147483648
    %v5076 = vxor.u32 %v5065, 2147483648
    %v5077 = vmul.f32 %v5070, 1.442695
    %v5078 = vpow.pop %v5077
    %v5079 = vmul.f32 %v5071, 1.442695
    %v5080 = vpow.pop %v5079
    %v5081 = vmul.f32 %v5072, 1.442695
    %v5082 = vpow.pop %v5081
    %v5083 = vmul.f32 %v5073, 1.442695
    %v5084 = vpow.pop %v5083
    %v5085 = vmul.f32 %v5074, 1.442695
    %v5086 = vpow.pop %v5085
    %v5087 = vmul.f32 %v5075, 1.442695
    %v5088 = vpow.pop %v5087
    %v5089 = vmul.f32 %v5076, 1.442695
    %v5090 = vpow.pop %v5089
    %v5091 = vadd.f32 %v5078, 1.0
    %v5092 = vadd.f32 %v5080, 1.0
    %v5093 = vadd.f32 %v5082, 1.0
    %v5094 = vadd.f32 %v5084, 1.0
    %v5095 = vadd.f32 %v5086, 1.0
    %v5096 = vadd.f32 %v5088, 1.0
    %v5097 = vadd.f32 %v5090, 1.0
    %v5098 = vrcp.pop %v5091
    %v5099 = vmul.f32 1.0, %v5098
    %v5100 = vrcp.pop %v5092
    %v5101 = vmul.f32 1.0, %v5100
    %v5102 = vrcp.pop %v5093
    %v5103 = vmul.f32 1.0, %v5102
    %v5104 = vrcp.pop %v5094
    %v5105 = vmul.f32 1.0, %v5104
    %v5106 = vrcp.pop %v5095
    %v5107 = vmul.f32 1.0, %v5106
    %v5108 = vrcp.pop %v5096
    %v5109 = vmul.f32 1.0, %v5108
    %v5110 = vrcp.pop %v5097
    %v5111 = vmul.f32 1.0, %v5110
    %5112 = vst [vmem:[#allocation2] sm:$0xff] %v5099
    %5113 = vst [vmem:[#allocation2 + $0x8] sm:$0xff] %v5101
    %5114 = vst [vmem:[#allocation2 + $0x10] sm:$0xff] %v5103
    %5115 = vst [vmem:[#allocation2 + $0x18] sm:$0xff] %v5105
    %5116 = vst [vmem:[#allocation2 + $0x20] sm:$0xff] %v5107
    %5117 = vst [vmem:[#allocation2 + $0x28] sm:$0xff] %v5109
    %5118 = vst.msk [vmem:[#allocation2 + $0x30] sm:$0xff] %vm1294, %v5111
    %vm5119 = vcmask 818176
    %5120 = vst.msk [vmem:[#allocation4] sm:$0xff] %vm5119, %v2443
    %5121 = vst.msk [vmem:[#allocation6] sm:$0xff] %vm5119, %v2445
    // Predicated region
    $region78: #{tpu_custom_call.1} parent=1 // pred_check
      _
    $region79: #{tpu_custom_call.1} parent=1 // pred_check_branch
      %5123 = sbr.rel (0) target = $region81
    $region80: #{tpu_custom_call.1} parent=1 // pred_region
      %s5125 = ssub.s32 896, 896
      %5126 = vsyncadd [#allocation3], %s5125
      %s5128 = sshll.u32 [#allocation2], 4
      %s5129 = int_to_ptr.vmem [resolvable:$true] %s5128
      %5131 = dma.vmem_to_hbm [thread:$0]  %s5129, 896, %s19, [#allocation3]
    $region81: #{tpu_custom_call.1} parent=1 // pred_fallthru
      _
    // Predicated region
    $region82: #{tpu_custom_call.1} parent=1 // pred_check
      _
    $region83: #{tpu_custom_call.1} parent=1 // pred_check_branch
      %5133 = sbr.rel (0) target = $region85
    $region84: #{tpu_custom_call.1} parent=1 // pred_region
      %s5135 = ssub.s32 128, 128
      %5136 = vsyncadd [#allocation5], %s5135
      %s5138 = sshll.u32 [#allocation4], 4
      %s5139 = int_to_ptr.vmem [resolvable:$true] %s5138
      %5141 = dma.vmem_to_hbm [thread:$0]  %s5139, 128, %s20, [#allocation5]
    $region85: #{tpu_custom_call.1} parent=1 // pred_fallthru
      _
    // Predicated region
    $region86: #{tpu_custom_call.1} parent=1 // pred_check
      _
    $region87: #{tpu_custom_call.1} parent=1 // pred_check_branch
      %5143 = sbr.rel (0) target = $region89
    $region88: #{tpu_custom_call.1} parent=1 // pred_region
      %s5145 = ssub.s32 128, 128
      %5146 = vsyncadd [#allocation5], %s5145
      %s5148 = sshll.u32 [#allocation6], 4
      %s5149 = int_to_ptr.vmem [resolvable:$true] %s5148
      %5151 = dma.vmem_to_hbm [thread:$0]  %s5149, 128, %s21, [#allocation5]
    $region89: #{tpu_custom_call.1} parent=1 // pred_fallthru
      _
    // Predicated region
    $region90: #{tpu_custom_call.1} parent=1 // pred_check
      _
    $region91: #{tpu_custom_call.1} parent=1 // pred_check_branch
      %5153 = sbr.rel (0) target = $region93
    $region92: #{tpu_custom_call.1} parent=1 // pred_region
      %5154 = dma.done [#allocation3], 896
    $region93: #{tpu_custom_call.1} parent=1 // pred_fallthru
      _
    // Predicated region
    $region94: #{tpu_custom_call.1} parent=1 // pred_check
      _
    $region95: #{tpu_custom_call.1} parent=1 // pred_check_branch
      %5156 = sbr.rel (0) target = $region97
    $region96: #{tpu_custom_call.1} parent=1 // pred_region
      %5157 = dma.done [#allocation5], 128
    $region97: #{tpu_custom_call.1} parent=1 // pred_fallthru
      _
    // Predicated region
    $region98: #{tpu_custom_call.1} parent=1 // pred_check
      _
    $region99: #{tpu_custom_call.1} parent=1 // pred_check_branch
      %5159 = sbr.rel (0) target = $region101
    $region100: #{tpu_custom_call.1} parent=1 // pred_region
      %5160 = dma.done [#allocation5], 128
    $region101: #{tpu_custom_call.1} parent=1 // pred_fallthru
      _
    %5161 = vsyncpa [#allocation3], 1
    %5162 = vsyncpa [#allocation5], 1

</llo_original>
